<compile_context>
chip_gen: v7x
topology: tpu7x:2x2x1
jax: 0.10.0
libtpu: 0.0.40
codegen_flags: <defaults>
</compile_context>

<pallas_src>
import functools
import math

import jax
import jax.numpy as jnp
from jax.experimental import pallas as pl
from jax.experimental.pallas import tpu as pltpu


def _embed_kernel(x_ref, w_ref, b_ref, pe_ref, o_ref, *, precision):
    # x_ref : (1, ts, c_in)  compute dtype (f32 or bf16)
    # w_ref : (c_in, tn)     pre-transposed weight column slab (same dtype as x)
    # b_ref : (1, tn)        f32 bias slab
    # pe_ref: (ts, tn)       f32 positional-embedding slab (rows = seq positions)
    # o_ref : (1, ts, tn)    output dtype
    acc = jnp.dot(x_ref[0], w_ref[...],
                  preferred_element_type=jnp.float32, precision=precision)
    # Bias + positional-embedding add fused into the epilogue: rides in the VPU
    # slot while the kernel is weight-DMA-bound (saves separate HBM passes).
    o_ref[0] = (acc + b_ref[...] + pe_ref[...]).astype(o_ref.dtype)
    # TODO(synk): nn.Dropout(p=0.3) is identity in eval mode; a train-mode mask
    #             (pltpu.prng_seed / prng_random_bits) is not implemented here.


def data_embedding(x, w_t, bias, pe, *, tm=512, tn=None, out_dtype=None,
                   precision=None):
    """Fused DataEmbedding forward (eval mode).

    x    : [B, S, c_in]     activations, already in the compute dtype.
    w_t  : [c_in, d_model]  nn.Linear weight stored pre-transposed and already
                            in the compute dtype (conversion is a one-time,
                            parameter-load-time operation — never per call).
    bias : [d_model]        kept f32 for the epilogue add.
    pe   : [S, d_model]     f32 positional-embedding buffer rows 0..S-1.
    """
    B, S, c_in = x.shape
    c_in_w, d_model = w_t.shape
    assert c_in_w == c_in
    assert x.dtype == w_t.dtype, "store the weight in the compute dtype at load"
    assert pe.shape == (S, d_model)

    if out_dtype is None:
        out_dtype = x.dtype

    # Row tile: full sequence if it fits one tile (no ragged block, no padding);
    # otherwise a multiple-of-8 tile with a cdiv grid (tm=1024 is marginally
    # better for training-sized B*S, keep 512 unless VMEM is loose).
    ts = S if S <= tm else tm

    # Column tile: split d_model into >=2 lane-dense (multiple of 128) slabs so
    # megacore shards on the N axis — each TensorCore DMAs only half the weight
    # — even when the row grid collapses to one step (the model's real shape).
    if tn is None:
        tn = d_model // 2 if (d_model % 256 == 0) else d_model
    assert tn == d_model or tn % 128 == 0

    bias2d = bias.astype(jnp.float32).reshape(1, d_model)   # tiny, effectively free
    pe_f32 = pe.astype(jnp.float32)

    # n outermost: (a) megacore splits the weight columns, (b) the weight slab
    # stays resident in VMEM across the whole inner (b, s) sweep for each n.
    grid = (pl.cdiv(d_model, tn), B, pl.cdiv(S, ts))

    out_itemsize = jnp.dtype(out_dtype).itemsize
    bytes_accessed = (x.size * x.dtype.itemsize
                      + w_t.size * w_t.dtype.itemsize
                      + bias2d.size * 4 + pe_f32.size * 4
                      + B * S * d_model * out_itemsize)
    cost = pl.CostEstimate(flops=2 * B * S * c_in * d_model,
                           transcendentals=0,
                           bytes_accessed=bytes_accessed)

    # Right-sized VMEM budget: double-buffered blocks + a few MiB headroom.
    # No 32 MiB floor — keeps headroom for surrounding XLA fusions on v7x.
    vmem_need = (2 * ts * c_in * x.dtype.itemsize          # x blocks
                 + 2 * c_in * tn * w_t.dtype.itemsize      # weight slab
                 + 2 * tn * 4                               # bias slab
                 + 2 * ts * tn * 4                          # pe slab
                 + 2 * ts * tn * out_itemsize)              # out blocks
    vmem_limit = int(vmem_need + (4 << 20))

    kernel = functools.partial(_embed_kernel, precision=precision)

    return pl.pallas_call(
        kernel,
        out_shape=jax.ShapeDtypeStruct((B, S, d_model), out_dtype),
        grid_spec=pltpu.PrefetchScalarGridSpec(
            num_scalar_prefetch=0,
            grid=grid,
            in_specs=[
                pl.BlockSpec((1, ts, c_in), lambda n, b, s: (b, s, 0)),
                pl.BlockSpec((c_in, tn),    lambda n, b, s: (0, n)),
                pl.BlockSpec((1, tn),       lambda n, b, s: (0, n)),
                pl.BlockSpec((ts, tn),      lambda n, b, s: (s, n)),
            ],
            out_specs=pl.BlockSpec((1, ts, tn), lambda n, b, s: (b, s, n)),
        ),
        compiler_params=pltpu.CompilerParams(
            dimension_semantics=("parallel", "parallel", "parallel"),
            vmem_limit_bytes=vmem_limit,
        ),
        cost_estimate=cost,
    )(x, w_t, bias2d, pe_f32)


def positional_embedding_table(seq_len, d_model):
    # Same formula as the PyTorch PositionalEmbedding buffer (built once).
    position = jnp.arange(seq_len, dtype=jnp.float32)[:, None]
    div_term = jnp.exp(jnp.arange(0, d_model, 2, dtype=jnp.float32)
                       * -(math.log(10000.0) / d_model))
    pe = jnp.zeros((seq_len, d_model), jnp.float32)
    pe = pe.at[:, 0::2].set(jnp.sin(position * div_term))
    pe = pe.at[:, 1::2].set(jnp.cos(position * div_term))
    return pe


def init_params(key, c_in, d_model, dtype=jnp.float32):
    # nn.Linear default init U(-1/sqrt(c_in), 1/sqrt(c_in)); the weight is
    # returned already transposed to [c_in, d_model] and already in the compute
    # dtype — both are one-time, load-time conversions, not per-call ops.
    kw, kb = jax.random.split(key)
    bound = 1.0 / math.sqrt(c_in)
    w_t = jax.random.uniform(kw, (c_in, d_model), jnp.float32,
                             -bound, bound).astype(dtype)
    bias = jax.random.uniform(kb, (d_model,), jnp.float32, -bound, bound)
    return w_t, bias


if __name__ == "__main__":
    key = jax.random.PRNGKey(0)
    kx, kp = jax.random.split(key)

    # Shapes implied by MyGPT2Model: c_in = 2*Nt = 512, d_model = Nd = 768,
    # seq = indim = 20; batch kept small at 2.
    B, S, c_in, d_model = 2, 20, 512, 768
    x = jax.random.normal(kx, (B, S, c_in), jnp.float32)
    w_t_f32, bias = init_params(kp, c_in, d_model, dtype=jnp.float32)
    pe = positional_embedding_table(S, d_model)          # buffer, built once

    # Reference: eval-mode DataEmbedding (dropout = identity).
    ref = (jnp.dot(x, w_t_f32, precision=jax.lax.Precision.HIGHEST)
           + bias + pe[None])

    # f32 path (request HIGHEST precision inside the kernel for parity; the
    # tolerance below is still safe even at default MXU precision over K=512).
    out = jax.block_until_ready(
        data_embedding(x, w_t_f32, bias, pe,
                       precision=jax.lax.Precision.HIGHEST))
    assert out.shape == (B, S, d_model)
    assert jnp.allclose(out, ref, atol=2e-2, rtol=2e-2)

    # bf16 path: weight converted ONCE at "load time", activations arrive bf16,
    # output emitted bf16 for a bf16 GPT-2 backbone (half the weight stream and
    # half the output writeback; f32 MXU accumulation + f32 epilogue).
    w_t_bf16 = w_t_f32.astype(jnp.bfloat16)               # one-time conversion
    x_bf16 = x.astype(jnp.bfloat16)
    out_bf16 = jax.block_until_ready(
        data_embedding(x_bf16, w_t_bf16, bias, pe))
    assert out_bf16.dtype == jnp.bfloat16
    assert jnp.allclose(out_bf16.astype(jnp.float32), ref, atol=1e-1, rtol=1e-1)

    print("KERNEL_OK")
</pallas_src>

<mosaic_0001>
module attributes {stable_mosaic.version = 11 : i64} {
  func.func @_embed_kernel(%arg0: i32, %arg1: i32, %arg2: i32, %arg3: memref<1x20x512xf32, #tpu.memory_space<vmem>>, %arg4: memref<512x384xf32, #tpu.memory_space<vmem>>, %arg5: memref<1x384xf32, #tpu.memory_space<vmem>>, %arg6: memref<20x384xf32, #tpu.memory_space<vmem>>, %arg7: memref<1x20x384xf32, #tpu.memory_space<vmem>>) attributes {dimension_semantics = [#tpu.dimension_semantics<parallel>, #tpu.dimension_semantics<parallel>, #tpu.dimension_semantics<parallel>], iteration_bounds = array<i64: 2, 2, 1>, scalar_prefetch = 0 : i64, scratch_operands = 0 : i64, tpu.core_type = #tpu.core_type<tc>, window_params = [{transform_indices = @transform_0, window_bounds = array<i64: 1, 20, 512>}, {transform_indices = @transform_1, window_bounds = array<i64: 512, 384>}, {transform_indices = @transform_2, window_bounds = array<i64: 1, 384>}, {transform_indices = @transform_3, window_bounds = array<i64: 20, 384>}, {transform_indices = @transform_4, window_bounds = array<i64: 1, 20, 384>}]} {
    %c0 = arith.constant 0 : index
    %c0_0 = arith.constant 0 : index
    %c0_1 = arith.constant 0 : index
    %0 = vector.load %arg3[%c0, %c0_0, %c0_1] : memref<1x20x512xf32, #tpu.memory_space<vmem>>, vector<1x20x512xf32>
    %1 = vector.shape_cast %0 : vector<1x20x512xf32> to vector<20x512xf32>
    %c0_2 = arith.constant 0 : index
    %c0_3 = arith.constant 0 : index
    %2 = vector.load %arg4[%c0_2, %c0_3] : memref<512x384xf32, #tpu.memory_space<vmem>>, vector<512x384xf32>
    %cst = arith.constant dense<0.000000e+00> : vector<20x384xf32>
    %3 = tpu.matmul %1, %2, %cst {dimension_numbers = #tpu.dot_dimension_numbers<[1], [0], [0], [1], [0, 0, 1, 1], [], []>, precision = #tpu.contract_precision<fp32>} : vector<20x512xf32>, vector<512x384xf32>, vector<20x384xf32> -> vector<20x384xf32>
    %c0_4 = arith.constant 0 : index
    %c0_5 = arith.constant 0 : index
    %4 = vector.load %arg5[%c0_4, %c0_5] : memref<1x384xf32, #tpu.memory_space<vmem>>, vector<1x384xf32>
    %5 = vector.broadcast %4 : vector<1x384xf32> to vector<20x384xf32>
    %6 = arith.addf %3, %5 : vector<20x384xf32>
    %c0_6 = arith.constant 0 : index
    %c0_7 = arith.constant 0 : index
    %7 = vector.load %arg6[%c0_6, %c0_7] : memref<20x384xf32, #tpu.memory_space<vmem>>, vector<20x384xf32>
    %8 = arith.addf %6, %7 : vector<20x384xf32>
    %c0_8 = arith.constant 0 : index
    %c0_9 = arith.constant 0 : index
    %c0_10 = arith.constant 0 : index
    %9 = vector.load %arg7[%c0_8, %c0_9, %c0_10] : memref<1x20x384xf32, #tpu.memory_space<vmem>>, vector<1x20x384xf32>
    %10 = vector.shape_cast %9 : vector<1x20x384xf32> to vector<20x384xf32>
    %11 = vector.shape_cast %8 : vector<20x384xf32> to vector<1x20x384xf32>
    tpu.vector_store %arg7[%c0_8, %c0_9, %c0_10], %11 {strides = array<i32>} : memref<1x20x384xf32, #tpu.memory_space<vmem>>, vector<1x20x384xf32>,
    return
  }
  func.func @transform_0(%arg0: i32, %arg1: i32, %arg2: i32) -> (i32, i32, i32) {
    %c0_i32 = arith.constant 0 : i32
    %c0_i32_0 = arith.constant 0 : i32
    return %arg1, %arg2, %c0_i32 : i32, i32, i32
  }
  func.func @transform_1(%arg0: i32, %arg1: i32, %arg2: i32) -> (i32, i32) {
    %c0_i32 = arith.constant 0 : i32
    %c0_i32_0 = arith.constant 0 : i32
    return %c0_i32, %arg0 : i32, i32
  }
  func.func @transform_2(%arg0: i32, %arg1: i32, %arg2: i32) -> (i32, i32) {
    %c0_i32 = arith.constant 0 : i32
    %c0_i32_0 = arith.constant 0 : i32
    return %c0_i32, %arg0 : i32, i32
  }
  func.func @transform_3(%arg0: i32, %arg1: i32, %arg2: i32) -> (i32, i32) {
    %c0_i32 = arith.constant 0 : i32
    return %arg2, %arg0 : i32, i32
  }
  func.func @transform_4(%arg0: i32, %arg1: i32, %arg2: i32) -> (i32, i32, i32) {
    %c0_i32 = arith.constant 0 : i32
    return %arg1, %arg2, %arg0 : i32, i32, i32
  }
}

</mosaic_0001>

<llo_original>
// kernel: tpu_custom_call.1
$region0: #{tpu_custom_call.1}
  #allocation0 [shape = 'u32[]', space=smem, size = 0x4, offset = 0x4, fixed_abs, tag = 'smem constant byte address 0x4 - core index']
  #allocation1 [shape = 'u32[144,128]{1,0:T(1,128)}', space=vmem, size = 0x12000, scoped, tag = 'internal scratch']
  %s0 = inlined_call_operand.vmem [shape: f32[2,20,512], index: 0, kind: input, shape index: {}]
  %s1 = inlined_call_operand.hbm [shape: f32[512,768], index: 1, kind: input, shape index: {}]
  %s2 = inlined_call_operand.hbm [shape: f32[1,768], index: 2, kind: input, shape index: {}]
  %s3 = inlined_call_operand.hbm [shape: f32[20,768], index: 3, kind: input, shape index: {}]
  %s4 = inlined_call_operand.vmem [shape: f32[2,20,768], index: 4, kind: output, shape index: {}]
  %s5 = sld [smem:[#allocation0]]
  $region80: #{tpu_custom_call.1} parent=0
    _
  %s7 = ssub.s32 1, %s5
  %s8 = scalar_select 0, %s7, %s5
  $region1: #{tpu_custom_call.1} parent=0
    #allocation2 [shape = 'u8[1572864]{0}', space=vmem, size = 0x180000, scoped, tag = 'input window, operand 1']
    #allocation3 [shape = 's32[2]{0}', space=sflag, size = 0x8, scoped, tag = 'scoped memory for tpu_custom_call.1']
    #allocation4 [shape = 'u8[3072]{0}', space=vmem, size = 0xc00, scoped, tag = 'input window, operand 2']
    #allocation5 [shape = 's32[2]{0}', space=sflag, size = 0x8, scoped, tag = 'scoped memory for tpu_custom_call.1']
    #allocation6 [shape = 'u8[73728]{0}', space=vmem, size = 0x12000, scoped, tag = 'input window, operand 3']
    #allocation7 [shape = 'u8[73728]{0}', space=vmem, size = 0x12000, scoped, tag = 'output window, operand 0']
    %9 = vsyncpa [#allocation3], 0
    %s10 = scalar_lea.sflag [#allocation3], 1
    %11 = vsyncpa %s10, 0
    %12 = vsyncpa [#allocation5], 0
    %s13 = scalar_lea.sflag [#allocation5], 1
    %14 = vsyncpa %s13, 0
    loop: start=0, step=1, limit=6
    $region2: #{tpu_custom_call.1} parent=1 // loop_pre_header
      _
    $region3: #{tpu_custom_call.1} parent=1 // loop_header
      %s16 = sphi 0, %s20
      %p17 = scmp.ge.s32.totalorder %s16, 6
      %s23 = sphi 0, %s42
      %s24 = sphi 0, %s38
      %s25 = sphi 0, %s34
      %s26 = sphi 0, %s23
      %s27 = sphi 0, %s24
      %s28 = sphi 0, %s25
      %s29 = sphi 0, %s26
      %s30 = sphi 0, %s27
      %s31 = sphi 0, %s28
      %s47 = sphi 0, %s49
      %s50 = sphi 0, %s47
      %s51 = sphi 0, %s50
      %s67 = sphi 0, %s51
      %s73 = sphi 0, %s75
      %s76 = sphi 0, %s73
      %s77 = sphi 0, %s76
      %s93 = sphi 0, %s77
      %s99 = sphi 0, %s101
      %s102 = sphi 0, %s99
      %s103 = sphi 0, %s102
      %s119 = sphi 0, %s103
      %s127 = sphi 0, %s129
      %s130 = sphi 0, %s127
      %s131 = sphi 0, %s130
      %s147 = sphi 0, %s131
      %s157 = sphi 0, %s159
      %s160 = sphi 0, %s157
      %s161 = sphi 0, %s160
      %s177 = sphi 0, %s161
    $region4: #{tpu_custom_call.1} parent=1 // loop_header_branch
      %19 = sbr.rel (%p17) target = $region8
    $region5: #{tpu_custom_call.1} parent=1 // loop_body
      %s21 = ssub.s32 %s16, 1
      %s22 = ssub.s32 %s16, 2
      %s32 = sadd.s32 1, %s25
      %p33 = scmp.ge.s32.totalorder %s32, 1
      %s34 = scalar_select %p33, 0, %s32
      %s35 = sadd.s32 1, %s24
      %s36 = scalar_select %p33, %s35, %s24
      %p37 = scmp.ge.s32.totalorder %s36, 2
      %s38 = scalar_select %p37, 0, %s36
      %s39 = sadd.s32 1, %s23
      %s40 = scalar_select %p37, %s39, %s23
      %p41 = scmp.ge.s32.totalorder %s40, 2
      %s42 = scalar_select %p41, 0, %s40
      %s43 = ssub.s32 %s24, %s38
      %s44 = ssub.s32 %s25, %s34
      %s45 = sor.u32 %s43, %s44
      %p46 = scmp.eq.s32.totalorder %s45, 0
      %s48 = sadd.s32 %s47, 1
      %s49 = scalar_select %p46, %s47, %s48
      %p52 = pneg %p46
      %p53 = scmp.eq.s32.totalorder %s16, 3
      %p54 = por %p52, %p53
      %p55 = scmp.ne.s32.totalorder %s47, %s50
      %p56 = scmp.eq.s32.totalorder %s16, 0
      %p57 = por %p55, %p56
      %p58 = scmp.ne.s32.totalorder %s47, %s50
      %p59 = scmp.eq.s32.totalorder %s21, 3
      %p60 = por %p58, %p59
      %p61 = scmp.ne.s32.totalorder %s50, %s51
      %p62 = scmp.eq.s32.totalorder %s21, 0
      %p63 = por %p61, %p62
      %p64 = scmp.ne.s32.totalorder %s50, %s51
      %p65 = scmp.eq.s32.totalorder %s22, 3
      %p66 = por %p64, %p65
      %p68 = scmp.ne.s32.totalorder %s51, %s67
      %p69 = scmp.eq.s32.totalorder %s22, 0
      %p70 = por %p68, %p69
      %s71 = ssub.s32 %s23, %s42
      %p72 = scmp.eq.s32.totalorder %s71, 0
      %s74 = sadd.s32 %s73, 1
      %s75 = scalar_select %p72, %s73, %s74
      %p78 = pneg %p72
      %p79 = scmp.eq.s32.totalorder %s16, 3
      %p80 = por %p78, %p79
      %p81 = scmp.ne.s32.totalorder %s73, %s76
      %p82 = scmp.eq.s32.totalorder %s16, 0
      %p83 = por %p81, %p82
      %p84 = scmp.ne.s32.totalorder %s73, %s76
      %p85 = scmp.eq.s32.totalorder %s21, 3
      %p86 = por %p84, %p85
      %p87 = scmp.ne.s32.totalorder %s76, %s77
      %p88 = scmp.eq.s32.totalorder %s21, 0
      %p89 = por %p87, %p88
      %p90 = scmp.ne.s32.totalorder %s76, %s77
      %p91 = scmp.eq.s32.totalorder %s22, 3
      %p92 = por %p90, %p91
      %p94 = scmp.ne.s32.totalorder %s77, %s93
      %p95 = scmp.eq.s32.totalorder %s22, 0
      %p96 = por %p94, %p95
      %s97 = ssub.s32 %s23, %s42
      %p98 = scmp.eq.s32.totalorder %s97, 0
      %s100 = sadd.s32 %s99, 1
      %s101 = scalar_select %p98, %s99, %s100
      %p104 = pneg %p98
      %p105 = scmp.eq.s32.totalorder %s16, 3
      %p106 = por %p104, %p105
      %p107 = scmp.ne.s32.totalorder %s99, %s102
      %p108 = scmp.eq.s32.totalorder %s16, 0
      %p109 = por %p107, %p108
      %p110 = scmp.ne.s32.totalorder %s99, %s102
      %p111 = scmp.eq.s32.totalorder %s21, 3
      %p112 = por %p110, %p111
      %p113 = scmp.ne.s32.totalorder %s102, %s103
      %p114 = scmp.eq.s32.totalorder %s21, 0
      %p115 = por %p113, %p114
      %p116 = scmp.ne.s32.totalorder %s102, %s103
      %p117 = scmp.eq.s32.totalorder %s22, 3
      %p118 = por %p116, %p117
      %p120 = scmp.ne.s32.totalorder %s103, %s119
      %p121 = scmp.eq.s32.totalorder %s22, 0
      %p122 = por %p120, %p121
      %s123 = ssub.s32 %s25, %s34
      %s124 = ssub.s32 %s23, %s42
      %s125 = sor.u32 %s123, %s124
      %p126 = scmp.eq.s32.totalorder %s125, 0
      %s128 = sadd.s32 %s127, 1
      %s129 = scalar_select %p126, %s127, %s128
      %p132 = pneg %p126
      %p133 = scmp.eq.s32.totalorder %s16, 3
      %p134 = por %p132, %p133
      %p135 = scmp.ne.s32.totalorder %s127, %s130
      %p136 = scmp.eq.s32.totalorder %s16, 0
      %p137 = por %p135, %p136
      %p138 = scmp.ne.s32.totalorder %s127, %s130
      %p139 = scmp.eq.s32.totalorder %s21, 3
      %p140 = por %p138, %p139
      %p141 = scmp.ne.s32.totalorder %s130, %s131
      %p142 = scmp.eq.s32.totalorder %s21, 0
      %p143 = por %p141, %p142
      %p144 = scmp.ne.s32.totalorder %s130, %s131
      %p145 = scmp.eq.s32.totalorder %s22, 3
      %p146 = por %p144, %p145
      %p148 = scmp.ne.s32.totalorder %s131, %s147
      %p149 = scmp.eq.s32.totalorder %s22, 0
      %p150 = por %p148, %p149
      %s151 = ssub.s32 %s24, %s38
      %s152 = ssub.s32 %s25, %s34
      %s153 = sor.u32 %s151, %s152
      %s154 = ssub.s32 %s23, %s42
      %s155 = sor.u32 %s153, %s154
      %p156 = scmp.eq.s32.totalorder %s155, 0
      %s158 = sadd.s32 %s157, 1
      %s159 = scalar_select %p156, %s157, %s158
      %p162 = pneg %p156
      %p163 = scmp.eq.s32.totalorder %s16, 3
      %p164 = por %p162, %p163
      %p165 = scmp.ne.s32.totalorder %s157, %s160
      %p166 = scmp.eq.s32.totalorder %s16, 0
      %p167 = por %p165, %p166
      %p168 = scmp.ne.s32.totalorder %s157, %s160
      %p169 = scmp.eq.s32.totalorder %s21, 3
      %p170 = por %p168, %p169
      %p171 = scmp.ne.s32.totalorder %s160, %s161
      %p172 = scmp.eq.s32.totalorder %s21, 0
      %p173 = por %p171, %p172
      %p174 = scmp.ne.s32.totalorder %s160, %s161
      %p175 = scmp.eq.s32.totalorder %s22, 3
      %p176 = por %p174, %p175
      %p178 = scmp.ne.s32.totalorder %s161, %s177
      %p179 = scmp.eq.s32.totalorder %s22, 0
      %p180 = por %p178, %p179
      %p181 = scmp.le.s32.totalorder 1, %s16
      %p182 = scmp.lt.s32.totalorder %s16, 5
      %p183 = pnand %p181, %p182
      %p184 = pneg %p183
      // Predicated region
      $region9: #{tpu_custom_call.1} parent=5 // pred_check
        _
      $region10: #{tpu_custom_call.1} parent=5 // pred_check_branch
        %186 = sbr.rel (%p183) target = $region12
      $region11: #{tpu_custom_call.1} parent=5 // pred_region
        %s187 = ssub.s32 %s16, 1
      $region12: #{tpu_custom_call.1} parent=5 // pred_fallthru
        _
      %p188 = scmp.lt.s32.totalorder %s16, 4
      // Predicated region
      $region13: #{tpu_custom_call.1} parent=5 // pred_check
        %p189 = pneg %p188
      $region14: #{tpu_custom_call.1} parent=5 // pred_check_branch
        %191 = sbr.rel (%p189) target = $region16
      $region15: #{tpu_custom_call.1} parent=5 // pred_region
        // Predicated region
        $region17: #{tpu_custom_call.1} parent=15 // pred_check
          %p192 = pneg %p57
        $region18: #{tpu_custom_call.1} parent=15 // pred_check_branch
          %194 = sbr.rel (%p192) target = $region20
        $region19: #{tpu_custom_call.1} parent=15 // pred_region
          %s195 = smul.u32 3, %s25
          %p196 = scmp.lt.s32.totalorder %s24, 1
          %s197 = scalar_select %p196, %s24, 1
          %p198 = scmp.lt.s32.totalorder %s195, 2
          %s199 = scalar_select %p198, %s195, 2
          %s200 = smul.addr %s199, 4
          %s201 = smul.addr %s197, 12
          %s202 = sadd.s32 %s200, %s201
          %s203 = smul.addr %s202, 8
          %s204 = scalar_lea.vmem %s0, %s203
          %s205 = smul.u32 3, %s25
        $region20: #{tpu_custom_call.1} parent=15 // pred_fallthru
          _
        // Predicated region
        $region21: #{tpu_custom_call.1} parent=15 // pred_check
          %p206 = pneg %p83
        $region22: #{tpu_custom_call.1} parent=15 // pred_check_branch
          %208 = sbr.rel (%p206) target = $region24
        $region23: #{tpu_custom_call.1} parent=15 // pred_region
          %s209 = sand.u32 %s73, 1
          %s210 = scalar_lea.sflag [#allocation3], %s209
          %s211 = sand.u32 %s73, 1
          %s212 = smul.addr %s211, 1536
          %s213 = scalar_lea.vmem [#allocation2], %s212
          %s214 = smul.u32 3, %s23
          %s216 = ssub.s32 24576, 24576
          %217 = vsyncadd %s210, %s216
          %s218 = smul.addr %s214, 128
          %s219 = scalar_lea.hbm %s1, %s218
          %s220 = sshll.u32 %s213, 4
          %s221 = int_to_ptr.vmem [resolvable:$true] %s220
          %226 = dma.hbm_to_vmem [thread:$0]  %s219, 24576, %s221, %s210, 768, 384, 24
        $region24: #{tpu_custom_call.1} parent=15 // pred_fallthru
          _
        // Predicated region
        $region25: #{tpu_custom_call.1} parent=15 // pred_check
          %p227 = pneg %p109
        $region26: #{tpu_custom_call.1} parent=15 // pred_check_branch
          %229 = sbr.rel (%p227) target = $region28
        $region27: #{tpu_custom_call.1} parent=15 // pred_region
          %s230 = sand.u32 %s16, 1
          %s231 = scalar_lea.sflag [#allocation5], %s230
          %s232 = sand.u32 %s99, 1
          %s233 = smul.addr %s232, 3
          %s234 = scalar_lea.vmem [#allocation4], %s233
          %s235 = smul.u32 3, %s23
          %s237 = ssub.s32 48, 48
          %238 = vsyncadd %s231, %s237
          %s239 = smul.addr %s235, 16
          %s240 = scalar_lea.hbm %s2, %s239
          %s242 = sshll.u32 %s234, 4
          %s243 = int_to_ptr.vmem [resolvable:$true] %s242
          %245 = dma.hbm_to_vmem [thread:$0]  %s240, 48, %s243, %s231
        $region28: #{tpu_custom_call.1} parent=15 // pred_fallthru
          _
        // Predicated region
        $region29: #{tpu_custom_call.1} parent=15 // pred_check
          %p246 = pneg %p137
        $region30: #{tpu_custom_call.1} parent=15 // pred_check_branch
          %248 = sbr.rel (%p246) target = $region32
        $region31: #{tpu_custom_call.1} parent=15 // pred_region
          %s249 = sand.u32 %s16, 1
          %s250 = scalar_lea.sflag [#allocation5], %s249
          %s251 = sand.u32 %s127, 1
          %s252 = smul.addr %s251, 72
          %s253 = scalar_lea.vmem [#allocation6], %s252
          %s254 = smul.u32 3, %s25
          %s255 = smul.u32 3, %s23
          %s257 = ssub.s32 1152, 1152
          %258 = vsyncadd %s250, %s257
          %s259 = smul.addr %s254, 6
          %s260 = sadd.s32 %s255, %s259
          %s261 = smul.addr %s260, 128
          %s262 = scalar_lea.hbm %s3, %s261
          %s263 = sshll.u32 %s253, 4
          %s264 = int_to_ptr.vmem [resolvable:$true] %s263
          %269 = dma.hbm_to_vmem [thread:$0]  %s262, 1152, %s264, %s250, 768, 384, 24
        $region32: #{tpu_custom_call.1} parent=15 // pred_fallthru
          _
      $region16: #{tpu_custom_call.1} parent=5 // pred_fallthru
        _
      %p270 = scmp.le.s32.totalorder 1, %s16
      %p271 = scmp.lt.s32.totalorder %s16, 5
      %p272 = pnand %p270, %p271
      %p273 = pneg %p272
      // Predicated region
      $region33: #{tpu_custom_call.1} parent=5 // pred_check
        _
      $region34: #{tpu_custom_call.1} parent=5 // pred_check_branch
        %275 = sbr.rel (%p272) target = $region36
      $region35: #{tpu_custom_call.1} parent=5 // pred_region
        %s276 = ssub.s32 %s16, 1
        %s277 = sand.u32 %s76, 1
        %s278 = scalar_lea.sflag [#allocation3], %s277
        %s279 = sand.u32 %s76, 1
        %s280 = smul.addr %s279, 1536
        %s281 = scalar_lea.vmem [#allocation2], %s280
        // Predicated region
        $region37: #{tpu_custom_call.1} parent=35 // pred_check
          %p282 = pneg %p89
        $region38: #{tpu_custom_call.1} parent=35 // pred_check_branch
          %284 = sbr.rel (%p282) target = $region40
        $region39: #{tpu_custom_call.1} parent=35 // pred_region
          %285 = dma.done %s278, 24576
        $region40: #{tpu_custom_call.1} parent=35 // pred_fallthru
          _
        %s286 = sand.u32 %s21, 1
        %s287 = scalar_lea.sflag [#allocation5], %s286
        %s288 = sand.u32 %s102, 1
        %s289 = smul.addr %s288, 3
        %s290 = scalar_lea.vmem [#allocation4], %s289
        // Predicated region
        $region41: #{tpu_custom_call.1} parent=35 // pred_check
          %p291 = pneg %p115
        $region42: #{tpu_custom_call.1} parent=35 // pred_check_branch
          %293 = sbr.rel (%p291) target = $region44
        $region43: #{tpu_custom_call.1} parent=35 // pred_region
          %294 = dma.done %s287, 48
        $region44: #{tpu_custom_call.1} parent=35 // pred_fallthru
          _
        %s295 = sand.u32 %s21, 1
        %s296 = scalar_lea.sflag [#allocation5], %s295
        %s297 = sand.u32 %s130, 1
        %s298 = smul.addr %s297, 72
        %s299 = scalar_lea.vmem [#allocation6], %s298
        // Predicated region
        $region45: #{tpu_custom_call.1} parent=35 // pred_check
          %p300 = pneg %p143
        $region46: #{tpu_custom_call.1} parent=35 // pred_check_branch
          %302 = sbr.rel (%p300) target = $region48
        $region47: #{tpu_custom_call.1} parent=35 // pred_region
          %303 = dma.done %s296, 1152
        $region48: #{tpu_custom_call.1} parent=35 // pred_fallthru
          _
        %s304 = smul.u32 3, %s28
        %p305 = scmp.lt.s32.totalorder %s27, 1
        %s306 = scalar_select %p305, %s27, 1
        %p307 = scmp.lt.s32.totalorder %s304, 2
        %s308 = scalar_select %p307, %s304, 2
        %s309 = smul.addr %s308, 4
        %s310 = smul.addr %s306, 12
        %s311 = sadd.s32 %s309, %s310
        %s312 = smul.addr %s311, 8
        %s313 = scalar_lea.vmem %s0, %s312
        %p314 = pneg %p63
        %p315 = pneg %p60
        %s316 = sand.u32 %s76, 1
        %s317 = scalar_lea.sflag [#allocation3], %s316
        %s318 = sand.u32 %s76, 1
        %s319 = smul.addr %s318, 1536
        %s320 = scalar_lea.vmem [#allocation2], %s319
        %p321 = pneg %p89
        %p322 = pneg %p86
        %s323 = sand.u32 %s21, 1
        %s324 = scalar_lea.sflag [#allocation5], %s323
        %s325 = sand.u32 %s102, 1
        %s326 = smul.addr %s325, 3
        %s327 = scalar_lea.vmem [#allocation4], %s326
        %p328 = pneg %p115
        %p329 = pneg %p112
        %s330 = sand.u32 %s21, 1
        %s331 = scalar_lea.sflag [#allocation5], %s330
        %s332 = sand.u32 %s130, 1
        %s333 = smul.addr %s332, 72
        %s334 = scalar_lea.vmem [#allocation6], %s333
        %p335 = pneg %p143
        %p336 = pneg %p140
        %p337 = pneg %p173
        %p338 = pneg %p170
        %s339 = sand.u32 %s160, 1
        %s340 = sand.u32 %s160, 1
        %s341 = smul.addr %s340, 72
        %s342 = scalar_lea.vmem [#allocation7], %s341
        %s343 = smul.u32 3, %s28
        %p344 = scmp.lt.s32.totalorder %s27, 1
        %s345 = scalar_select %p344, %s27, 1
        %p346 = scmp.lt.s32.totalorder %s343, 2
        %s347 = scalar_select %p346, %s343, 2
        %s348 = smul.addr %s347, 4
        %s349 = smul.addr %s345, 12
        %s350 = sadd.s32 %s348, %s349
        %s351 = smul.addr %s350, 8
        %s352 = scalar_lea.vmem %s0, %s351
        %s353 = smul.u32 3, %s28
        %s354 = smul.u32 3, %s26
        %s355 = smul.u32 3, %s26
        %s356 = smul.u32 3, %s28
        %s357 = smul.u32 3, %s26
        %s358 = smul.u32 3, %s28
        %s359 = smul.u32 3, %s26
        %v360 = vld [vmem:[%s352] sm:$0xff]
        %v361 = vld [vmem:[%s352 + $0x8] sm:$0xff]
        %v362 = vld [vmem:[%s352 + $0x10] sm:$0xff]
        %v363 = vld [vmem:[%s352 + $0x18] sm:$0xff]
        %v364 = vld [vmem:[%s352 + $0x20] sm:$0xff]
        %v365 = vld [vmem:[%s352 + $0x28] sm:$0xff]
        %v366 = vld [vmem:[%s352 + $0x30] sm:$0xff]
        %v367 = vld [vmem:[%s352 + $0x38] sm:$0xff]
        %v368 = vld [vmem:[%s352 + $0x40] sm:$0xf]
        %v369 = vld [vmem:[%s352 + $0x48] sm:$0xf]
        %v370 = vld [vmem:[%s352 + $0x50] sm:$0xf]
        %v371 = vld [vmem:[%s352 + $0x58] sm:$0xf]
        %v372 = vld [vmem:[%s281] sm:$0xff]
        %v373 = vld [vmem:[%s281 + $0x8] sm:$0xff]
        %v374 = vld [vmem:[%s281 + $0x10] sm:$0xff]
        %v375 = vld [vmem:[%s281 + $0x18] sm:$0xff]
        %v376 = vld [vmem:[%s281 + $0x20] sm:$0xff]
        %v377 = vld [vmem:[%s281 + $0x28] sm:$0xff]
        %v378 = vld [vmem:[%s281 + $0x30] sm:$0xff]
        %v379 = vld [vmem:[%s281 + $0x38] sm:$0xff]
        %v380 = vld [vmem:[%s281 + $0x40] sm:$0xff]
        %v381 = vld [vmem:[%s281 + $0x48] sm:$0xff]
        %v382 = vld [vmem:[%s281 + $0x50] sm:$0xff]
        %v383 = vld [vmem:[%s281 + $0x58] sm:$0xff]
        %v384 = vld [vmem:[%s281 + $0x60] sm:$0xff]
        %v385 = vld [vmem:[%s281 + $0x68] sm:$0xff]
        %v386 = vld [vmem:[%s281 + $0x70] sm:$0xff]
        %v387 = vld [vmem:[%s281 + $0x78] sm:$0xff]
        %v388 = vld [vmem:[%s281 + $0x80] sm:$0xff]
        %v389 = vld [vmem:[%s281 + $0x88] sm:$0xff]
        %v390 = vld [vmem:[%s281 + $0x90] sm:$0xff]
        %v391 = vld [vmem:[%s281 + $0x98] sm:$0xff]
        %v392 = vld [vmem:[%s281 + $0xa0] sm:$0xff]
        %v393 = vld [vmem:[%s281 + $0xa8] sm:$0xff]
        %v394 = vld [vmem:[%s281 + $0xb0] sm:$0xff]
        %v395 = vld [vmem:[%s281 + $0xb8] sm:$0xff]
        %v396 = vld [vmem:[%s281 + $0xc0] sm:$0xff]
        %v397 = vld [vmem:[%s281 + $0xc8] sm:$0xff]
        %v398 = vld [vmem:[%s281 + $0xd0] sm:$0xff]
        %v399 = vld [vmem:[%s281 + $0xd8] sm:$0xff]
        %v400 = vld [vmem:[%s281 + $0xe0] sm:$0xff]
        %v401 = vld [vmem:[%s281 + $0xe8] sm:$0xff]
        %v402 = vld [vmem:[%s281 + $0xf0] sm:$0xff]
        %v403 = vld [vmem:[%s281 + $0xf8] sm:$0xff]
        %v404 = vld [vmem:[%s281 + $0x100] sm:$0xff]
        %v405 = vld [vmem:[%s281 + $0x108] sm:$0xff]
        %v406 = vld [vmem:[%s281 + $0x110] sm:$0xff]
        %v407 = vld [vmem:[%s281 + $0x118] sm:$0xff]
        %v408 = vld [vmem:[%s281 + $0x120] sm:$0xff]
        %v409 = vld [vmem:[%s281 + $0x128] sm:$0xff]
        %v410 = vld [vmem:[%s281 + $0x130] sm:$0xff]
        %v411 = vld [vmem:[%s281 + $0x138] sm:$0xff]
        %v412 = vld [vmem:[%s281 + $0x140] sm:$0xff]
        %v413 = vld [vmem:[%s281 + $0x148] sm:$0xff]
        %v414 = vld [vmem:[%s281 + $0x150] sm:$0xff]
        %v415 = vld [vmem:[%s281 + $0x158] sm:$0xff]
        %v416 = vld [vmem:[%s281 + $0x160] sm:$0xff]
        %v417 = vld [vmem:[%s281 + $0x168] sm:$0xff]
        %v418 = vld [vmem:[%s281 + $0x170] sm:$0xff]
        %v419 = vld [vmem:[%s281 + $0x178] sm:$0xff]
        %v420 = vld [vmem:[%s281 + $0x180] sm:$0xff]
        %v421 = vld [vmem:[%s281 + $0x188] sm:$0xff]
        %v422 = vld [vmem:[%s281 + $0x190] sm:$0xff]
        %v423 = vld [vmem:[%s281 + $0x198] sm:$0xff]
        %v424 = vld [vmem:[%s281 + $0x1a0] sm:$0xff]
        %v425 = vld [vmem:[%s281 + $0x1a8] sm:$0xff]
        %v426 = vld [vmem:[%s281 + $0x1b0] sm:$0xff]
        %v427 = vld [vmem:[%s281 + $0x1b8] sm:$0xff]
        %v428 = vld [vmem:[%s281 + $0x1c0] sm:$0xff]
        %v429 = vld [vmem:[%s281 + $0x1c8] sm:$0xff]
        %v430 = vld [vmem:[%s281 + $0x1d0] sm:$0xff]
        %v431 = vld [vmem:[%s281 + $0x1d8] sm:$0xff]
        %v432 = vld [vmem:[%s281 + $0x1e0] sm:$0xff]
        %v433 = vld [vmem:[%s281 + $0x1e8] sm:$0xff]
        %v434 = vld [vmem:[%s281 + $0x1f0] sm:$0xff]
        %v435 = vld [vmem:[%s281 + $0x1f8] sm:$0xff]
        %v436 = vld [vmem:[%s281 + $0x200] sm:$0xff]
        %v437 = vld [vmem:[%s281 + $0x208] sm:$0xff]
        %v438 = vld [vmem:[%s281 + $0x210] sm:$0xff]
        %v439 = vld [vmem:[%s281 + $0x218] sm:$0xff]
        %v440 = vld [vmem:[%s281 + $0x220] sm:$0xff]
        %v441 = vld [vmem:[%s281 + $0x228] sm:$0xff]
        %v442 = vld [vmem:[%s281 + $0x230] sm:$0xff]
        %v443 = vld [vmem:[%s281 + $0x238] sm:$0xff]
        %v444 = vld [vmem:[%s281 + $0x240] sm:$0xff]
        %v445 = vld [vmem:[%s281 + $0x248] sm:$0xff]
        %v446 = vld [vmem:[%s281 + $0x250] sm:$0xff]
        %v447 = vld [vmem:[%s281 + $0x258] sm:$0xff]
        %v448 = vld [vmem:[%s281 + $0x260] sm:$0xff]
        %v449 = vld [vmem:[%s281 + $0x268] sm:$0xff]
        %v450 = vld [vmem:[%s281 + $0x270] sm:$0xff]
        %v451 = vld [vmem:[%s281 + $0x278] sm:$0xff]
        %v452 = vld [vmem:[%s281 + $0x280] sm:$0xff]
        %v453 = vld [vmem:[%s281 + $0x288] sm:$0xff]
        %v454 = vld [vmem:[%s281 + $0x290] sm:$0xff]
        %v455 = vld [vmem:[%s281 + $0x298] sm:$0xff]
        %v456 = vld [vmem:[%s281 + $0x2a0] sm:$0xff]
        %v457 = vld [vmem:[%s281 + $0x2a8] sm:$0xff]
        %v458 = vld [vmem:[%s281 + $0x2b0] sm:$0xff]
        %v459 = vld [vmem:[%s281 + $0x2b8] sm:$0xff]
        %v460 = vld [vmem:[%s281 + $0x2c0] sm:$0xff]
        %v461 = vld [vmem:[%s281 + $0x2c8] sm:$0xff]
        %v462 = vld [vmem:[%s281 + $0x2d0] sm:$0xff]
        %v463 = vld [vmem:[%s281 + $0x2d8] sm:$0xff]
        %v464 = vld [vmem:[%s281 + $0x2e0] sm:$0xff]
        %v465 = vld [vmem:[%s281 + $0x2e8] sm:$0xff]
        %v466 = vld [vmem:[%s281 + $0x2f0] sm:$0xff]
        %v467 = vld [vmem:[%s281 + $0x2f8] sm:$0xff]
        %v468 = vld [vmem:[%s281 + $0x300] sm:$0xff]
        %v469 = vld [vmem:[%s281 + $0x308] sm:$0xff]
        %v470 = vld [vmem:[%s281 + $0x310] sm:$0xff]
        %v471 = vld [vmem:[%s281 + $0x318] sm:$0xff]
        %v472 = vld [vmem:[%s281 + $0x320] sm:$0xff]
        %v473 = vld [vmem:[%s281 + $0x328] sm:$0xff]
        %v474 = vld [vmem:[%s281 + $0x330] sm:$0xff]
        %v475 = vld [vmem:[%s281 + $0x338] sm:$0xff]
        %v476 = vld [vmem:[%s281 + $0x340] sm:$0xff]
        %v477 = vld [vmem:[%s281 + $0x348] sm:$0xff]
        %v478 = vld [vmem:[%s281 + $0x350] sm:$0xff]
        %v479 = vld [vmem:[%s281 + $0x358] sm:$0xff]
        %v480 = vld [vmem:[%s281 + $0x360] sm:$0xff]
        %v481 = vld [vmem:[%s281 + $0x368] sm:$0xff]
        %v482 = vld [vmem:[%s281 + $0x370] sm:$0xff]
        %v483 = vld [vmem:[%s281 + $0x378] sm:$0xff]
        %v484 = vld [vmem:[%s281 + $0x380] sm:$0xff]
        %v485 = vld [vmem:[%s281 + $0x388] sm:$0xff]
        %v486 = vld [vmem:[%s281 + $0x390] sm:$0xff]
        %v487 = vld [vmem:[%s281 + $0x398] sm:$0xff]
        %v488 = vld [vmem:[%s281 + $0x3a0] sm:$0xff]
        %v489 = vld [vmem:[%s281 + $0x3a8] sm:$0xff]
        %v490 = vld [vmem:[%s281 + $0x3b0] sm:$0xff]
        %v491 = vld [vmem:[%s281 + $0x3b8] sm:$0xff]
        %v492 = vld [vmem:[%s281 + $0x3c0] sm:$0xff]
        %v493 = vld [vmem:[%s281 + $0x3c8] sm:$0xff]
        %v494 = vld [vmem:[%s281 + $0x3d0] sm:$0xff]
        %v495 = vld [vmem:[%s281 + $0x3d8] sm:$0xff]
        %v496 = vld [vmem:[%s281 + $0x3e0] sm:$0xff]
        %v497 = vld [vmem:[%s281 + $0x3e8] sm:$0xff]
        %v498 = vld [vmem:[%s281 + $0x3f0] sm:$0xff]
        %v499 = vld [vmem:[%s281 + $0x3f8] sm:$0xff]
        %v500 = vld [vmem:[%s281 + $0x400] sm:$0xff]
        %v501 = vld [vmem:[%s281 + $0x408] sm:$0xff]
        %v502 = vld [vmem:[%s281 + $0x410] sm:$0xff]
        %v503 = vld [vmem:[%s281 + $0x418] sm:$0xff]
        %v504 = vld [vmem:[%s281 + $0x420] sm:$0xff]
        %v505 = vld [vmem:[%s281 + $0x428] sm:$0xff]
        %v506 = vld [vmem:[%s281 + $0x430] sm:$0xff]
        %v507 = vld [vmem:[%s281 + $0x438] sm:$0xff]
        %v508 = vld [vmem:[%s281 + $0x440] sm:$0xff]
        %v509 = vld [vmem:[%s281 + $0x448] sm:$0xff]
        %v510 = vld [vmem:[%s281 + $0x450] sm:$0xff]
        %v511 = vld [vmem:[%s281 + $0x458] sm:$0xff]
        %v512 = vld [vmem:[%s281 + $0x460] sm:$0xff]
        %v513 = vld [vmem:[%s281 + $0x468] sm:$0xff]
        %v514 = vld [vmem:[%s281 + $0x470] sm:$0xff]
        %v515 = vld [vmem:[%s281 + $0x478] sm:$0xff]
        %v516 = vld [vmem:[%s281 + $0x480] sm:$0xff]
        %v517 = vld [vmem:[%s281 + $0x488] sm:$0xff]
        %v518 = vld [vmem:[%s281 + $0x490] sm:$0xff]
        %v519 = vld [vmem:[%s281 + $0x498] sm:$0xff]
        %v520 = vld [vmem:[%s281 + $0x4a0] sm:$0xff]
        %v521 = vld [vmem:[%s281 + $0x4a8] sm:$0xff]
        %v522 = vld [vmem:[%s281 + $0x4b0] sm:$0xff]
        %v523 = vld [vmem:[%s281 + $0x4b8] sm:$0xff]
        %v524 = vld [vmem:[%s281 + $0x4c0] sm:$0xff]
        %v525 = vld [vmem:[%s281 + $0x4c8] sm:$0xff]
        %v526 = vld [vmem:[%s281 + $0x4d0] sm:$0xff]
        %v527 = vld [vmem:[%s281 + $0x4d8] sm:$0xff]
        %v528 = vld [vmem:[%s281 + $0x4e0] sm:$0xff]
        %v529 = vld [vmem:[%s281 + $0x4e8] sm:$0xff]
        %v530 = vld [vmem:[%s281 + $0x4f0] sm:$0xff]
        %v531 = vld [vmem:[%s281 + $0x4f8] sm:$0xff]
        %v532 = vld [vmem:[%s281 + $0x500] sm:$0xff]
        %v533 = vld [vmem:[%s281 + $0x508] sm:$0xff]
        %v534 = vld [vmem:[%s281 + $0x510] sm:$0xff]
        %v535 = vld [vmem:[%s281 + $0x518] sm:$0xff]
        %v536 = vld [vmem:[%s281 + $0x520] sm:$0xff]
        %v537 = vld [vmem:[%s281 + $0x528] sm:$0xff]
        %v538 = vld [vmem:[%s281 + $0x530] sm:$0xff]
        %v539 = vld [vmem:[%s281 + $0x538] sm:$0xff]
        %v540 = vld [vmem:[%s281 + $0x540] sm:$0xff]
        %v541 = vld [vmem:[%s281 + $0x548] sm:$0xff]
        %v542 = vld [vmem:[%s281 + $0x550] sm:$0xff]
        %v543 = vld [vmem:[%s281 + $0x558] sm:$0xff]
        %v544 = vld [vmem:[%s281 + $0x560] sm:$0xff]
        %v545 = vld [vmem:[%s281 + $0x568] sm:$0xff]
        %v546 = vld [vmem:[%s281 + $0x570] sm:$0xff]
        %v547 = vld [vmem:[%s281 + $0x578] sm:$0xff]
        %v548 = vld [vmem:[%s281 + $0x580] sm:$0xff]
        %v549 = vld [vmem:[%s281 + $0x588] sm:$0xff]
        %v550 = vld [vmem:[%s281 + $0x590] sm:$0xff]
        %v551 = vld [vmem:[%s281 + $0x598] sm:$0xff]
        %v552 = vld [vmem:[%s281 + $0x5a0] sm:$0xff]
        %v553 = vld [vmem:[%s281 + $0x5a8] sm:$0xff]
        %v554 = vld [vmem:[%s281 + $0x5b0] sm:$0xff]
        %v555 = vld [vmem:[%s281 + $0x5b8] sm:$0xff]
        %v556 = vld [vmem:[%s281 + $0x5c0] sm:$0xff]
        %v557 = vld [vmem:[%s281 + $0x5c8] sm:$0xff]
        %v558 = vld [vmem:[%s281 + $0x5d0] sm:$0xff]
        %v559 = vld [vmem:[%s281 + $0x5d8] sm:$0xff]
        %v560 = vld [vmem:[%s281 + $0x5e0] sm:$0xff]
        %v561 = vld [vmem:[%s281 + $0x5e8] sm:$0xff]
        %v562 = vld [vmem:[%s281 + $0x5f0] sm:$0xff]
        %v563 = vld [vmem:[%s281 + $0x5f8] sm:$0xff]
        %v564 = vld [vmem:[%s290] sm:$0x7]
        %v566 = vlaneseq
        %v567 = vshrl.u32 %v566, 7
        %v568 = vsub.s32 0, %v567
        %v569 = vrot.slane %v564, %v568
        %v570 = vlaneseq
        %v571 = vshrl.u32 %v570, 7
        %v572 = vsub.s32 1, %v571
        %v573 = vrot.slane %v564, %v572
        %v574 = vlaneseq
        %v575 = vshrl.u32 %v574, 7
        %v576 = vsub.s32 2, %v575
        %v577 = vrot.slane %v564, %v576
        %v581 = vand.u32 %v373, 4294901760
        %582 = vmatprep.subr.mxu0 %v581
        %v583 = vand.u32 %v372, 4294901760
        %584 = vmatpush1.msra.mxu0 %v583
        %v585 = vand.u32 %v376, 4294901760
        %586 = vmatprep.subr.mxu0 %v585
        %v587 = vand.u32 %v375, 4294901760
        %588 = vmatpush1.msra.mxu0 %v587
        %v589 = vand.u32 %v379, 4294901760
        %590 = vmatprep.subr.mxu0 %v589
        %v591 = vand.u32 %v378, 4294901760
        %592 = vmatpush1.msra.mxu0 %v591
        %v593 = vand.u32 %v382, 4294901760
        %594 = vmatprep.subr.mxu0 %v593
        %v595 = vand.u32 %v381, 4294901760
        %596 = vmatpush1.msra.mxu0 %v595
        %v597 = vand.u32 %v385, 4294901760
        %598 = vmatprep.subr.mxu0 %v597
        %v599 = vand.u32 %v384, 4294901760
        %600 = vmatpush1.msra.mxu0 %v599
        %v601 = vand.u32 %v388, 4294901760
        %602 = vmatprep.subr.mxu0 %v601
        %v603 = vand.u32 %v387, 4294901760
        %604 = vmatpush1.msra.mxu0 %v603
        %v605 = vand.u32 %v391, 4294901760
        %606 = vmatprep.subr.mxu0 %v605
        %v607 = vand.u32 %v390, 4294901760
        %608 = vmatpush1.msra.mxu0 %v607
        %v609 = vand.u32 %v394, 4294901760
        %610 = vmatprep.subr.mxu0 %v609
        %v611 = vand.u32 %v393, 4294901760
        %612 = vmatpush1.msra.mxu0 %v611
        %v613 = vand.u32 %v397, 4294901760
        %614 = vmatprep.subr.mxu0 %v613
        %v615 = vand.u32 %v396, 4294901760
        %616 = vmatpush1.msra.mxu0 %v615
        %v617 = vand.u32 %v400, 4294901760
        %618 = vmatprep.subr.mxu0 %v617
        %v619 = vand.u32 %v399, 4294901760
        %620 = vmatpush1.msra.mxu0 %v619
        %v621 = vand.u32 %v403, 4294901760
        %622 = vmatprep.subr.mxu0 %v621
        %v623 = vand.u32 %v402, 4294901760
        %624 = vmatpush1.msra.mxu0 %v623
        %v625 = vand.u32 %v406, 4294901760
        %626 = vmatprep.subr.mxu0 %v625
        %v627 = vand.u32 %v405, 4294901760
        %628 = vmatpush1.msra.mxu0 %v627
        %v629 = vand.u32 %v409, 4294901760
        %630 = vmatprep.subr.mxu0 %v629
        %v631 = vand.u32 %v408, 4294901760
        %632 = vmatpush1.msra.mxu0 %v631
        %v633 = vand.u32 %v412, 4294901760
        %634 = vmatprep.subr.mxu0 %v633
        %v635 = vand.u32 %v411, 4294901760
        %636 = vmatpush1.msra.mxu0 %v635
        %v637 = vand.u32 %v415, 4294901760
        %638 = vmatprep.subr.mxu0 %v637
        %v639 = vand.u32 %v414, 4294901760
        %640 = vmatpush1.msra.mxu0 %v639
        %v641 = vand.u32 %v418, 4294901760
        %642 = vmatprep.subr.mxu0 %v641
        %v643 = vand.u32 %v417, 4294901760
        %644 = vmatpush1.msra.mxu0 %v643
        %v645 = vand.u32 %v421, 4294901760
        %646 = vmatprep.subr.mxu0 %v645
        %v647 = vand.u32 %v420, 4294901760
        %648 = vmatpush1.msra.mxu0 %v647
        %v649 = vand.u32 %v424, 4294901760
        %650 = vmatprep.subr.mxu0 %v649
        %v651 = vand.u32 %v423, 4294901760
        %652 = vmatpush1.msra.mxu0 %v651
        %v653 = vand.u32 %v427, 4294901760
        %654 = vmatprep.subr.mxu0 %v653
        %v655 = vand.u32 %v426, 4294901760
        %656 = vmatpush1.msra.mxu0 %v655
        %v657 = vand.u32 %v430, 4294901760
        %658 = vmatprep.subr.mxu0 %v657
        %v659 = vand.u32 %v429, 4294901760
        %660 = vmatpush1.msra.mxu0 %v659
        %v661 = vand.u32 %v433, 4294901760
        %662 = vmatprep.subr.mxu0 %v661
        %v663 = vand.u32 %v432, 4294901760
        %664 = vmatpush1.msra.mxu0 %v663
        %v665 = vand.u32 %v436, 4294901760
        %666 = vmatprep.subr.mxu0 %v665
        %v667 = vand.u32 %v435, 4294901760
        %668 = vmatpush1.msra.mxu0 %v667
        %v669 = vand.u32 %v439, 4294901760
        %670 = vmatprep.subr.mxu0 %v669
        %v671 = vand.u32 %v438, 4294901760
        %672 = vmatpush1.msra.mxu0 %v671
        %v673 = vand.u32 %v442, 4294901760
        %674 = vmatprep.subr.mxu0 %v673
        %v675 = vand.u32 %v441, 4294901760
        %676 = vmatpush1.msra.mxu0 %v675
        %v677 = vand.u32 %v445, 4294901760
        %678 = vmatprep.subr.mxu0 %v677
        %v679 = vand.u32 %v444, 4294901760
        %680 = vmatpush1.msra.mxu0 %v679
        %v681 = vand.u32 %v448, 4294901760
        %682 = vmatprep.subr.mxu0 %v681
        %v683 = vand.u32 %v447, 4294901760
        %684 = vmatpush1.msra.mxu0 %v683
        %v685 = vand.u32 %v451, 4294901760
        %686 = vmatprep.subr.mxu0 %v685
        %v687 = vand.u32 %v450, 4294901760
        %688 = vmatpush1.msra.mxu0 %v687
        %v689 = vand.u32 %v454, 4294901760
        %690 = vmatprep.subr.mxu0 %v689
        %v691 = vand.u32 %v453, 4294901760
        %692 = vmatpush1.msra.mxu0 %v691
        %v693 = vand.u32 %v457, 4294901760
        %694 = vmatprep.subr.mxu0 %v693
        %v695 = vand.u32 %v456, 4294901760
        %696 = vmatpush1.msra.mxu0 %v695
        %v697 = vand.u32 %v460, 4294901760
        %698 = vmatprep.subr.mxu0 %v697
        %v699 = vand.u32 %v459, 4294901760
        %700 = vmatpush1.msra.mxu0 %v699
        %v701 = vand.u32 %v463, 4294901760
        %702 = vmatprep.subr.mxu0 %v701
        %v703 = vand.u32 %v462, 4294901760
        %704 = vmatpush1.msra.mxu0 %v703
        %v705 = vand.u32 %v466, 4294901760
        %706 = vmatprep.subr.mxu0 %v705
        %v707 = vand.u32 %v465, 4294901760
        %708 = vmatpush1.msra.mxu0 %v707
        %v709 = vand.u32 %v361, 4294901760
        %v710 = vsub.f32 %v361, %v709
        %v711 = vand.u32 %v710, 4294901760
        %v712 = vsub.f32 %v710, %v711
        %v713 = vand.u32 %v712, 4294901760
        %714 = vmatprep.mubr.f32.mxu0 %v713
        %v715 = vand.u32 %v360, 4294901760
        %v716 = vsub.f32 %v360, %v715
        %v717 = vand.u32 %v716, 4294901760
        %v718 = vsub.f32 %v716, %v717
        %v719 = vand.u32 %v718, 4294901760
        %720 = vmatmul.mubr.f32.gmra.mrb[0].mxu0 %v719
        %v721 = vpop.f32.mrb[0].mxu0
        %v722 = vadd.f32 %v569, %v721
        %v723 = vpop.f32.mrb[0].mxu0
        %v724 = vadd.f32 %v573, %v723
        %v725 = vand.u32 %v365, 4294901760
        %v726 = vsub.f32 %v365, %v725
        %v727 = vand.u32 %v726, 4294901760
        %v728 = vsub.f32 %v726, %v727
        %v729 = vand.u32 %v728, 4294901760
        %730 = vmatprep.mubr.f32.mxu0 %v729
        %v731 = vand.u32 %v364, 4294901760
        %v732 = vsub.f32 %v364, %v731
        %v733 = vand.u32 %v732, 4294901760
        %v734 = vsub.f32 %v732, %v733
        %v735 = vand.u32 %v734, 4294901760
        %736 = vmatmul.mubr.f32.gmra.mrb[0].mxu0 %v735
        %v737 = vpop.f32.mrb[0].mxu0
        %v738 = vadd.f32 %v569, %v737
        %v739 = vpop.f32.mrb[0].mxu0
        %v740 = vadd.f32 %v573, %v739
        %v741 = vand.u32 %v369, 4294901760
        %v742 = vsub.f32 %v369, %v741
        %v743 = vand.u32 %v742, 4294901760
        %v744 = vsub.f32 %v742, %v743
        %v745 = vand.u32 %v744, 4294901760
        %746 = vmatprep.mubr.f32.mxu0 %v745
        %v747 = vand.u32 %v368, 4294901760
        %v748 = vsub.f32 %v368, %v747
        %v749 = vand.u32 %v748, 4294901760
        %v750 = vsub.f32 %v748, %v749
        %v751 = vand.u32 %v750, 4294901760
        %752 = vmatmul.mubr.f32.gmra.mrb[0].mxu0 %v751
        %v753 = vpop.f32.mrb[0].mxu0
        %v754 = vadd.f32 %v569, %v753
        %v755 = vpop.f32.mrb[0].mxu0
        %v756 = vadd.f32 %v573, %v755
        %757 = vdwg.mxu0
        %v758 = vand.u32 %v373, 4294901760
        %v759 = vsub.f32 %v373, %v758
        %v760 = vand.u32 %v759, 4294901760
        %v761 = vsub.f32 %v759, %v760
        %v762 = vand.u32 %v761, 4294901760
        %763 = vmatprep.subr.mxu0 %v762
        %v764 = vand.u32 %v372, 4294901760
        %v765 = vsub.f32 %v372, %v764
        %v766 = vand.u32 %v765, 4294901760
        %v767 = vsub.f32 %v765, %v766
        %v768 = vand.u32 %v767, 4294901760
        %769 = vmatpush1.msra.mxu0 %v768
        %v770 = vand.u32 %v376, 4294901760
        %v771 = vsub.f32 %v376, %v770
        %v772 = vand.u32 %v771, 4294901760
        %v773 = vsub.f32 %v771, %v772
        %v774 = vand.u32 %v773, 4294901760
        %775 = vmatprep.subr.mxu0 %v774
        %v776 = vand.u32 %v375, 4294901760
        %v777 = vsub.f32 %v375, %v776
        %v778 = vand.u32 %v777, 4294901760
        %v779 = vsub.f32 %v777, %v778
        %v780 = vand.u32 %v779, 4294901760
        %781 = vmatpush1.msra.mxu0 %v780
        %v782 = vand.u32 %v379, 4294901760
        %v783 = vsub.f32 %v379, %v782
        %v784 = vand.u32 %v783, 4294901760
        %v785 = vsub.f32 %v783, %v784
        %v786 = vand.u32 %v785, 4294901760
        %787 = vmatprep.subr.mxu0 %v786
        %v788 = vand.u32 %v378, 4294901760
        %v789 = vsub.f32 %v378, %v788
        %v790 = vand.u32 %v789, 4294901760
        %v791 = vsub.f32 %v789, %v790
        %v792 = vand.u32 %v791, 4294901760
        %793 = vmatpush1.msra.mxu0 %v792
        %v794 = vand.u32 %v382, 4294901760
        %v795 = vsub.f32 %v382, %v794
        %v796 = vand.u32 %v795, 4294901760
        %v797 = vsub.f32 %v795, %v796
        %v798 = vand.u32 %v797, 4294901760
        %799 = vmatprep.subr.mxu0 %v798
        %v800 = vand.u32 %v381, 4294901760
        %v801 = vsub.f32 %v381, %v800
        %v802 = vand.u32 %v801, 4294901760
        %v803 = vsub.f32 %v801, %v802
        %v804 = vand.u32 %v803, 4294901760
        %805 = vmatpush1.msra.mxu0 %v804
        %v806 = vand.u32 %v385, 4294901760
        %v807 = vsub.f32 %v385, %v806
        %v808 = vand.u32 %v807, 4294901760
        %v809 = vsub.f32 %v807, %v808
        %v810 = vand.u32 %v809, 4294901760
        %811 = vmatprep.subr.mxu0 %v810
        %v812 = vand.u32 %v384, 4294901760
        %v813 = vsub.f32 %v384, %v812
        %v814 = vand.u32 %v813, 4294901760
        %v815 = vsub.f32 %v813, %v814
        %v816 = vand.u32 %v815, 4294901760
        %817 = vmatpush1.msra.mxu0 %v816
        %v818 = vand.u32 %v388, 4294901760
        %v819 = vsub.f32 %v388, %v818
        %v820 = vand.u32 %v819, 4294901760
        %v821 = vsub.f32 %v819, %v820
        %v822 = vand.u32 %v821, 4294901760
        %823 = vmatprep.subr.mxu0 %v822
        %v824 = vand.u32 %v387, 4294901760
        %v825 = vsub.f32 %v387, %v824
        %v826 = vand.u32 %v825, 4294901760
        %v827 = vsub.f32 %v825, %v826
        %v828 = vand.u32 %v827, 4294901760
        %829 = vmatpush1.msra.mxu0 %v828
        %v830 = vand.u32 %v391, 4294901760
        %v831 = vsub.f32 %v391, %v830
        %v832 = vand.u32 %v831, 4294901760
        %v833 = vsub.f32 %v831, %v832
        %v834 = vand.u32 %v833, 4294901760
        %835 = vmatprep.subr.mxu0 %v834
        %v836 = vand.u32 %v390, 4294901760
        %v837 = vsub.f32 %v390, %v836
        %v838 = vand.u32 %v837, 4294901760
        %v839 = vsub.f32 %v837, %v838
        %v840 = vand.u32 %v839, 4294901760
        %841 = vmatpush1.msra.mxu0 %v840
        %v842 = vand.u32 %v394, 4294901760
        %v843 = vsub.f32 %v394, %v842
        %v844 = vand.u32 %v843, 4294901760
        %v845 = vsub.f32 %v843, %v844
        %v846 = vand.u32 %v845, 4294901760
        %847 = vmatprep.subr.mxu0 %v846
        %v848 = vand.u32 %v393, 4294901760
        %v849 = vsub.f32 %v393, %v848
        %v850 = vand.u32 %v849, 4294901760
        %v851 = vsub.f32 %v849, %v850
        %v852 = vand.u32 %v851, 4294901760
        %853 = vmatpush1.msra.mxu0 %v852
        %v854 = vand.u32 %v397, 4294901760
        %v855 = vsub.f32 %v397, %v854
        %v856 = vand.u32 %v855, 4294901760
        %v857 = vsub.f32 %v855, %v856
        %v858 = vand.u32 %v857, 4294901760
        %859 = vmatprep.subr.mxu0 %v858
        %v860 = vand.u32 %v396, 4294901760
        %v861 = vsub.f32 %v396, %v860
        %v862 = vand.u32 %v861, 4294901760
        %v863 = vsub.f32 %v861, %v862
        %v864 = vand.u32 %v863, 4294901760
        %865 = vmatpush1.msra.mxu0 %v864
        %v866 = vand.u32 %v400, 4294901760
        %v867 = vsub.f32 %v400, %v866
        %v868 = vand.u32 %v867, 4294901760
        %v869 = vsub.f32 %v867, %v868
        %v870 = vand.u32 %v869, 4294901760
        %871 = vmatprep.subr.mxu0 %v870
        %v872 = vand.u32 %v399, 4294901760
        %v873 = vsub.f32 %v399, %v872
        %v874 = vand.u32 %v873, 4294901760
        %v875 = vsub.f32 %v873, %v874
        %v876 = vand.u32 %v875, 4294901760
        %877 = vmatpush1.msra.mxu0 %v876
        %v878 = vand.u32 %v403, 4294901760
        %v879 = vsub.f32 %v403, %v878
        %v880 = vand.u32 %v879, 4294901760
        %v881 = vsub.f32 %v879, %v880
        %v882 = vand.u32 %v881, 4294901760
        %883 = vmatprep.subr.mxu0 %v882
        %v884 = vand.u32 %v402, 4294901760
        %v885 = vsub.f32 %v402, %v884
        %v886 = vand.u32 %v885, 4294901760
        %v887 = vsub.f32 %v885, %v886
        %v888 = vand.u32 %v887, 4294901760
        %889 = vmatpush1.msra.mxu0 %v888
        %v890 = vand.u32 %v406, 4294901760
        %v891 = vsub.f32 %v406, %v890
        %v892 = vand.u32 %v891, 4294901760
        %v893 = vsub.f32 %v891, %v892
        %v894 = vand.u32 %v893, 4294901760
        %895 = vmatprep.subr.mxu0 %v894
        %v896 = vand.u32 %v405, 4294901760
        %v897 = vsub.f32 %v405, %v896
        %v898 = vand.u32 %v897, 4294901760
        %v899 = vsub.f32 %v897, %v898
        %v900 = vand.u32 %v899, 4294901760
        %901 = vmatpush1.msra.mxu0 %v900
        %v902 = vand.u32 %v409, 4294901760
        %v903 = vsub.f32 %v409, %v902
        %v904 = vand.u32 %v903, 4294901760
        %v905 = vsub.f32 %v903, %v904
        %v906 = vand.u32 %v905, 4294901760
        %907 = vmatprep.subr.mxu0 %v906
        %v908 = vand.u32 %v408, 4294901760
        %v909 = vsub.f32 %v408, %v908
        %v910 = vand.u32 %v909, 4294901760
        %v911 = vsub.f32 %v909, %v910
        %v912 = vand.u32 %v911, 4294901760
        %913 = vmatpush1.msra.mxu0 %v912
        %v914 = vand.u32 %v412, 4294901760
        %v915 = vsub.f32 %v412, %v914
        %v916 = vand.u32 %v915, 4294901760
        %v917 = vsub.f32 %v915, %v916
        %v918 = vand.u32 %v917, 4294901760
        %919 = vmatprep.subr.mxu0 %v918
        %v920 = vand.u32 %v411, 4294901760
        %v921 = vsub.f32 %v411, %v920
        %v922 = vand.u32 %v921, 4294901760
        %v923 = vsub.f32 %v921, %v922
        %v924 = vand.u32 %v923, 4294901760
        %925 = vmatpush1.msra.mxu0 %v924
        %v926 = vand.u32 %v415, 4294901760
        %v927 = vsub.f32 %v415, %v926
        %v928 = vand.u32 %v927, 4294901760
        %v929 = vsub.f32 %v927, %v928
        %v930 = vand.u32 %v929, 4294901760
        %931 = vmatprep.subr.mxu0 %v930
        %v932 = vand.u32 %v414, 4294901760
        %v933 = vsub.f32 %v414, %v932
        %v934 = vand.u32 %v933, 4294901760
        %v935 = vsub.f32 %v933, %v934
        %v936 = vand.u32 %v935, 4294901760
        %937 = vmatpush1.msra.mxu0 %v936
        %v938 = vand.u32 %v418, 4294901760
        %v939 = vsub.f32 %v418, %v938
        %v940 = vand.u32 %v939, 4294901760
        %v941 = vsub.f32 %v939, %v940
        %v942 = vand.u32 %v941, 4294901760
        %943 = vmatprep.subr.mxu0 %v942
        %v944 = vand.u32 %v417, 4294901760
        %v945 = vsub.f32 %v417, %v944
        %v946 = vand.u32 %v945, 4294901760
        %v947 = vsub.f32 %v945, %v946
        %v948 = vand.u32 %v947, 4294901760
        %949 = vmatpush1.msra.mxu0 %v948
        %v950 = vand.u32 %v421, 4294901760
        %v951 = vsub.f32 %v421, %v950
        %v952 = vand.u32 %v951, 4294901760
        %v953 = vsub.f32 %v951, %v952
        %v954 = vand.u32 %v953, 4294901760
        %955 = vmatprep.subr.mxu0 %v954
        %v956 = vand.u32 %v420, 4294901760
        %v957 = vsub.f32 %v420, %v956
        %v958 = vand.u32 %v957, 4294901760
        %v959 = vsub.f32 %v957, %v958
        %v960 = vand.u32 %v959, 4294901760
        %961 = vmatpush1.msra.mxu0 %v960
        %v962 = vand.u32 %v424, 4294901760
        %v963 = vsub.f32 %v424, %v962
        %v964 = vand.u32 %v963, 4294901760
        %v965 = vsub.f32 %v963, %v964
        %v966 = vand.u32 %v965, 4294901760
        %967 = vmatprep.subr.mxu0 %v966
        %v968 = vand.u32 %v423, 4294901760
        %v969 = vsub.f32 %v423, %v968
        %v970 = vand.u32 %v969, 4294901760
        %v971 = vsub.f32 %v969, %v970
        %v972 = vand.u32 %v971, 4294901760
        %973 = vmatpush1.msra.mxu0 %v972
        %v974 = vand.u32 %v427, 4294901760
        %v975 = vsub.f32 %v427, %v974
        %v976 = vand.u32 %v975, 4294901760
        %v977 = vsub.f32 %v975, %v976
        %v978 = vand.u32 %v977, 4294901760
        %979 = vmatprep.subr.mxu0 %v978
        %v980 = vand.u32 %v426, 4294901760
        %v981 = vsub.f32 %v426, %v980
        %v982 = vand.u32 %v981, 4294901760
        %v983 = vsub.f32 %v981, %v982
        %v984 = vand.u32 %v983, 4294901760
        %985 = vmatpush1.msra.mxu0 %v984
        %v986 = vand.u32 %v430, 4294901760
        %v987 = vsub.f32 %v430, %v986
        %v988 = vand.u32 %v987, 4294901760
        %v989 = vsub.f32 %v987, %v988
        %v990 = vand.u32 %v989, 4294901760
        %991 = vmatprep.subr.mxu0 %v990
        %v992 = vand.u32 %v429, 4294901760
        %v993 = vsub.f32 %v429, %v992
        %v994 = vand.u32 %v993, 4294901760
        %v995 = vsub.f32 %v993, %v994
        %v996 = vand.u32 %v995, 4294901760
        %997 = vmatpush1.msra.mxu0 %v996
        %v998 = vand.u32 %v433, 4294901760
        %v999 = vsub.f32 %v433, %v998
        %v1000 = vand.u32 %v999, 4294901760
        %v1001 = vsub.f32 %v999, %v1000
        %v1002 = vand.u32 %v1001, 4294901760
        %1003 = vmatprep.subr.mxu0 %v1002
        %v1004 = vand.u32 %v432, 4294901760
        %v1005 = vsub.f32 %v432, %v1004
        %v1006 = vand.u32 %v1005, 4294901760
        %v1007 = vsub.f32 %v1005, %v1006
        %v1008 = vand.u32 %v1007, 4294901760
        %1009 = vmatpush1.msra.mxu0 %v1008
        %v1010 = vand.u32 %v436, 4294901760
        %v1011 = vsub.f32 %v436, %v1010
        %v1012 = vand.u32 %v1011, 4294901760
        %v1013 = vsub.f32 %v1011, %v1012
        %v1014 = vand.u32 %v1013, 4294901760
        %1015 = vmatprep.subr.mxu0 %v1014
        %v1016 = vand.u32 %v435, 4294901760
        %v1017 = vsub.f32 %v435, %v1016
        %v1018 = vand.u32 %v1017, 4294901760
        %v1019 = vsub.f32 %v1017, %v1018
        %v1020 = vand.u32 %v1019, 4294901760
        %1021 = vmatpush1.msra.mxu0 %v1020
        %v1022 = vand.u32 %v439, 4294901760
        %v1023 = vsub.f32 %v439, %v1022
        %v1024 = vand.u32 %v1023, 4294901760
        %v1025 = vsub.f32 %v1023, %v1024
        %v1026 = vand.u32 %v1025, 4294901760
        %1027 = vmatprep.subr.mxu0 %v1026
        %v1028 = vand.u32 %v438, 4294901760
        %v1029 = vsub.f32 %v438, %v1028
        %v1030 = vand.u32 %v1029, 4294901760
        %v1031 = vsub.f32 %v1029, %v1030
        %v1032 = vand.u32 %v1031, 4294901760
        %1033 = vmatpush1.msra.mxu0 %v1032
        %v1034 = vand.u32 %v442, 4294901760
        %v1035 = vsub.f32 %v442, %v1034
        %v1036 = vand.u32 %v1035, 4294901760
        %v1037 = vsub.f32 %v1035, %v1036
        %v1038 = vand.u32 %v1037, 4294901760
        %1039 = vmatprep.subr.mxu0 %v1038
        %v1040 = vand.u32 %v441, 4294901760
        %v1041 = vsub.f32 %v441, %v1040
        %v1042 = vand.u32 %v1041, 4294901760
        %v1043 = vsub.f32 %v1041, %v1042
        %v1044 = vand.u32 %v1043, 4294901760
        %1045 = vmatpush1.msra.mxu0 %v1044
        %v1046 = vand.u32 %v445, 4294901760
        %v1047 = vsub.f32 %v445, %v1046
        %v1048 = vand.u32 %v1047, 4294901760
        %v1049 = vsub.f32 %v1047, %v1048
        %v1050 = vand.u32 %v1049, 4294901760
        %1051 = vmatprep.subr.mxu0 %v1050
        %v1052 = vand.u32 %v444, 4294901760
        %v1053 = vsub.f32 %v444, %v1052
        %v1054 = vand.u32 %v1053, 4294901760
        %v1055 = vsub.f32 %v1053, %v1054
        %v1056 = vand.u32 %v1055, 4294901760
        %1057 = vmatpush1.msra.mxu0 %v1056
        %v1058 = vand.u32 %v448, 4294901760
        %v1059 = vsub.f32 %v448, %v1058
        %v1060 = vand.u32 %v1059, 4294901760
        %v1061 = vsub.f32 %v1059, %v1060
        %v1062 = vand.u32 %v1061, 4294901760
        %1063 = vmatprep.subr.mxu0 %v1062
        %v1064 = vand.u32 %v447, 4294901760
        %v1065 = vsub.f32 %v447, %v1064
        %v1066 = vand.u32 %v1065, 4294901760
        %v1067 = vsub.f32 %v1065, %v1066
        %v1068 = vand.u32 %v1067, 4294901760
        %1069 = vmatpush1.msra.mxu0 %v1068
        %v1070 = vand.u32 %v451, 4294901760
        %v1071 = vsub.f32 %v451, %v1070
        %v1072 = vand.u32 %v1071, 4294901760
        %v1073 = vsub.f32 %v1071, %v1072
        %v1074 = vand.u32 %v1073, 4294901760
        %1075 = vmatprep.subr.mxu0 %v1074
        %v1076 = vand.u32 %v450, 4294901760
        %v1077 = vsub.f32 %v450, %v1076
        %v1078 = vand.u32 %v1077, 4294901760
        %v1079 = vsub.f32 %v1077, %v1078
        %v1080 = vand.u32 %v1079, 4294901760
        %1081 = vmatpush1.msra.mxu0 %v1080
        %v1082 = vand.u32 %v454, 4294901760
        %v1083 = vsub.f32 %v454, %v1082
        %v1084 = vand.u32 %v1083, 4294901760
        %v1085 = vsub.f32 %v1083, %v1084
        %v1086 = vand.u32 %v1085, 4294901760
        %1087 = vmatprep.subr.mxu0 %v1086
        %v1088 = vand.u32 %v453, 4294901760
        %v1089 = vsub.f32 %v453, %v1088
        %v1090 = vand.u32 %v1089, 4294901760
        %v1091 = vsub.f32 %v1089, %v1090
        %v1092 = vand.u32 %v1091, 4294901760
        %1093 = vmatpush1.msra.mxu0 %v1092
        %v1094 = vand.u32 %v457, 4294901760
        %v1095 = vsub.f32 %v457, %v1094
        %v1096 = vand.u32 %v1095, 4294901760
        %v1097 = vsub.f32 %v1095, %v1096
        %v1098 = vand.u32 %v1097, 4294901760
        %1099 = vmatprep.subr.mxu0 %v1098
        %v1100 = vand.u32 %v456, 4294901760
        %v1101 = vsub.f32 %v456, %v1100
        %v1102 = vand.u32 %v1101, 4294901760
        %v1103 = vsub.f32 %v1101, %v1102
        %v1104 = vand.u32 %v1103, 4294901760
        %1105 = vmatpush1.msra.mxu0 %v1104
        %v1106 = vand.u32 %v460, 4294901760
        %v1107 = vsub.f32 %v460, %v1106
        %v1108 = vand.u32 %v1107, 4294901760
        %v1109 = vsub.f32 %v1107, %v1108
        %v1110 = vand.u32 %v1109, 4294901760
        %1111 = vmatprep.subr.mxu0 %v1110
        %v1112 = vand.u32 %v459, 4294901760
        %v1113 = vsub.f32 %v459, %v1112
        %v1114 = vand.u32 %v1113, 4294901760
        %v1115 = vsub.f32 %v1113, %v1114
        %v1116 = vand.u32 %v1115, 4294901760
        %1117 = vmatpush1.msra.mxu0 %v1116
        %v1118 = vand.u32 %v463, 4294901760
        %v1119 = vsub.f32 %v463, %v1118
        %v1120 = vand.u32 %v1119, 4294901760
        %v1121 = vsub.f32 %v1119, %v1120
        %v1122 = vand.u32 %v1121, 4294901760
        %1123 = vmatprep.subr.mxu0 %v1122
        %v1124 = vand.u32 %v462, 4294901760
        %v1125 = vsub.f32 %v462, %v1124
        %v1126 = vand.u32 %v1125, 4294901760
        %v1127 = vsub.f32 %v1125, %v1126
        %v1128 = vand.u32 %v1127, 4294901760
        %1129 = vmatpush1.msra.mxu0 %v1128
        %v1130 = vand.u32 %v466, 4294901760
        %v1131 = vsub.f32 %v466, %v1130
        %v1132 = vand.u32 %v1131, 4294901760
        %v1133 = vsub.f32 %v1131, %v1132
        %v1134 = vand.u32 %v1133, 4294901760
        %1135 = vmatprep.subr.mxu0 %v1134
        %v1136 = vand.u32 %v465, 4294901760
        %v1137 = vsub.f32 %v465, %v1136
        %v1138 = vand.u32 %v1137, 4294901760
        %v1139 = vsub.f32 %v1137, %v1138
        %v1140 = vand.u32 %v1139, 4294901760
        %1141 = vmatpush1.msra.mxu0 %v1140
        %v1142 = vand.u32 %v361, 4294901760
        %1143 = vmatprep.mubr.f32.mxu0 %v1142
        %v1144 = vand.u32 %v360, 4294901760
        %1145 = vmatmul.mubr.f32.gmra.mrb[0].mxu0 %v1144
        %v1146 = vpop.f32.mrb[0].mxu0
        %v1147 = vadd.f32 %v722, %v1146
        %v1148 = vpop.f32.mrb[0].mxu0
        %v1149 = vadd.f32 %v724, %v1148
        %v1150 = vand.u32 %v365, 4294901760
        %1151 = vmatprep.mubr.f32.mxu0 %v1150
        %v1152 = vand.u32 %v364, 4294901760
        %1153 = vmatmul.mubr.f32.gmra.mrb[0].mxu0 %v1152
        %v1154 = vpop.f32.mrb[0].mxu0
        %v1155 = vadd.f32 %v738, %v1154
        %v1156 = vpop.f32.mrb[0].mxu0
        %v1157 = vadd.f32 %v740, %v1156
        %v1158 = vand.u32 %v369, 4294901760
        %1159 = vmatprep.mubr.f32.mxu0 %v1158
        %v1160 = vand.u32 %v368, 4294901760
        %1161 = vmatmul.mubr.f32.gmra.mrb[0].mxu0 %v1160
        %v1162 = vpop.f32.mrb[0].mxu0
        %v1163 = vadd.f32 %v754, %v1162
        %v1164 = vpop.f32.mrb[0].mxu0
        %v1165 = vadd.f32 %v756, %v1164
        %1166 = vdwg.mxu0
        %v1167 = vand.u32 %v373, 4294901760
        %v1168 = vsub.f32 %v373, %v1167
        %1169 = vmatprep.subr.mxu0 %v1168
        %v1170 = vand.u32 %v372, 4294901760
        %v1171 = vsub.f32 %v372, %v1170
        %1172 = vmatpush1.msra.mxu0 %v1171
        %v1173 = vand.u32 %v376, 4294901760
        %v1174 = vsub.f32 %v376, %v1173
        %1175 = vmatprep.subr.mxu0 %v1174
        %v1176 = vand.u32 %v375, 4294901760
        %v1177 = vsub.f32 %v375, %v1176
        %1178 = vmatpush1.msra.mxu0 %v1177
        %v1179 = vand.u32 %v379, 4294901760
        %v1180 = vsub.f32 %v379, %v1179
        %1181 = vmatprep.subr.mxu0 %v1180
        %v1182 = vand.u32 %v378, 4294901760
        %v1183 = vsub.f32 %v378, %v1182
        %1184 = vmatpush1.msra.mxu0 %v1183
        %v1185 = vand.u32 %v382, 4294901760
        %v1186 = vsub.f32 %v382, %v1185
        %1187 = vmatprep.subr.mxu0 %v1186
        %v1188 = vand.u32 %v381, 4294901760
        %v1189 = vsub.f32 %v381, %v1188
        %1190 = vmatpush1.msra.mxu0 %v1189
        %v1191 = vand.u32 %v385, 4294901760
        %v1192 = vsub.f32 %v385, %v1191
        %1193 = vmatprep.subr.mxu0 %v1192
        %v1194 = vand.u32 %v384, 4294901760
        %v1195 = vsub.f32 %v384, %v1194
        %1196 = vmatpush1.msra.mxu0 %v1195
        %v1197 = vand.u32 %v388, 4294901760
        %v1198 = vsub.f32 %v388, %v1197
        %1199 = vmatprep.subr.mxu0 %v1198
        %v1200 = vand.u32 %v387, 4294901760
        %v1201 = vsub.f32 %v387, %v1200
        %1202 = vmatpush1.msra.mxu0 %v1201
        %v1203 = vand.u32 %v391, 4294901760
        %v1204 = vsub.f32 %v391, %v1203
        %1205 = vmatprep.subr.mxu0 %v1204
        %v1206 = vand.u32 %v390, 4294901760
        %v1207 = vsub.f32 %v390, %v1206
        %1208 = vmatpush1.msra.mxu0 %v1207
        %v1209 = vand.u32 %v394, 4294901760
        %v1210 = vsub.f32 %v394, %v1209
        %1211 = vmatprep.subr.mxu0 %v1210
        %v1212 = vand.u32 %v393, 4294901760
        %v1213 = vsub.f32 %v393, %v1212
        %1214 = vmatpush1.msra.mxu0 %v1213
        %v1215 = vand.u32 %v397, 4294901760
        %v1216 = vsub.f32 %v397, %v1215
        %1217 = vmatprep.subr.mxu0 %v1216
        %v1218 = vand.u32 %v396, 4294901760
        %v1219 = vsub.f32 %v396, %v1218
        %1220 = vmatpush1.msra.mxu0 %v1219
        %v1221 = vand.u32 %v400, 4294901760
        %v1222 = vsub.f32 %v400, %v1221
        %1223 = vmatprep.subr.mxu0 %v1222
        %v1224 = vand.u32 %v399, 4294901760
        %v1225 = vsub.f32 %v399, %v1224
        %1226 = vmatpush1.msra.mxu0 %v1225
        %v1227 = vand.u32 %v403, 4294901760
        %v1228 = vsub.f32 %v403, %v1227
        %1229 = vmatprep.subr.mxu0 %v1228
        %v1230 = vand.u32 %v402, 4294901760
        %v1231 = vsub.f32 %v402, %v1230
        %1232 = vmatpush1.msra.mxu0 %v1231
        %v1233 = vand.u32 %v406, 4294901760
        %v1234 = vsub.f32 %v406, %v1233
        %1235 = vmatprep.subr.mxu0 %v1234
        %v1236 = vand.u32 %v405, 4294901760
        %v1237 = vsub.f32 %v405, %v1236
        %1238 = vmatpush1.msra.mxu0 %v1237
        %v1239 = vand.u32 %v409, 4294901760
        %v1240 = vsub.f32 %v409, %v1239
        %1241 = vmatprep.subr.mxu0 %v1240
        %v1242 = vand.u32 %v408, 4294901760
        %v1243 = vsub.f32 %v408, %v1242
        %1244 = vmatpush1.msra.mxu0 %v1243
        %v1245 = vand.u32 %v412, 4294901760
        %v1246 = vsub.f32 %v412, %v1245
        %1247 = vmatprep.subr.mxu0 %v1246
        %v1248 = vand.u32 %v411, 4294901760
        %v1249 = vsub.f32 %v411, %v1248
        %1250 = vmatpush1.msra.mxu0 %v1249
        %v1251 = vand.u32 %v415, 4294901760
        %v1252 = vsub.f32 %v415, %v1251
        %1253 = vmatprep.subr.mxu0 %v1252
        %v1254 = vand.u32 %v414, 4294901760
        %v1255 = vsub.f32 %v414, %v1254
        %1256 = vmatpush1.msra.mxu0 %v1255
        %v1257 = vand.u32 %v418, 4294901760
        %v1258 = vsub.f32 %v418, %v1257
        %1259 = vmatprep.subr.mxu0 %v1258
        %v1260 = vand.u32 %v417, 4294901760
        %v1261 = vsub.f32 %v417, %v1260
        %1262 = vmatpush1.msra.mxu0 %v1261
        %v1263 = vand.u32 %v421, 4294901760
        %v1264 = vsub.f32 %v421, %v1263
        %1265 = vmatprep.subr.mxu0 %v1264
        %v1266 = vand.u32 %v420, 4294901760
        %v1267 = vsub.f32 %v420, %v1266
        %1268 = vmatpush1.msra.mxu0 %v1267
        %v1269 = vand.u32 %v424, 4294901760
        %v1270 = vsub.f32 %v424, %v1269
        %1271 = vmatprep.subr.mxu0 %v1270
        %v1272 = vand.u32 %v423, 4294901760
        %v1273 = vsub.f32 %v423, %v1272
        %1274 = vmatpush1.msra.mxu0 %v1273
        %v1275 = vand.u32 %v427, 4294901760
        %v1276 = vsub.f32 %v427, %v1275
        %1277 = vmatprep.subr.mxu0 %v1276
        %v1278 = vand.u32 %v426, 4294901760
        %v1279 = vsub.f32 %v426, %v1278
        %1280 = vmatpush1.msra.mxu0 %v1279
        %v1281 = vand.u32 %v430, 4294901760
        %v1282 = vsub.f32 %v430, %v1281
        %1283 = vmatprep.subr.mxu0 %v1282
        %v1284 = vand.u32 %v429, 4294901760
        %v1285 = vsub.f32 %v429, %v1284
        %1286 = vmatpush1.msra.mxu0 %v1285
        %v1287 = vand.u32 %v433, 4294901760
        %v1288 = vsub.f32 %v433, %v1287
        %1289 = vmatprep.subr.mxu0 %v1288
        %v1290 = vand.u32 %v432, 4294901760
        %v1291 = vsub.f32 %v432, %v1290
        %1292 = vmatpush1.msra.mxu0 %v1291
        %v1293 = vand.u32 %v436, 4294901760
        %v1294 = vsub.f32 %v436, %v1293
        %1295 = vmatprep.subr.mxu0 %v1294
        %v1296 = vand.u32 %v435, 4294901760
        %v1297 = vsub.f32 %v435, %v1296
        %1298 = vmatpush1.msra.mxu0 %v1297
        %v1299 = vand.u32 %v439, 4294901760
        %v1300 = vsub.f32 %v439, %v1299
        %1301 = vmatprep.subr.mxu0 %v1300
        %v1302 = vand.u32 %v438, 4294901760
        %v1303 = vsub.f32 %v438, %v1302
        %1304 = vmatpush1.msra.mxu0 %v1303
        %v1305 = vand.u32 %v442, 4294901760
        %v1306 = vsub.f32 %v442, %v1305
        %1307 = vmatprep.subr.mxu0 %v1306
        %v1308 = vand.u32 %v441, 4294901760
        %v1309 = vsub.f32 %v441, %v1308
        %1310 = vmatpush1.msra.mxu0 %v1309
        %v1311 = vand.u32 %v445, 4294901760
        %v1312 = vsub.f32 %v445, %v1311
        %1313 = vmatprep.subr.mxu0 %v1312
        %v1314 = vand.u32 %v444, 4294901760
        %v1315 = vsub.f32 %v444, %v1314
        %1316 = vmatpush1.msra.mxu0 %v1315
        %v1317 = vand.u32 %v448, 4294901760
        %v1318 = vsub.f32 %v448, %v1317
        %1319 = vmatprep.subr.mxu0 %v1318
        %v1320 = vand.u32 %v447, 4294901760
        %v1321 = vsub.f32 %v447, %v1320
        %1322 = vmatpush1.msra.mxu0 %v1321
        %v1323 = vand.u32 %v451, 4294901760
        %v1324 = vsub.f32 %v451, %v1323
        %1325 = vmatprep.subr.mxu0 %v1324
        %v1326 = vand.u32 %v450, 4294901760
        %v1327 = vsub.f32 %v450, %v1326
        %1328 = vmatpush1.msra.mxu0 %v1327
        %v1329 = vand.u32 %v454, 4294901760
        %v1330 = vsub.f32 %v454, %v1329
        %1331 = vmatprep.subr.mxu0 %v1330
        %v1332 = vand.u32 %v453, 4294901760
        %v1333 = vsub.f32 %v453, %v1332
        %1334 = vmatpush1.msra.mxu0 %v1333
        %v1335 = vand.u32 %v457, 4294901760
        %v1336 = vsub.f32 %v457, %v1335
        %1337 = vmatprep.subr.mxu0 %v1336
        %v1338 = vand.u32 %v456, 4294901760
        %v1339 = vsub.f32 %v456, %v1338
        %1340 = vmatpush1.msra.mxu0 %v1339
        %v1341 = vand.u32 %v460, 4294901760
        %v1342 = vsub.f32 %v460, %v1341
        %1343 = vmatprep.subr.mxu0 %v1342
        %v1344 = vand.u32 %v459, 4294901760
        %v1345 = vsub.f32 %v459, %v1344
        %1346 = vmatpush1.msra.mxu0 %v1345
        %v1347 = vand.u32 %v463, 4294901760
        %v1348 = vsub.f32 %v463, %v1347
        %1349 = vmatprep.subr.mxu0 %v1348
        %v1350 = vand.u32 %v462, 4294901760
        %v1351 = vsub.f32 %v462, %v1350
        %1352 = vmatpush1.msra.mxu0 %v1351
        %v1353 = vand.u32 %v466, 4294901760
        %v1354 = vsub.f32 %v466, %v1353
        %1355 = vmatprep.subr.mxu0 %v1354
        %v1356 = vand.u32 %v465, 4294901760
        %v1357 = vsub.f32 %v465, %v1356
        %1358 = vmatpush1.msra.mxu0 %v1357
        %v1359 = vand.u32 %v361, 4294901760
        %v1360 = vsub.f32 %v361, %v1359
        %1361 = vmatprep.mubr.f32.mxu0 %v1360
        %v1362 = vand.u32 %v360, 4294901760
        %v1363 = vsub.f32 %v360, %v1362
        %1364 = vmatmul.mubr.f32.gmra.mrb[0].mxu0 %v1363
        %v1365 = vpop.f32.mrb[0].mxu0
        %v1366 = vadd.f32 %v1147, %v1365
        %v1367 = vpop.f32.mrb[0].mxu0
        %v1368 = vadd.f32 %v1149, %v1367
        %v1369 = vand.u32 %v365, 4294901760
        %v1370 = vsub.f32 %v365, %v1369
        %1371 = vmatprep.mubr.f32.mxu0 %v1370
        %v1372 = vand.u32 %v364, 4294901760
        %v1373 = vsub.f32 %v364, %v1372
        %1374 = vmatmul.mubr.f32.gmra.mrb[0].mxu0 %v1373
        %v1375 = vpop.f32.mrb[0].mxu0
        %v1376 = vadd.f32 %v1155, %v1375
        %v1377 = vpop.f32.mrb[0].mxu0
        %v1378 = vadd.f32 %v1157, %v1377
        %v1379 = vand.u32 %v369, 4294901760
        %v1380 = vsub.f32 %v369, %v1379
        %1381 = vmatprep.mubr.f32.mxu0 %v1380
        %v1382 = vand.u32 %v368, 4294901760
        %v1383 = vsub.f32 %v368, %v1382
        %1384 = vmatmul.mubr.f32.gmra.mrb[0].mxu0 %v1383
        %v1385 = vpop.f32.mrb[0].mxu0
        %v1386 = vadd.f32 %v1163, %v1385
        %v1387 = vpop.f32.mrb[0].mxu0
        %v1388 = vadd.f32 %v1165, %v1387
        %1389 = vdwg.mxu0
        %v1390 = vand.u32 %v373, 4294901760
        %1391 = vmatprep.subr.mxu0 %v1390
        %v1392 = vand.u32 %v372, 4294901760
        %1393 = vmatpush1.msra.mxu0 %v1392
        %v1394 = vand.u32 %v376, 4294901760
        %1395 = vmatprep.subr.mxu0 %v1394
        %v1396 = vand.u32 %v375, 4294901760
        %1397 = vmatpush1.msra.mxu0 %v1396
        %v1398 = vand.u32 %v379, 4294901760
        %1399 = vmatprep.subr.mxu0 %v1398
        %v1400 = vand.u32 %v378, 4294901760
        %1401 = vmatpush1.msra.mxu0 %v1400
        %v1402 = vand.u32 %v382, 4294901760
        %1403 = vmatprep.subr.mxu0 %v1402
        %v1404 = vand.u32 %v381, 4294901760
        %1405 = vmatpush1.msra.mxu0 %v1404
        %v1406 = vand.u32 %v385, 4294901760
        %1407 = vmatprep.subr.mxu0 %v1406
        %v1408 = vand.u32 %v384, 4294901760
        %1409 = vmatpush1.msra.mxu0 %v1408
        %v1410 = vand.u32 %v388, 4294901760
        %1411 = vmatprep.subr.mxu0 %v1410
        %v1412 = vand.u32 %v387, 4294901760
        %1413 = vmatpush1.msra.mxu0 %v1412
        %v1414 = vand.u32 %v391, 4294901760
        %1415 = vmatprep.subr.mxu0 %v1414
        %v1416 = vand.u32 %v390, 4294901760
        %1417 = vmatpush1.msra.mxu0 %v1416
        %v1418 = vand.u32 %v394, 4294901760
        %1419 = vmatprep.subr.mxu0 %v1418
        %v1420 = vand.u32 %v393, 4294901760
        %1421 = vmatpush1.msra.mxu0 %v1420
        %v1422 = vand.u32 %v397, 4294901760
        %1423 = vmatprep.subr.mxu0 %v1422
        %v1424 = vand.u32 %v396, 4294901760
        %1425 = vmatpush1.msra.mxu0 %v1424
        %v1426 = vand.u32 %v400, 4294901760
        %1427 = vmatprep.subr.mxu0 %v1426
        %v1428 = vand.u32 %v399, 4294901760
        %1429 = vmatpush1.msra.mxu0 %v1428
        %v1430 = vand.u32 %v403, 4294901760
        %1431 = vmatprep.subr.mxu0 %v1430
        %v1432 = vand.u32 %v402, 4294901760
        %1433 = vmatpush1.msra.mxu0 %v1432
        %v1434 = vand.u32 %v406, 4294901760
        %1435 = vmatprep.subr.mxu0 %v1434
        %v1436 = vand.u32 %v405, 4294901760
        %1437 = vmatpush1.msra.mxu0 %v1436
        %v1438 = vand.u32 %v409, 4294901760
        %1439 = vmatprep.subr.mxu0 %v1438
        %v1440 = vand.u32 %v408, 4294901760
        %1441 = vmatpush1.msra.mxu0 %v1440
        %v1442 = vand.u32 %v412, 4294901760
        %1443 = vmatprep.subr.mxu0 %v1442
        %v1444 = vand.u32 %v411, 4294901760
        %1445 = vmatpush1.msra.mxu0 %v1444
        %v1446 = vand.u32 %v415, 4294901760
        %1447 = vmatprep.subr.mxu0 %v1446
        %v1448 = vand.u32 %v414, 4294901760
        %1449 = vmatpush1.msra.mxu0 %v1448
        %v1450 = vand.u32 %v418, 4294901760
        %1451 = vmatprep.subr.mxu0 %v1450
        %v1452 = vand.u32 %v417, 4294901760
        %1453 = vmatpush1.msra.mxu0 %v1452
        %v1454 = vand.u32 %v421, 4294901760
        %1455 = vmatprep.subr.mxu0 %v1454
        %v1456 = vand.u32 %v420, 4294901760
        %1457 = vmatpush1.msra.mxu0 %v1456
        %v1458 = vand.u32 %v424, 4294901760
        %1459 = vmatprep.subr.mxu0 %v1458
        %v1460 = vand.u32 %v423, 4294901760
        %1461 = vmatpush1.msra.mxu0 %v1460
        %v1462 = vand.u32 %v427, 4294901760
        %1463 = vmatprep.subr.mxu0 %v1462
        %v1464 = vand.u32 %v426, 4294901760
        %1465 = vmatpush1.msra.mxu0 %v1464
        %v1466 = vand.u32 %v430, 4294901760
        %1467 = vmatprep.subr.mxu0 %v1466
        %v1468 = vand.u32 %v429, 4294901760
        %1469 = vmatpush1.msra.mxu0 %v1468
        %v1470 = vand.u32 %v433, 4294901760
        %1471 = vmatprep.subr.mxu0 %v1470
        %v1472 = vand.u32 %v432, 4294901760
        %1473 = vmatpush1.msra.mxu0 %v1472
        %v1474 = vand.u32 %v436, 4294901760
        %1475 = vmatprep.subr.mxu0 %v1474
        %v1476 = vand.u32 %v435, 4294901760
        %1477 = vmatpush1.msra.mxu0 %v1476
        %v1478 = vand.u32 %v439, 4294901760
        %1479 = vmatprep.subr.mxu0 %v1478
        %v1480 = vand.u32 %v438, 4294901760
        %1481 = vmatpush1.msra.mxu0 %v1480
        %v1482 = vand.u32 %v442, 4294901760
        %1483 = vmatprep.subr.mxu0 %v1482
        %v1484 = vand.u32 %v441, 4294901760
        %1485 = vmatpush1.msra.mxu0 %v1484
        %v1486 = vand.u32 %v445, 4294901760
        %1487 = vmatprep.subr.mxu0 %v1486
        %v1488 = vand.u32 %v444, 4294901760
        %1489 = vmatpush1.msra.mxu0 %v1488
        %v1490 = vand.u32 %v448, 4294901760
        %1491 = vmatprep.subr.mxu0 %v1490
        %v1492 = vand.u32 %v447, 4294901760
        %1493 = vmatpush1.msra.mxu0 %v1492
        %v1494 = vand.u32 %v451, 4294901760
        %1495 = vmatprep.subr.mxu0 %v1494
        %v1496 = vand.u32 %v450, 4294901760
        %1497 = vmatpush1.msra.mxu0 %v1496
        %v1498 = vand.u32 %v454, 4294901760
        %1499 = vmatprep.subr.mxu0 %v1498
        %v1500 = vand.u32 %v453, 4294901760
        %1501 = vmatpush1.msra.mxu0 %v1500
        %v1502 = vand.u32 %v457, 4294901760
        %1503 = vmatprep.subr.mxu0 %v1502
        %v1504 = vand.u32 %v456, 4294901760
        %1505 = vmatpush1.msra.mxu0 %v1504
        %v1506 = vand.u32 %v460, 4294901760
        %1507 = vmatprep.subr.mxu0 %v1506
        %v1508 = vand.u32 %v459, 4294901760
        %1509 = vmatpush1.msra.mxu0 %v1508
        %v1510 = vand.u32 %v463, 4294901760
        %1511 = vmatprep.subr.mxu0 %v1510
        %v1512 = vand.u32 %v462, 4294901760
        %1513 = vmatpush1.msra.mxu0 %v1512
        %v1514 = vand.u32 %v466, 4294901760
        %1515 = vmatprep.subr.mxu0 %v1514
        %v1516 = vand.u32 %v465, 4294901760
        %1517 = vmatpush1.msra.mxu0 %v1516
        %v1518 = vand.u32 %v361, 4294901760
        %v1519 = vsub.f32 %v361, %v1518
        %v1520 = vand.u32 %v1519, 4294901760
        %1521 = vmatprep.mubr.f32.mxu0 %v1520
        %v1522 = vand.u32 %v360, 4294901760
        %v1523 = vsub.f32 %v360, %v1522
        %v1524 = vand.u32 %v1523, 4294901760
        %1525 = vmatmul.mubr.f32.gmra.mrb[0].mxu0 %v1524
        %v1526 = vpop.f32.mrb[0].mxu0
        %v1527 = vadd.f32 %v1366, %v1526
        %v1528 = vpop.f32.mrb[0].mxu0
        %v1529 = vadd.f32 %v1368, %v1528
        %v1530 = vand.u32 %v365, 4294901760
        %v1531 = vsub.f32 %v365, %v1530
        %v1532 = vand.u32 %v1531, 4294901760
        %1533 = vmatprep.mubr.f32.mxu0 %v1532
        %v1534 = vand.u32 %v364, 4294901760
        %v1535 = vsub.f32 %v364, %v1534
        %v1536 = vand.u32 %v1535, 4294901760
        %1537 = vmatmul.mubr.f32.gmra.mrb[0].mxu0 %v1536
        %v1538 = vpop.f32.mrb[0].mxu0
        %v1539 = vadd.f32 %v1376, %v1538
        %v1540 = vpop.f32.mrb[0].mxu0
        %v1541 = vadd.f32 %v1378, %v1540
        %v1542 = vand.u32 %v369, 4294901760
        %v1543 = vsub.f32 %v369, %v1542
        %v1544 = vand.u32 %v1543, 4294901760
        %1545 = vmatprep.mubr.f32.mxu0 %v1544
        %v1546 = vand.u32 %v368, 4294901760
        %v1547 = vsub.f32 %v368, %v1546
        %v1548 = vand.u32 %v1547, 4294901760
        %1549 = vmatmul.mubr.f32.gmra.mrb[0].mxu0 %v1548
        %v1550 = vpop.f32.mrb[0].mxu0
        %v1551 = vadd.f32 %v1386, %v1550
        %v1552 = vpop.f32.mrb[0].mxu0
        %v1553 = vadd.f32 %v1388, %v1552
        %1554 = vdwg.mxu0
        %v1555 = vand.u32 %v373, 4294901760
        %v1556 = vsub.f32 %v373, %v1555
        %v1557 = vand.u32 %v1556, 4294901760
        %1558 = vmatprep.subr.mxu0 %v1557
        %v1559 = vand.u32 %v372, 4294901760
        %v1560 = vsub.f32 %v372, %v1559
        %v1561 = vand.u32 %v1560, 4294901760
        %1562 = vmatpush1.msra.mxu0 %v1561
        %v1563 = vand.u32 %v376, 4294901760
        %v1564 = vsub.f32 %v376, %v1563
        %v1565 = vand.u32 %v1564, 4294901760
        %1566 = vmatprep.subr.mxu0 %v1565
        %v1567 = vand.u32 %v375, 4294901760
        %v1568 = vsub.f32 %v375, %v1567
        %v1569 = vand.u32 %v1568, 4294901760
        %1570 = vmatpush1.msra.mxu0 %v1569
        %v1571 = vand.u32 %v379, 4294901760
        %v1572 = vsub.f32 %v379, %v1571
        %v1573 = vand.u32 %v1572, 4294901760
        %1574 = vmatprep.subr.mxu0 %v1573
        %v1575 = vand.u32 %v378, 4294901760
        %v1576 = vsub.f32 %v378, %v1575
        %v1577 = vand.u32 %v1576, 4294901760
        %1578 = vmatpush1.msra.mxu0 %v1577
        %v1579 = vand.u32 %v382, 4294901760
        %v1580 = vsub.f32 %v382, %v1579
        %v1581 = vand.u32 %v1580, 4294901760
        %1582 = vmatprep.subr.mxu0 %v1581
        %v1583 = vand.u32 %v381, 4294901760
        %v1584 = vsub.f32 %v381, %v1583
        %v1585 = vand.u32 %v1584, 4294901760
        %1586 = vmatpush1.msra.mxu0 %v1585
        %v1587 = vand.u32 %v385, 4294901760
        %v1588 = vsub.f32 %v385, %v1587
        %v1589 = vand.u32 %v1588, 4294901760
        %1590 = vmatprep.subr.mxu0 %v1589
        %v1591 = vand.u32 %v384, 4294901760
        %v1592 = vsub.f32 %v384, %v1591
        %v1593 = vand.u32 %v1592, 4294901760
        %1594 = vmatpush1.msra.mxu0 %v1593
        %v1595 = vand.u32 %v388, 4294901760
        %v1596 = vsub.f32 %v388, %v1595
        %v1597 = vand.u32 %v1596, 4294901760
        %1598 = vmatprep.subr.mxu0 %v1597
        %v1599 = vand.u32 %v387, 4294901760
        %v1600 = vsub.f32 %v387, %v1599
        %v1601 = vand.u32 %v1600, 4294901760
        %1602 = vmatpush1.msra.mxu0 %v1601
        %v1603 = vand.u32 %v391, 4294901760
        %v1604 = vsub.f32 %v391, %v1603
        %v1605 = vand.u32 %v1604, 4294901760
        %1606 = vmatprep.subr.mxu0 %v1605
        %v1607 = vand.u32 %v390, 4294901760
        %v1608 = vsub.f32 %v390, %v1607
        %v1609 = vand.u32 %v1608, 4294901760
        %1610 = vmatpush1.msra.mxu0 %v1609
        %v1611 = vand.u32 %v394, 4294901760
        %v1612 = vsub.f32 %v394, %v1611
        %v1613 = vand.u32 %v1612, 4294901760
        %1614 = vmatprep.subr.mxu0 %v1613
        %v1615 = vand.u32 %v393, 4294901760
        %v1616 = vsub.f32 %v393, %v1615
        %v1617 = vand.u32 %v1616, 4294901760
        %1618 = vmatpush1.msra.mxu0 %v1617
        %v1619 = vand.u32 %v397, 4294901760
        %v1620 = vsub.f32 %v397, %v1619
        %v1621 = vand.u32 %v1620, 4294901760
        %1622 = vmatprep.subr.mxu0 %v1621
        %v1623 = vand.u32 %v396, 4294901760
        %v1624 = vsub.f32 %v396, %v1623
        %v1625 = vand.u32 %v1624, 4294901760
        %1626 = vmatpush1.msra.mxu0 %v1625
        %v1627 = vand.u32 %v400, 4294901760
        %v1628 = vsub.f32 %v400, %v1627
        %v1629 = vand.u32 %v1628, 4294901760
        %1630 = vmatprep.subr.mxu0 %v1629
        %v1631 = vand.u32 %v399, 4294901760
        %v1632 = vsub.f32 %v399, %v1631
        %v1633 = vand.u32 %v1632, 4294901760
        %1634 = vmatpush1.msra.mxu0 %v1633
        %v1635 = vand.u32 %v403, 4294901760
        %v1636 = vsub.f32 %v403, %v1635
        %v1637 = vand.u32 %v1636, 4294901760
        %1638 = vmatprep.subr.mxu0 %v1637
        %v1639 = vand.u32 %v402, 4294901760
        %v1640 = vsub.f32 %v402, %v1639
        %v1641 = vand.u32 %v1640, 4294901760
        %1642 = vmatpush1.msra.mxu0 %v1641
        %v1643 = vand.u32 %v406, 4294901760
        %v1644 = vsub.f32 %v406, %v1643
        %v1645 = vand.u32 %v1644, 4294901760
        %1646 = vmatprep.subr.mxu0 %v1645
        %v1647 = vand.u32 %v405, 4294901760
        %v1648 = vsub.f32 %v405, %v1647
        %v1649 = vand.u32 %v1648, 4294901760
        %1650 = vmatpush1.msra.mxu0 %v1649
        %v1651 = vand.u32 %v409, 4294901760
        %v1652 = vsub.f32 %v409, %v1651
        %v1653 = vand.u32 %v1652, 4294901760
        %1654 = vmatprep.subr.mxu0 %v1653
        %v1655 = vand.u32 %v408, 4294901760
        %v1656 = vsub.f32 %v408, %v1655
        %v1657 = vand.u32 %v1656, 4294901760
        %1658 = vmatpush1.msra.mxu0 %v1657
        %v1659 = vand.u32 %v412, 4294901760
        %v1660 = vsub.f32 %v412, %v1659
        %v1661 = vand.u32 %v1660, 4294901760
        %1662 = vmatprep.subr.mxu0 %v1661
        %v1663 = vand.u32 %v411, 4294901760
        %v1664 = vsub.f32 %v411, %v1663
        %v1665 = vand.u32 %v1664, 4294901760
        %1666 = vmatpush1.msra.mxu0 %v1665
        %v1667 = vand.u32 %v415, 4294901760
        %v1668 = vsub.f32 %v415, %v1667
        %v1669 = vand.u32 %v1668, 4294901760
        %1670 = vmatprep.subr.mxu0 %v1669
        %v1671 = vand.u32 %v414, 4294901760
        %v1672 = vsub.f32 %v414, %v1671
        %v1673 = vand.u32 %v1672, 4294901760
        %1674 = vmatpush1.msra.mxu0 %v1673
        %v1675 = vand.u32 %v418, 4294901760
        %v1676 = vsub.f32 %v418, %v1675
        %v1677 = vand.u32 %v1676, 4294901760
        %1678 = vmatprep.subr.mxu0 %v1677
        %v1679 = vand.u32 %v417, 4294901760
        %v1680 = vsub.f32 %v417, %v1679
        %v1681 = vand.u32 %v1680, 4294901760
        %1682 = vmatpush1.msra.mxu0 %v1681
        %v1683 = vand.u32 %v421, 4294901760
        %v1684 = vsub.f32 %v421, %v1683
        %v1685 = vand.u32 %v1684, 4294901760
        %1686 = vmatprep.subr.mxu0 %v1685
        %v1687 = vand.u32 %v420, 4294901760
        %v1688 = vsub.f32 %v420, %v1687
        %v1689 = vand.u32 %v1688, 4294901760
        %1690 = vmatpush1.msra.mxu0 %v1689
        %v1691 = vand.u32 %v424, 4294901760
        %v1692 = vsub.f32 %v424, %v1691
        %v1693 = vand.u32 %v1692, 4294901760
        %1694 = vmatprep.subr.mxu0 %v1693
        %v1695 = vand.u32 %v423, 4294901760
        %v1696 = vsub.f32 %v423, %v1695
        %v1697 = vand.u32 %v1696, 4294901760
        %1698 = vmatpush1.msra.mxu0 %v1697
        %v1699 = vand.u32 %v427, 4294901760
        %v1700 = vsub.f32 %v427, %v1699
        %v1701 = vand.u32 %v1700, 4294901760
        %1702 = vmatprep.subr.mxu0 %v1701
        %v1703 = vand.u32 %v426, 4294901760
        %v1704 = vsub.f32 %v426, %v1703
        %v1705 = vand.u32 %v1704, 4294901760
        %1706 = vmatpush1.msra.mxu0 %v1705
        %v1707 = vand.u32 %v430, 4294901760
        %v1708 = vsub.f32 %v430, %v1707
        %v1709 = vand.u32 %v1708, 4294901760
        %1710 = vmatprep.subr.mxu0 %v1709
        %v1711 = vand.u32 %v429, 4294901760
        %v1712 = vsub.f32 %v429, %v1711
        %v1713 = vand.u32 %v1712, 4294901760
        %1714 = vmatpush1.msra.mxu0 %v1713
        %v1715 = vand.u32 %v433, 4294901760
        %v1716 = vsub.f32 %v433, %v1715
        %v1717 = vand.u32 %v1716, 4294901760
        %1718 = vmatprep.subr.mxu0 %v1717
        %v1719 = vand.u32 %v432, 4294901760
        %v1720 = vsub.f32 %v432, %v1719
        %v1721 = vand.u32 %v1720, 4294901760
        %1722 = vmatpush1.msra.mxu0 %v1721
        %v1723 = vand.u32 %v436, 4294901760
        %v1724 = vsub.f32 %v436, %v1723
        %v1725 = vand.u32 %v1724, 4294901760
        %1726 = vmatprep.subr.mxu0 %v1725
        %v1727 = vand.u32 %v435, 4294901760
        %v1728 = vsub.f32 %v435, %v1727
        %v1729 = vand.u32 %v1728, 4294901760
        %1730 = vmatpush1.msra.mxu0 %v1729
        %v1731 = vand.u32 %v439, 4294901760
        %v1732 = vsub.f32 %v439, %v1731
        %v1733 = vand.u32 %v1732, 4294901760
        %1734 = vmatprep.subr.mxu0 %v1733
        %v1735 = vand.u32 %v438, 4294901760
        %v1736 = vsub.f32 %v438, %v1735
        %v1737 = vand.u32 %v1736, 4294901760
        %1738 = vmatpush1.msra.mxu0 %v1737
        %v1739 = vand.u32 %v442, 4294901760
        %v1740 = vsub.f32 %v442, %v1739
        %v1741 = vand.u32 %v1740, 4294901760
        %1742 = vmatprep.subr.mxu0 %v1741
        %v1743 = vand.u32 %v441, 4294901760
        %v1744 = vsub.f32 %v441, %v1743
        %v1745 = vand.u32 %v1744, 4294901760
        %1746 = vmatpush1.msra.mxu0 %v1745
        %v1747 = vand.u32 %v445, 4294901760
        %v1748 = vsub.f32 %v445, %v1747
        %v1749 = vand.u32 %v1748, 4294901760
        %1750 = vmatprep.subr.mxu0 %v1749
        %v1751 = vand.u32 %v444, 4294901760
        %v1752 = vsub.f32 %v444, %v1751
        %v1753 = vand.u32 %v1752, 4294901760
        %1754 = vmatpush1.msra.mxu0 %v1753
        %v1755 = vand.u32 %v448, 4294901760
        %v1756 = vsub.f32 %v448, %v1755
        %v1757 = vand.u32 %v1756, 4294901760
        %1758 = vmatprep.subr.mxu0 %v1757
        %v1759 = vand.u32 %v447, 4294901760
        %v1760 = vsub.f32 %v447, %v1759
        %v1761 = vand.u32 %v1760, 4294901760
        %1762 = vmatpush1.msra.mxu0 %v1761
        %v1763 = vand.u32 %v451, 4294901760
        %v1764 = vsub.f32 %v451, %v1763
        %v1765 = vand.u32 %v1764, 4294901760
        %1766 = vmatprep.subr.mxu0 %v1765
        %v1767 = vand.u32 %v450, 4294901760
        %v1768 = vsub.f32 %v450, %v1767
        %v1769 = vand.u32 %v1768, 4294901760
        %1770 = vmatpush1.msra.mxu0 %v1769
        %v1771 = vand.u32 %v454, 4294901760
        %v1772 = vsub.f32 %v454, %v1771
        %v1773 = vand.u32 %v1772, 4294901760
        %1774 = vmatprep.subr.mxu0 %v1773
        %v1775 = vand.u32 %v453, 4294901760
        %v1776 = vsub.f32 %v453, %v1775
        %v1777 = vand.u32 %v1776, 4294901760
        %1778 = vmatpush1.msra.mxu0 %v1777
        %v1779 = vand.u32 %v457, 4294901760
        %v1780 = vsub.f32 %v457, %v1779
        %v1781 = vand.u32 %v1780, 4294901760
        %1782 = vmatprep.subr.mxu0 %v1781
        %v1783 = vand.u32 %v456, 4294901760
        %v1784 = vsub.f32 %v456, %v1783
        %v1785 = vand.u32 %v1784, 4294901760
        %1786 = vmatpush1.msra.mxu0 %v1785
        %v1787 = vand.u32 %v460, 4294901760
        %v1788 = vsub.f32 %v460, %v1787
        %v1789 = vand.u32 %v1788, 4294901760
        %1790 = vmatprep.subr.mxu0 %v1789
        %v1791 = vand.u32 %v459, 4294901760
        %v1792 = vsub.f32 %v459, %v1791
        %v1793 = vand.u32 %v1792, 4294901760
        %1794 = vmatpush1.msra.mxu0 %v1793
        %v1795 = vand.u32 %v463, 4294901760
        %v1796 = vsub.f32 %v463, %v1795
        %v1797 = vand.u32 %v1796, 4294901760
        %1798 = vmatprep.subr.mxu0 %v1797
        %v1799 = vand.u32 %v462, 4294901760
        %v1800 = vsub.f32 %v462, %v1799
        %v1801 = vand.u32 %v1800, 4294901760
        %1802 = vmatpush1.msra.mxu0 %v1801
        %v1803 = vand.u32 %v466, 4294901760
        %v1804 = vsub.f32 %v466, %v1803
        %v1805 = vand.u32 %v1804, 4294901760
        %1806 = vmatprep.subr.mxu0 %v1805
        %v1807 = vand.u32 %v465, 4294901760
        %v1808 = vsub.f32 %v465, %v1807
        %v1809 = vand.u32 %v1808, 4294901760
        %1810 = vmatpush1.msra.mxu0 %v1809
        %v1811 = vand.u32 %v361, 4294901760
        %1812 = vmatprep.mubr.f32.mxu0 %v1811
        %v1813 = vand.u32 %v360, 4294901760
        %1814 = vmatmul.mubr.f32.gmra.mrb[0].mxu0 %v1813
        %v1815 = vpop.f32.mrb[0].mxu0
        %v1816 = vadd.f32 %v1527, %v1815
        %v1817 = vpop.f32.mrb[0].mxu0
        %v1818 = vadd.f32 %v1529, %v1817
        %v1819 = vand.u32 %v365, 4294901760
        %1820 = vmatprep.mubr.f32.mxu0 %v1819
        %v1821 = vand.u32 %v364, 4294901760
        %1822 = vmatmul.mubr.f32.gmra.mrb[0].mxu0 %v1821
        %v1823 = vpop.f32.mrb[0].mxu0
        %v1824 = vadd.f32 %v1539, %v1823
        %v1825 = vpop.f32.mrb[0].mxu0
        %v1826 = vadd.f32 %v1541, %v1825
        %v1827 = vand.u32 %v369, 4294901760
        %1828 = vmatprep.mubr.f32.mxu0 %v1827
        %v1829 = vand.u32 %v368, 4294901760
        %1830 = vmatmul.mubr.f32.gmra.mrb[0].mxu0 %v1829
        %v1831 = vpop.f32.mrb[0].mxu0
        %v1832 = vadd.f32 %v1551, %v1831
        %v1833 = vpop.f32.mrb[0].mxu0
        %v1834 = vadd.f32 %v1553, %v1833
        %1835 = vdwg.mxu0
        %v1836 = vand.u32 %v373, 4294901760
        %1837 = vmatprep.subr.mxu0 %v1836
        %v1838 = vand.u32 %v372, 4294901760
        %1839 = vmatpush1.msra.mxu0 %v1838
        %v1840 = vand.u32 %v376, 4294901760
        %1841 = vmatprep.subr.mxu0 %v1840
        %v1842 = vand.u32 %v375, 4294901760
        %1843 = vmatpush1.msra.mxu0 %v1842
        %v1844 = vand.u32 %v379, 4294901760
        %1845 = vmatprep.subr.mxu0 %v1844
        %v1846 = vand.u32 %v378, 4294901760
        %1847 = vmatpush1.msra.mxu0 %v1846
        %v1848 = vand.u32 %v382, 4294901760
        %1849 = vmatprep.subr.mxu0 %v1848
        %v1850 = vand.u32 %v381, 4294901760
        %1851 = vmatpush1.msra.mxu0 %v1850
        %v1852 = vand.u32 %v385, 4294901760
        %1853 = vmatprep.subr.mxu0 %v1852
        %v1854 = vand.u32 %v384, 4294901760
        %1855 = vmatpush1.msra.mxu0 %v1854
        %v1856 = vand.u32 %v388, 4294901760
        %1857 = vmatprep.subr.mxu0 %v1856
        %v1858 = vand.u32 %v387, 4294901760
        %1859 = vmatpush1.msra.mxu0 %v1858
        %v1860 = vand.u32 %v391, 4294901760
        %1861 = vmatprep.subr.mxu0 %v1860
        %v1862 = vand.u32 %v390, 4294901760
        %1863 = vmatpush1.msra.mxu0 %v1862
        %v1864 = vand.u32 %v394, 4294901760
        %1865 = vmatprep.subr.mxu0 %v1864
        %v1866 = vand.u32 %v393, 4294901760
        %1867 = vmatpush1.msra.mxu0 %v1866
        %v1868 = vand.u32 %v397, 4294901760
        %1869 = vmatprep.subr.mxu0 %v1868
        %v1870 = vand.u32 %v396, 4294901760
        %1871 = vmatpush1.msra.mxu0 %v1870
        %v1872 = vand.u32 %v400, 4294901760
        %1873 = vmatprep.subr.mxu0 %v1872
        %v1874 = vand.u32 %v399, 4294901760
        %1875 = vmatpush1.msra.mxu0 %v1874
        %v1876 = vand.u32 %v403, 4294901760
        %1877 = vmatprep.subr.mxu0 %v1876
        %v1878 = vand.u32 %v402, 4294901760
        %1879 = vmatpush1.msra.mxu0 %v1878
        %v1880 = vand.u32 %v406, 4294901760
        %1881 = vmatprep.subr.mxu0 %v1880
        %v1882 = vand.u32 %v405, 4294901760
        %1883 = vmatpush1.msra.mxu0 %v1882
        %v1884 = vand.u32 %v409, 4294901760
        %1885 = vmatprep.subr.mxu0 %v1884
        %v1886 = vand.u32 %v408, 4294901760
        %1887 = vmatpush1.msra.mxu0 %v1886
        %v1888 = vand.u32 %v412, 4294901760
        %1889 = vmatprep.subr.mxu0 %v1888
        %v1890 = vand.u32 %v411, 4294901760
        %1891 = vmatpush1.msra.mxu0 %v1890
        %v1892 = vand.u32 %v415, 4294901760
        %1893 = vmatprep.subr.mxu0 %v1892
        %v1894 = vand.u32 %v414, 4294901760
        %1895 = vmatpush1.msra.mxu0 %v1894
        %v1896 = vand.u32 %v418, 4294901760
        %1897 = vmatprep.subr.mxu0 %v1896
        %v1898 = vand.u32 %v417, 4294901760
        %1899 = vmatpush1.msra.mxu0 %v1898
        %v1900 = vand.u32 %v421, 4294901760
        %1901 = vmatprep.subr.mxu0 %v1900
        %v1902 = vand.u32 %v420, 4294901760
        %1903 = vmatpush1.msra.mxu0 %v1902
        %v1904 = vand.u32 %v424, 4294901760
        %1905 = vmatprep.subr.mxu0 %v1904
        %v1906 = vand.u32 %v423, 4294901760
        %1907 = vmatpush1.msra.mxu0 %v1906
        %v1908 = vand.u32 %v427, 4294901760
        %1909 = vmatprep.subr.mxu0 %v1908
        %v1910 = vand.u32 %v426, 4294901760
        %1911 = vmatpush1.msra.mxu0 %v1910
        %v1912 = vand.u32 %v430, 4294901760
        %1913 = vmatprep.subr.mxu0 %v1912
        %v1914 = vand.u32 %v429, 4294901760
        %1915 = vmatpush1.msra.mxu0 %v1914
        %v1916 = vand.u32 %v433, 4294901760
        %1917 = vmatprep.subr.mxu0 %v1916
        %v1918 = vand.u32 %v432, 4294901760
        %1919 = vmatpush1.msra.mxu0 %v1918
        %v1920 = vand.u32 %v436, 4294901760
        %1921 = vmatprep.subr.mxu0 %v1920
        %v1922 = vand.u32 %v435, 4294901760
        %1923 = vmatpush1.msra.mxu0 %v1922
        %v1924 = vand.u32 %v439, 4294901760
        %1925 = vmatprep.subr.mxu0 %v1924
        %v1926 = vand.u32 %v438, 4294901760
        %1927 = vmatpush1.msra.mxu0 %v1926
        %v1928 = vand.u32 %v442, 4294901760
        %1929 = vmatprep.subr.mxu0 %v1928
        %v1930 = vand.u32 %v441, 4294901760
        %1931 = vmatpush1.msra.mxu0 %v1930
        %v1932 = vand.u32 %v445, 4294901760
        %1933 = vmatprep.subr.mxu0 %v1932
        %v1934 = vand.u32 %v444, 4294901760
        %1935 = vmatpush1.msra.mxu0 %v1934
        %v1936 = vand.u32 %v448, 4294901760
        %1937 = vmatprep.subr.mxu0 %v1936
        %v1938 = vand.u32 %v447, 4294901760
        %1939 = vmatpush1.msra.mxu0 %v1938
        %v1940 = vand.u32 %v451, 4294901760
        %1941 = vmatprep.subr.mxu0 %v1940
        %v1942 = vand.u32 %v450, 4294901760
        %1943 = vmatpush1.msra.mxu0 %v1942
        %v1944 = vand.u32 %v454, 4294901760
        %1945 = vmatprep.subr.mxu0 %v1944
        %v1946 = vand.u32 %v453, 4294901760
        %1947 = vmatpush1.msra.mxu0 %v1946
        %v1948 = vand.u32 %v457, 4294901760
        %1949 = vmatprep.subr.mxu0 %v1948
        %v1950 = vand.u32 %v456, 4294901760
        %1951 = vmatpush1.msra.mxu0 %v1950
        %v1952 = vand.u32 %v460, 4294901760
        %1953 = vmatprep.subr.mxu0 %v1952
        %v1954 = vand.u32 %v459, 4294901760
        %1955 = vmatpush1.msra.mxu0 %v1954
        %v1956 = vand.u32 %v463, 4294901760
        %1957 = vmatprep.subr.mxu0 %v1956
        %v1958 = vand.u32 %v462, 4294901760
        %1959 = vmatpush1.msra.mxu0 %v1958
        %v1960 = vand.u32 %v466, 4294901760
        %1961 = vmatprep.subr.mxu0 %v1960
        %v1962 = vand.u32 %v465, 4294901760
        %1963 = vmatpush1.msra.mxu0 %v1962
        %v1964 = vand.u32 %v361, 4294901760
        %1965 = vmatprep.mubr.f32.mxu0 %v1964
        %v1966 = vand.u32 %v360, 4294901760
        %1967 = vmatmul.mubr.f32.gmra.mrb[0].mxu0 %v1966
        %v1968 = vpop.f32.mrb[0].mxu0
        %v1969 = vadd.f32 %v1816, %v1968
        %v1970 = vpop.f32.mrb[0].mxu0
        %v1971 = vadd.f32 %v1818, %v1970
        %v1972 = vand.u32 %v365, 4294901760
        %1973 = vmatprep.mubr.f32.mxu0 %v1972
        %v1974 = vand.u32 %v364, 4294901760
        %1975 = vmatmul.mubr.f32.gmra.mrb[0].mxu0 %v1974
        %v1976 = vpop.f32.mrb[0].mxu0
        %v1977 = vadd.f32 %v1824, %v1976
        %v1978 = vpop.f32.mrb[0].mxu0
        %v1979 = vadd.f32 %v1826, %v1978
        %v1980 = vand.u32 %v369, 4294901760
        %1981 = vmatprep.mubr.f32.mxu0 %v1980
        %v1982 = vand.u32 %v368, 4294901760
        %1983 = vmatmul.mubr.f32.gmra.mrb[0].mxu0 %v1982
        %v1984 = vpop.f32.mrb[0].mxu0
        %v1985 = vadd.f32 %v1832, %v1984
        %v1986 = vpop.f32.mrb[0].mxu0
        %v1987 = vadd.f32 %v1834, %v1986
        %1988 = vdwg.mxu0
        %v1989 = vand.u32 %v469, 4294901760
        %1990 = vmatprep.subr.mxu0 %v1989
        %v1991 = vand.u32 %v468, 4294901760
        %1992 = vmatpush1.msra.mxu0 %v1991
        %v1993 = vand.u32 %v472, 4294901760
        %1994 = vmatprep.subr.mxu0 %v1993
        %v1995 = vand.u32 %v471, 4294901760
        %1996 = vmatpush1.msra.mxu0 %v1995
        %v1997 = vand.u32 %v475, 4294901760
        %1998 = vmatprep.subr.mxu0 %v1997
        %v1999 = vand.u32 %v474, 4294901760
        %2000 = vmatpush1.msra.mxu0 %v1999
        %v2001 = vand.u32 %v478, 4294901760
        %2002 = vmatprep.subr.mxu0 %v2001
        %v2003 = vand.u32 %v477, 4294901760
        %2004 = vmatpush1.msra.mxu0 %v2003
        %v2005 = vand.u32 %v481, 4294901760
        %2006 = vmatprep.subr.mxu0 %v2005
        %v2007 = vand.u32 %v480, 4294901760
        %2008 = vmatpush1.msra.mxu0 %v2007
        %v2009 = vand.u32 %v484, 4294901760
        %2010 = vmatprep.subr.mxu0 %v2009
        %v2011 = vand.u32 %v483, 4294901760
        %2012 = vmatpush1.msra.mxu0 %v2011
        %v2013 = vand.u32 %v487, 4294901760
        %2014 = vmatprep.subr.mxu0 %v2013
        %v2015 = vand.u32 %v486, 4294901760
        %2016 = vmatpush1.msra.mxu0 %v2015
        %v2017 = vand.u32 %v490, 4294901760
        %2018 = vmatprep.subr.mxu0 %v2017
        %v2019 = vand.u32 %v489, 4294901760
        %2020 = vmatpush1.msra.mxu0 %v2019
        %v2021 = vand.u32 %v493, 4294901760
        %2022 = vmatprep.subr.mxu0 %v2021
        %v2023 = vand.u32 %v492, 4294901760
        %2024 = vmatpush1.msra.mxu0 %v2023
        %v2025 = vand.u32 %v496, 4294901760
        %2026 = vmatprep.subr.mxu0 %v2025
        %v2027 = vand.u32 %v495, 4294901760
        %2028 = vmatpush1.msra.mxu0 %v2027
        %v2029 = vand.u32 %v499, 4294901760
        %2030 = vmatprep.subr.mxu0 %v2029
        %v2031 = vand.u32 %v498, 4294901760
        %2032 = vmatpush1.msra.mxu0 %v2031
        %v2033 = vand.u32 %v502, 4294901760
        %2034 = vmatprep.subr.mxu0 %v2033
        %v2035 = vand.u32 %v501, 4294901760
        %2036 = vmatpush1.msra.mxu0 %v2035
        %v2037 = vand.u32 %v505, 4294901760
        %2038 = vmatprep.subr.mxu0 %v2037
        %v2039 = vand.u32 %v504, 4294901760
        %2040 = vmatpush1.msra.mxu0 %v2039
        %v2041 = vand.u32 %v508, 4294901760
        %2042 = vmatprep.subr.mxu0 %v2041
        %v2043 = vand.u32 %v507, 4294901760
        %2044 = vmatpush1.msra.mxu0 %v2043
        %v2045 = vand.u32 %v511, 4294901760
        %2046 = vmatprep.subr.mxu0 %v2045
        %v2047 = vand.u32 %v510, 4294901760
        %2048 = vmatpush1.msra.mxu0 %v2047
        %v2049 = vand.u32 %v514, 4294901760
        %2050 = vmatprep.subr.mxu0 %v2049
        %v2051 = vand.u32 %v513, 4294901760
        %2052 = vmatpush1.msra.mxu0 %v2051
        %v2053 = vand.u32 %v517, 4294901760
        %2054 = vmatprep.subr.mxu0 %v2053
        %v2055 = vand.u32 %v516, 4294901760
        %2056 = vmatpush1.msra.mxu0 %v2055
        %v2057 = vand.u32 %v520, 4294901760
        %2058 = vmatprep.subr.mxu0 %v2057
        %v2059 = vand.u32 %v519, 4294901760
        %2060 = vmatpush1.msra.mxu0 %v2059
        %v2061 = vand.u32 %v523, 4294901760
        %2062 = vmatprep.subr.mxu0 %v2061
        %v2063 = vand.u32 %v522, 4294901760
        %2064 = vmatpush1.msra.mxu0 %v2063
        %v2065 = vand.u32 %v526, 4294901760
        %2066 = vmatprep.subr.mxu0 %v2065
        %v2067 = vand.u32 %v525, 4294901760
        %2068 = vmatpush1.msra.mxu0 %v2067
        %v2069 = vand.u32 %v529, 4294901760
        %2070 = vmatprep.subr.mxu0 %v2069
        %v2071 = vand.u32 %v528, 4294901760
        %2072 = vmatpush1.msra.mxu0 %v2071
        %v2073 = vand.u32 %v532, 4294901760
        %2074 = vmatprep.subr.mxu0 %v2073
        %v2075 = vand.u32 %v531, 4294901760
        %2076 = vmatpush1.msra.mxu0 %v2075
        %v2077 = vand.u32 %v535, 4294901760
        %2078 = vmatprep.subr.mxu0 %v2077
        %v2079 = vand.u32 %v534, 4294901760
        %2080 = vmatpush1.msra.mxu0 %v2079
        %v2081 = vand.u32 %v538, 4294901760
        %2082 = vmatprep.subr.mxu0 %v2081
        %v2083 = vand.u32 %v537, 4294901760
        %2084 = vmatpush1.msra.mxu0 %v2083
        %v2085 = vand.u32 %v541, 4294901760
        %2086 = vmatprep.subr.mxu0 %v2085
        %v2087 = vand.u32 %v540, 4294901760
        %2088 = vmatpush1.msra.mxu0 %v2087
        %v2089 = vand.u32 %v544, 4294901760
        %2090 = vmatprep.subr.mxu0 %v2089
        %v2091 = vand.u32 %v543, 4294901760
        %2092 = vmatpush1.msra.mxu0 %v2091
        %v2093 = vand.u32 %v547, 4294901760
        %2094 = vmatprep.subr.mxu0 %v2093
        %v2095 = vand.u32 %v546, 4294901760
        %2096 = vmatpush1.msra.mxu0 %v2095
        %v2097 = vand.u32 %v550, 4294901760
        %2098 = vmatprep.subr.mxu0 %v2097
        %v2099 = vand.u32 %v549, 4294901760
        %2100 = vmatpush1.msra.mxu0 %v2099
        %v2101 = vand.u32 %v553, 4294901760
        %2102 = vmatprep.subr.mxu0 %v2101
        %v2103 = vand.u32 %v552, 4294901760
        %2104 = vmatpush1.msra.mxu0 %v2103
        %v2105 = vand.u32 %v556, 4294901760
        %2106 = vmatprep.subr.mxu0 %v2105
        %v2107 = vand.u32 %v555, 4294901760
        %2108 = vmatpush1.msra.mxu0 %v2107
        %v2109 = vand.u32 %v559, 4294901760
        %2110 = vmatprep.subr.mxu0 %v2109
        %v2111 = vand.u32 %v558, 4294901760
        %2112 = vmatpush1.msra.mxu0 %v2111
        %v2113 = vand.u32 %v562, 4294901760
        %2114 = vmatprep.subr.mxu0 %v2113
        %v2115 = vand.u32 %v561, 4294901760
        %2116 = vmatpush1.msra.mxu0 %v2115
        %v2117 = vand.u32 %v363, 4294901760
        %v2118 = vsub.f32 %v363, %v2117
        %v2119 = vand.u32 %v2118, 4294901760
        %v2120 = vsub.f32 %v2118, %v2119
        %v2121 = vand.u32 %v2120, 4294901760
        %2122 = vmatprep.mubr.f32.mxu0 %v2121
        %v2123 = vand.u32 %v362, 4294901760
        %v2124 = vsub.f32 %v362, %v2123
        %v2125 = vand.u32 %v2124, 4294901760
        %v2126 = vsub.f32 %v2124, %v2125
        %v2127 = vand.u32 %v2126, 4294901760
        %2128 = vmatmul.mubr.f32.gmra.mrb[0].mxu0 %v2127
        %v2129 = vpop.f32.mrb[0].mxu0
        %v2130 = vadd.f32 %v1969, %v2129
        %v2131 = vpop.f32.mrb[0].mxu0
        %v2132 = vadd.f32 %v1971, %v2131
        %v2133 = vand.u32 %v367, 4294901760
        %v2134 = vsub.f32 %v367, %v2133
        %v2135 = vand.u32 %v2134, 4294901760
        %v2136 = vsub.f32 %v2134, %v2135
        %v2137 = vand.u32 %v2136, 4294901760
        %2138 = vmatprep.mubr.f32.mxu0 %v2137
        %v2139 = vand.u32 %v366, 4294901760
        %v2140 = vsub.f32 %v366, %v2139
        %v2141 = vand.u32 %v2140, 4294901760
        %v2142 = vsub.f32 %v2140, %v2141
        %v2143 = vand.u32 %v2142, 4294901760
        %2144 = vmatmul.mubr.f32.gmra.mrb[0].mxu0 %v2143
        %v2145 = vpop.f32.mrb[0].mxu0
        %v2146 = vadd.f32 %v1977, %v2145
        %v2147 = vpop.f32.mrb[0].mxu0
        %v2148 = vadd.f32 %v1979, %v2147
        %v2149 = vand.u32 %v371, 4294901760
        %v2150 = vsub.f32 %v371, %v2149
        %v2151 = vand.u32 %v2150, 4294901760
        %v2152 = vsub.f32 %v2150, %v2151
        %v2153 = vand.u32 %v2152, 4294901760
        %2154 = vmatprep.mubr.f32.mxu0 %v2153
        %v2155 = vand.u32 %v370, 4294901760
        %v2156 = vsub.f32 %v370, %v2155
        %v2157 = vand.u32 %v2156, 4294901760
        %v2158 = vsub.f32 %v2156, %v2157
        %v2159 = vand.u32 %v2158, 4294901760
        %2160 = vmatmul.mubr.f32.gmra.mrb[0].mxu0 %v2159
        %v2161 = vpop.f32.mrb[0].mxu0
        %v2162 = vadd.f32 %v1985, %v2161
        %v2163 = vpop.f32.mrb[0].mxu0
        %v2164 = vadd.f32 %v1987, %v2163
        %2165 = vdwg.mxu0
        %v2166 = vand.u32 %v469, 4294901760
        %v2167 = vsub.f32 %v469, %v2166
        %v2168 = vand.u32 %v2167, 4294901760
        %v2169 = vsub.f32 %v2167, %v2168
        %v2170 = vand.u32 %v2169, 4294901760
        %2171 = vmatprep.subr.mxu0 %v2170
        %v2172 = vand.u32 %v468, 4294901760
        %v2173 = vsub.f32 %v468, %v2172
        %v2174 = vand.u32 %v2173, 4294901760
        %v2175 = vsub.f32 %v2173, %v2174
        %v2176 = vand.u32 %v2175, 4294901760
        %2177 = vmatpush1.msra.mxu0 %v2176
        %v2178 = vand.u32 %v472, 4294901760
        %v2179 = vsub.f32 %v472, %v2178
        %v2180 = vand.u32 %v2179, 4294901760
        %v2181 = vsub.f32 %v2179, %v2180
        %v2182 = vand.u32 %v2181, 4294901760
        %2183 = vmatprep.subr.mxu0 %v2182
        %v2184 = vand.u32 %v471, 4294901760
        %v2185 = vsub.f32 %v471, %v2184
        %v2186 = vand.u32 %v2185, 4294901760
        %v2187 = vsub.f32 %v2185, %v2186
        %v2188 = vand.u32 %v2187, 4294901760
        %2189 = vmatpush1.msra.mxu0 %v2188
        %v2190 = vand.u32 %v475, 4294901760
        %v2191 = vsub.f32 %v475, %v2190
        %v2192 = vand.u32 %v2191, 4294901760
        %v2193 = vsub.f32 %v2191, %v2192
        %v2194 = vand.u32 %v2193, 4294901760
        %2195 = vmatprep.subr.mxu0 %v2194
        %v2196 = vand.u32 %v474, 4294901760
        %v2197 = vsub.f32 %v474, %v2196
        %v2198 = vand.u32 %v2197, 4294901760
        %v2199 = vsub.f32 %v2197, %v2198
        %v2200 = vand.u32 %v2199, 4294901760
        %2201 = vmatpush1.msra.mxu0 %v2200
        %v2202 = vand.u32 %v478, 4294901760
        %v2203 = vsub.f32 %v478, %v2202
        %v2204 = vand.u32 %v2203, 4294901760
        %v2205 = vsub.f32 %v2203, %v2204
        %v2206 = vand.u32 %v2205, 4294901760
        %2207 = vmatprep.subr.mxu0 %v2206
        %v2208 = vand.u32 %v477, 4294901760
        %v2209 = vsub.f32 %v477, %v2208
        %v2210 = vand.u32 %v2209, 4294901760
        %v2211 = vsub.f32 %v2209, %v2210
        %v2212 = vand.u32 %v2211, 4294901760
        %2213 = vmatpush1.msra.mxu0 %v2212
        %v2214 = vand.u32 %v481, 4294901760
        %v2215 = vsub.f32 %v481, %v2214
        %v2216 = vand.u32 %v2215, 4294901760
        %v2217 = vsub.f32 %v2215, %v2216
        %v2218 = vand.u32 %v2217, 4294901760
        %2219 = vmatprep.subr.mxu0 %v2218
        %v2220 = vand.u32 %v480, 4294901760
        %v2221 = vsub.f32 %v480, %v2220
        %v2222 = vand.u32 %v2221, 4294901760
        %v2223 = vsub.f32 %v2221, %v2222
        %v2224 = vand.u32 %v2223, 4294901760
        %2225 = vmatpush1.msra.mxu0 %v2224
        %v2226 = vand.u32 %v484, 4294901760
        %v2227 = vsub.f32 %v484, %v2226
        %v2228 = vand.u32 %v2227, 4294901760
        %v2229 = vsub.f32 %v2227, %v2228
        %v2230 = vand.u32 %v2229, 4294901760
        %2231 = vmatprep.subr.mxu0 %v2230
        %v2232 = vand.u32 %v483, 4294901760
        %v2233 = vsub.f32 %v483, %v2232
        %v2234 = vand.u32 %v2233, 4294901760
        %v2235 = vsub.f32 %v2233, %v2234
        %v2236 = vand.u32 %v2235, 4294901760
        %2237 = vmatpush1.msra.mxu0 %v2236
        %v2238 = vand.u32 %v487, 4294901760
        %v2239 = vsub.f32 %v487, %v2238
        %v2240 = vand.u32 %v2239, 4294901760
        %v2241 = vsub.f32 %v2239, %v2240
        %v2242 = vand.u32 %v2241, 4294901760
        %2243 = vmatprep.subr.mxu0 %v2242
        %v2244 = vand.u32 %v486, 4294901760
        %v2245 = vsub.f32 %v486, %v2244
        %v2246 = vand.u32 %v2245, 4294901760
        %v2247 = vsub.f32 %v2245, %v2246
        %v2248 = vand.u32 %v2247, 4294901760
        %2249 = vmatpush1.msra.mxu0 %v2248
        %v2250 = vand.u32 %v490, 4294901760
        %v2251 = vsub.f32 %v490, %v2250
        %v2252 = vand.u32 %v2251, 4294901760
        %v2253 = vsub.f32 %v2251, %v2252
        %v2254 = vand.u32 %v2253, 4294901760
        %2255 = vmatprep.subr.mxu0 %v2254
        %v2256 = vand.u32 %v489, 4294901760
        %v2257 = vsub.f32 %v489, %v2256
        %v2258 = vand.u32 %v2257, 4294901760
        %v2259 = vsub.f32 %v2257, %v2258
        %v2260 = vand.u32 %v2259, 4294901760
        %2261 = vmatpush1.msra.mxu0 %v2260
        %v2262 = vand.u32 %v493, 4294901760
        %v2263 = vsub.f32 %v493, %v2262
        %v2264 = vand.u32 %v2263, 4294901760
        %v2265 = vsub.f32 %v2263, %v2264
        %v2266 = vand.u32 %v2265, 4294901760
        %2267 = vmatprep.subr.mxu0 %v2266
        %v2268 = vand.u32 %v492, 4294901760
        %v2269 = vsub.f32 %v492, %v2268
        %v2270 = vand.u32 %v2269, 4294901760
        %v2271 = vsub.f32 %v2269, %v2270
        %v2272 = vand.u32 %v2271, 4294901760
        %2273 = vmatpush1.msra.mxu0 %v2272
        %v2274 = vand.u32 %v496, 4294901760
        %v2275 = vsub.f32 %v496, %v2274
        %v2276 = vand.u32 %v2275, 4294901760
        %v2277 = vsub.f32 %v2275, %v2276
        %v2278 = vand.u32 %v2277, 4294901760
        %2279 = vmatprep.subr.mxu0 %v2278
        %v2280 = vand.u32 %v495, 4294901760
        %v2281 = vsub.f32 %v495, %v2280
        %v2282 = vand.u32 %v2281, 4294901760
        %v2283 = vsub.f32 %v2281, %v2282
        %v2284 = vand.u32 %v2283, 4294901760
        %2285 = vmatpush1.msra.mxu0 %v2284
        %v2286 = vand.u32 %v499, 4294901760
        %v2287 = vsub.f32 %v499, %v2286
        %v2288 = vand.u32 %v2287, 4294901760
        %v2289 = vsub.f32 %v2287, %v2288
        %v2290 = vand.u32 %v2289, 4294901760
        %2291 = vmatprep.subr.mxu0 %v2290
        %v2292 = vand.u32 %v498, 4294901760
        %v2293 = vsub.f32 %v498, %v2292
        %v2294 = vand.u32 %v2293, 4294901760
        %v2295 = vsub.f32 %v2293, %v2294
        %v2296 = vand.u32 %v2295, 4294901760
        %2297 = vmatpush1.msra.mxu0 %v2296
        %v2298 = vand.u32 %v502, 4294901760
        %v2299 = vsub.f32 %v502, %v2298
        %v2300 = vand.u32 %v2299, 4294901760
        %v2301 = vsub.f32 %v2299, %v2300
        %v2302 = vand.u32 %v2301, 4294901760
        %2303 = vmatprep.subr.mxu0 %v2302
        %v2304 = vand.u32 %v501, 4294901760
        %v2305 = vsub.f32 %v501, %v2304
        %v2306 = vand.u32 %v2305, 4294901760
        %v2307 = vsub.f32 %v2305, %v2306
        %v2308 = vand.u32 %v2307, 4294901760
        %2309 = vmatpush1.msra.mxu0 %v2308
        %v2310 = vand.u32 %v505, 4294901760
        %v2311 = vsub.f32 %v505, %v2310
        %v2312 = vand.u32 %v2311, 4294901760
        %v2313 = vsub.f32 %v2311, %v2312
        %v2314 = vand.u32 %v2313, 4294901760
        %2315 = vmatprep.subr.mxu0 %v2314
        %v2316 = vand.u32 %v504, 4294901760
        %v2317 = vsub.f32 %v504, %v2316
        %v2318 = vand.u32 %v2317, 4294901760
        %v2319 = vsub.f32 %v2317, %v2318
        %v2320 = vand.u32 %v2319, 4294901760
        %2321 = vmatpush1.msra.mxu0 %v2320
        %v2322 = vand.u32 %v508, 4294901760
        %v2323 = vsub.f32 %v508, %v2322
        %v2324 = vand.u32 %v2323, 4294901760
        %v2325 = vsub.f32 %v2323, %v2324
        %v2326 = vand.u32 %v2325, 4294901760
        %2327 = vmatprep.subr.mxu0 %v2326
        %v2328 = vand.u32 %v507, 4294901760
        %v2329 = vsub.f32 %v507, %v2328
        %v2330 = vand.u32 %v2329, 4294901760
        %v2331 = vsub.f32 %v2329, %v2330
        %v2332 = vand.u32 %v2331, 4294901760
        %2333 = vmatpush1.msra.mxu0 %v2332
        %v2334 = vand.u32 %v511, 4294901760
        %v2335 = vsub.f32 %v511, %v2334
        %v2336 = vand.u32 %v2335, 4294901760
        %v2337 = vsub.f32 %v2335, %v2336
        %v2338 = vand.u32 %v2337, 4294901760
        %2339 = vmatprep.subr.mxu0 %v2338
        %v2340 = vand.u32 %v510, 4294901760
        %v2341 = vsub.f32 %v510, %v2340
        %v2342 = vand.u32 %v2341, 4294901760
        %v2343 = vsub.f32 %v2341, %v2342
        %v2344 = vand.u32 %v2343, 4294901760
        %2345 = vmatpush1.msra.mxu0 %v2344
        %v2346 = vand.u32 %v514, 4294901760
        %v2347 = vsub.f32 %v514, %v2346
        %v2348 = vand.u32 %v2347, 4294901760
        %v2349 = vsub.f32 %v2347, %v2348
        %v2350 = vand.u32 %v2349, 4294901760
        %2351 = vmatprep.subr.mxu0 %v2350
        %v2352 = vand.u32 %v513, 4294901760
        %v2353 = vsub.f32 %v513, %v2352
        %v2354 = vand.u32 %v2353, 4294901760
        %v2355 = vsub.f32 %v2353, %v2354
        %v2356 = vand.u32 %v2355, 4294901760
        %2357 = vmatpush1.msra.mxu0 %v2356
        %v2358 = vand.u32 %v517, 4294901760
        %v2359 = vsub.f32 %v517, %v2358
        %v2360 = vand.u32 %v2359, 4294901760
        %v2361 = vsub.f32 %v2359, %v2360
        %v2362 = vand.u32 %v2361, 4294901760
        %2363 = vmatprep.subr.mxu0 %v2362
        %v2364 = vand.u32 %v516, 4294901760
        %v2365 = vsub.f32 %v516, %v2364
        %v2366 = vand.u32 %v2365, 4294901760
        %v2367 = vsub.f32 %v2365, %v2366
        %v2368 = vand.u32 %v2367, 4294901760
        %2369 = vmatpush1.msra.mxu0 %v2368
        %v2370 = vand.u32 %v520, 4294901760
        %v2371 = vsub.f32 %v520, %v2370
        %v2372 = vand.u32 %v2371, 4294901760
        %v2373 = vsub.f32 %v2371, %v2372
        %v2374 = vand.u32 %v2373, 4294901760
        %2375 = vmatprep.subr.mxu0 %v2374
        %v2376 = vand.u32 %v519, 4294901760
        %v2377 = vsub.f32 %v519, %v2376
        %v2378 = vand.u32 %v2377, 4294901760
        %v2379 = vsub.f32 %v2377, %v2378
        %v2380 = vand.u32 %v2379, 4294901760
        %2381 = vmatpush1.msra.mxu0 %v2380
        %v2382 = vand.u32 %v523, 4294901760
        %v2383 = vsub.f32 %v523, %v2382
        %v2384 = vand.u32 %v2383, 4294901760
        %v2385 = vsub.f32 %v2383, %v2384
        %v2386 = vand.u32 %v2385, 4294901760
        %2387 = vmatprep.subr.mxu0 %v2386
        %v2388 = vand.u32 %v522, 4294901760
        %v2389 = vsub.f32 %v522, %v2388
        %v2390 = vand.u32 %v2389, 4294901760
        %v2391 = vsub.f32 %v2389, %v2390
        %v2392 = vand.u32 %v2391, 4294901760
        %2393 = vmatpush1.msra.mxu0 %v2392
        %v2394 = vand.u32 %v526, 4294901760
        %v2395 = vsub.f32 %v526, %v2394
        %v2396 = vand.u32 %v2395, 4294901760
        %v2397 = vsub.f32 %v2395, %v2396
        %v2398 = vand.u32 %v2397, 4294901760
        %2399 = vmatprep.subr.mxu0 %v2398
        %v2400 = vand.u32 %v525, 4294901760
        %v2401 = vsub.f32 %v525, %v2400
        %v2402 = vand.u32 %v2401, 4294901760
        %v2403 = vsub.f32 %v2401, %v2402
        %v2404 = vand.u32 %v2403, 4294901760
        %2405 = vmatpush1.msra.mxu0 %v2404
        %v2406 = vand.u32 %v529, 4294901760
        %v2407 = vsub.f32 %v529, %v2406
        %v2408 = vand.u32 %v2407, 4294901760
        %v2409 = vsub.f32 %v2407, %v2408
        %v2410 = vand.u32 %v2409, 4294901760
        %2411 = vmatprep.subr.mxu0 %v2410
        %v2412 = vand.u32 %v528, 4294901760
        %v2413 = vsub.f32 %v528, %v2412
        %v2414 = vand.u32 %v2413, 4294901760
        %v2415 = vsub.f32 %v2413, %v2414
        %v2416 = vand.u32 %v2415, 4294901760
        %2417 = vmatpush1.msra.mxu0 %v2416
        %v2418 = vand.u32 %v532, 4294901760
        %v2419 = vsub.f32 %v532, %v2418
        %v2420 = vand.u32 %v2419, 4294901760
        %v2421 = vsub.f32 %v2419, %v2420
        %v2422 = vand.u32 %v2421, 4294901760
        %2423 = vmatprep.subr.mxu0 %v2422
        %v2424 = vand.u32 %v531, 4294901760
        %v2425 = vsub.f32 %v531, %v2424
        %v2426 = vand.u32 %v2425, 4294901760
        %v2427 = vsub.f32 %v2425, %v2426
        %v2428 = vand.u32 %v2427, 4294901760
        %2429 = vmatpush1.msra.mxu0 %v2428
        %v2430 = vand.u32 %v535, 4294901760
        %v2431 = vsub.f32 %v535, %v2430
        %v2432 = vand.u32 %v2431, 4294901760
        %v2433 = vsub.f32 %v2431, %v2432
        %v2434 = vand.u32 %v2433, 4294901760
        %2435 = vmatprep.subr.mxu0 %v2434
        %v2436 = vand.u32 %v534, 4294901760
        %v2437 = vsub.f32 %v534, %v2436
        %v2438 = vand.u32 %v2437, 4294901760
        %v2439 = vsub.f32 %v2437, %v2438
        %v2440 = vand.u32 %v2439, 4294901760
        %2441 = vmatpush1.msra.mxu0 %v2440
        %v2442 = vand.u32 %v538, 4294901760
        %v2443 = vsub.f32 %v538, %v2442
        %v2444 = vand.u32 %v2443, 4294901760
        %v2445 = vsub.f32 %v2443, %v2444
        %v2446 = vand.u32 %v2445, 4294901760
        %2447 = vmatprep.subr.mxu0 %v2446
        %v2448 = vand.u32 %v537, 4294901760
        %v2449 = vsub.f32 %v537, %v2448
        %v2450 = vand.u32 %v2449, 4294901760
        %v2451 = vsub.f32 %v2449, %v2450
        %v2452 = vand.u32 %v2451, 4294901760
        %2453 = vmatpush1.msra.mxu0 %v2452
        %v2454 = vand.u32 %v541, 4294901760
        %v2455 = vsub.f32 %v541, %v2454
        %v2456 = vand.u32 %v2455, 4294901760
        %v2457 = vsub.f32 %v2455, %v2456
        %v2458 = vand.u32 %v2457, 4294901760
        %2459 = vmatprep.subr.mxu0 %v2458
        %v2460 = vand.u32 %v540, 4294901760
        %v2461 = vsub.f32 %v540, %v2460
        %v2462 = vand.u32 %v2461, 4294901760
        %v2463 = vsub.f32 %v2461, %v2462
        %v2464 = vand.u32 %v2463, 4294901760
        %2465 = vmatpush1.msra.mxu0 %v2464
        %v2466 = vand.u32 %v544, 4294901760
        %v2467 = vsub.f32 %v544, %v2466
        %v2468 = vand.u32 %v2467, 4294901760
        %v2469 = vsub.f32 %v2467, %v2468
        %v2470 = vand.u32 %v2469, 4294901760
        %2471 = vmatprep.subr.mxu0 %v2470
        %v2472 = vand.u32 %v543, 4294901760
        %v2473 = vsub.f32 %v543, %v2472
        %v2474 = vand.u32 %v2473, 4294901760
        %v2475 = vsub.f32 %v2473, %v2474
        %v2476 = vand.u32 %v2475, 4294901760
        %2477 = vmatpush1.msra.mxu0 %v2476
        %v2478 = vand.u32 %v547, 4294901760
        %v2479 = vsub.f32 %v547, %v2478
        %v2480 = vand.u32 %v2479, 4294901760
        %v2481 = vsub.f32 %v2479, %v2480
        %v2482 = vand.u32 %v2481, 4294901760
        %2483 = vmatprep.subr.mxu0 %v2482
        %v2484 = vand.u32 %v546, 4294901760
        %v2485 = vsub.f32 %v546, %v2484
        %v2486 = vand.u32 %v2485, 4294901760
        %v2487 = vsub.f32 %v2485, %v2486
        %v2488 = vand.u32 %v2487, 4294901760
        %2489 = vmatpush1.msra.mxu0 %v2488
        %v2490 = vand.u32 %v550, 4294901760
        %v2491 = vsub.f32 %v550, %v2490
        %v2492 = vand.u32 %v2491, 4294901760
        %v2493 = vsub.f32 %v2491, %v2492
        %v2494 = vand.u32 %v2493, 4294901760
        %2495 = vmatprep.subr.mxu0 %v2494
        %v2496 = vand.u32 %v549, 4294901760
        %v2497 = vsub.f32 %v549, %v2496
        %v2498 = vand.u32 %v2497, 4294901760
        %v2499 = vsub.f32 %v2497, %v2498
        %v2500 = vand.u32 %v2499, 4294901760
        %2501 = vmatpush1.msra.mxu0 %v2500
        %v2502 = vand.u32 %v553, 4294901760
        %v2503 = vsub.f32 %v553, %v2502
        %v2504 = vand.u32 %v2503, 4294901760
        %v2505 = vsub.f32 %v2503, %v2504
        %v2506 = vand.u32 %v2505, 4294901760
        %2507 = vmatprep.subr.mxu0 %v2506
        %v2508 = vand.u32 %v552, 4294901760
        %v2509 = vsub.f32 %v552, %v2508
        %v2510 = vand.u32 %v2509, 4294901760
        %v2511 = vsub.f32 %v2509, %v2510
        %v2512 = vand.u32 %v2511, 4294901760
        %2513 = vmatpush1.msra.mxu0 %v2512
        %v2514 = vand.u32 %v556, 4294901760
        %v2515 = vsub.f32 %v556, %v2514
        %v2516 = vand.u32 %v2515, 4294901760
        %v2517 = vsub.f32 %v2515, %v2516
        %v2518 = vand.u32 %v2517, 4294901760
        %2519 = vmatprep.subr.mxu0 %v2518
        %v2520 = vand.u32 %v555, 4294901760
        %v2521 = vsub.f32 %v555, %v2520
        %v2522 = vand.u32 %v2521, 4294901760
        %v2523 = vsub.f32 %v2521, %v2522
        %v2524 = vand.u32 %v2523, 4294901760
        %2525 = vmatpush1.msra.mxu0 %v2524
        %v2526 = vand.u32 %v559, 4294901760
        %v2527 = vsub.f32 %v559, %v2526
        %v2528 = vand.u32 %v2527, 4294901760
        %v2529 = vsub.f32 %v2527, %v2528
        %v2530 = vand.u32 %v2529, 4294901760
        %2531 = vmatprep.subr.mxu0 %v2530
        %v2532 = vand.u32 %v558, 4294901760
        %v2533 = vsub.f32 %v558, %v2532
        %v2534 = vand.u32 %v2533, 4294901760
        %v2535 = vsub.f32 %v2533, %v2534
        %v2536 = vand.u32 %v2535, 4294901760
        %2537 = vmatpush1.msra.mxu0 %v2536
        %v2538 = vand.u32 %v562, 4294901760
        %v2539 = vsub.f32 %v562, %v2538
        %v2540 = vand.u32 %v2539, 4294901760
        %v2541 = vsub.f32 %v2539, %v2540
        %v2542 = vand.u32 %v2541, 4294901760
        %2543 = vmatprep.subr.mxu0 %v2542
        %v2544 = vand.u32 %v561, 4294901760
        %v2545 = vsub.f32 %v561, %v2544
        %v2546 = vand.u32 %v2545, 4294901760
        %v2547 = vsub.f32 %v2545, %v2546
        %v2548 = vand.u32 %v2547, 4294901760
        %2549 = vmatpush1.msra.mxu0 %v2548
        %v2550 = vand.u32 %v363, 4294901760
        %2551 = vmatprep.mubr.f32.mxu0 %v2550
        %v2552 = vand.u32 %v362, 4294901760
        %2553 = vmatmul.mubr.f32.gmra.mrb[0].mxu0 %v2552
        %v2554 = vpop.f32.mrb[0].mxu0
        %v2555 = vadd.f32 %v2130, %v2554
        %v2556 = vpop.f32.mrb[0].mxu0
        %v2557 = vadd.f32 %v2132, %v2556
        %v2558 = vand.u32 %v367, 4294901760
        %2559 = vmatprep.mubr.f32.mxu0 %v2558
        %v2560 = vand.u32 %v366, 4294901760
        %2561 = vmatmul.mubr.f32.gmra.mrb[0].mxu0 %v2560
        %v2562 = vpop.f32.mrb[0].mxu0
        %v2563 = vadd.f32 %v2146, %v2562
        %v2564 = vpop.f32.mrb[0].mxu0
        %v2565 = vadd.f32 %v2148, %v2564
        %v2566 = vand.u32 %v371, 4294901760
        %2567 = vmatprep.mubr.f32.mxu0 %v2566
        %v2568 = vand.u32 %v370, 4294901760
        %2569 = vmatmul.mubr.f32.gmra.mrb[0].mxu0 %v2568
        %v2570 = vpop.f32.mrb[0].mxu0
        %v2571 = vadd.f32 %v2162, %v2570
        %v2572 = vpop.f32.mrb[0].mxu0
        %v2573 = vadd.f32 %v2164, %v2572
        %2574 = vdwg.mxu0
        %v2575 = vand.u32 %v469, 4294901760
        %v2576 = vsub.f32 %v469, %v2575
        %2577 = vmatprep.subr.mxu0 %v2576
        %v2578 = vand.u32 %v468, 4294901760
        %v2579 = vsub.f32 %v468, %v2578
        %2580 = vmatpush1.msra.mxu0 %v2579
        %v2581 = vand.u32 %v472, 4294901760
        %v2582 = vsub.f32 %v472, %v2581
        %2583 = vmatprep.subr.mxu0 %v2582
        %v2584 = vand.u32 %v471, 4294901760
        %v2585 = vsub.f32 %v471, %v2584
        %2586 = vmatpush1.msra.mxu0 %v2585
        %v2587 = vand.u32 %v475, 4294901760
        %v2588 = vsub.f32 %v475, %v2587
        %2589 = vmatprep.subr.mxu0 %v2588
        %v2590 = vand.u32 %v474, 4294901760
        %v2591 = vsub.f32 %v474, %v2590
        %2592 = vmatpush1.msra.mxu0 %v2591
        %v2593 = vand.u32 %v478, 4294901760
        %v2594 = vsub.f32 %v478, %v2593
        %2595 = vmatprep.subr.mxu0 %v2594
        %v2596 = vand.u32 %v477, 4294901760
        %v2597 = vsub.f32 %v477, %v2596
        %2598 = vmatpush1.msra.mxu0 %v2597
        %v2599 = vand.u32 %v481, 4294901760
        %v2600 = vsub.f32 %v481, %v2599
        %2601 = vmatprep.subr.mxu0 %v2600
        %v2602 = vand.u32 %v480, 4294901760
        %v2603 = vsub.f32 %v480, %v2602
        %2604 = vmatpush1.msra.mxu0 %v2603
        %v2605 = vand.u32 %v484, 4294901760
        %v2606 = vsub.f32 %v484, %v2605
        %2607 = vmatprep.subr.mxu0 %v2606
        %v2608 = vand.u32 %v483, 4294901760
        %v2609 = vsub.f32 %v483, %v2608
        %2610 = vmatpush1.msra.mxu0 %v2609
        %v2611 = vand.u32 %v487, 4294901760
        %v2612 = vsub.f32 %v487, %v2611
        %2613 = vmatprep.subr.mxu0 %v2612
        %v2614 = vand.u32 %v486, 4294901760
        %v2615 = vsub.f32 %v486, %v2614
        %2616 = vmatpush1.msra.mxu0 %v2615
        %v2617 = vand.u32 %v490, 4294901760
        %v2618 = vsub.f32 %v490, %v2617
        %2619 = vmatprep.subr.mxu0 %v2618
        %v2620 = vand.u32 %v489, 4294901760
        %v2621 = vsub.f32 %v489, %v2620
        %2622 = vmatpush1.msra.mxu0 %v2621
        %v2623 = vand.u32 %v493, 4294901760
        %v2624 = vsub.f32 %v493, %v2623
        %2625 = vmatprep.subr.mxu0 %v2624
        %v2626 = vand.u32 %v492, 4294901760
        %v2627 = vsub.f32 %v492, %v2626
        %2628 = vmatpush1.msra.mxu0 %v2627
        %v2629 = vand.u32 %v496, 4294901760
        %v2630 = vsub.f32 %v496, %v2629
        %2631 = vmatprep.subr.mxu0 %v2630
        %v2632 = vand.u32 %v495, 4294901760
        %v2633 = vsub.f32 %v495, %v2632
        %2634 = vmatpush1.msra.mxu0 %v2633
        %v2635 = vand.u32 %v499, 4294901760
        %v2636 = vsub.f32 %v499, %v2635
        %2637 = vmatprep.subr.mxu0 %v2636
        %v2638 = vand.u32 %v498, 4294901760
        %v2639 = vsub.f32 %v498, %v2638
        %2640 = vmatpush1.msra.mxu0 %v2639
        %v2641 = vand.u32 %v502, 4294901760
        %v2642 = vsub.f32 %v502, %v2641
        %2643 = vmatprep.subr.mxu0 %v2642
        %v2644 = vand.u32 %v501, 4294901760
        %v2645 = vsub.f32 %v501, %v2644
        %2646 = vmatpush1.msra.mxu0 %v2645
        %v2647 = vand.u32 %v505, 4294901760
        %v2648 = vsub.f32 %v505, %v2647
        %2649 = vmatprep.subr.mxu0 %v2648
        %v2650 = vand.u32 %v504, 4294901760
        %v2651 = vsub.f32 %v504, %v2650
        %2652 = vmatpush1.msra.mxu0 %v2651
        %v2653 = vand.u32 %v508, 4294901760
        %v2654 = vsub.f32 %v508, %v2653
        %2655 = vmatprep.subr.mxu0 %v2654
        %v2656 = vand.u32 %v507, 4294901760
        %v2657 = vsub.f32 %v507, %v2656
        %2658 = vmatpush1.msra.mxu0 %v2657
        %v2659 = vand.u32 %v511, 4294901760
        %v2660 = vsub.f32 %v511, %v2659
        %2661 = vmatprep.subr.mxu0 %v2660
        %v2662 = vand.u32 %v510, 4294901760
        %v2663 = vsub.f32 %v510, %v2662
        %2664 = vmatpush1.msra.mxu0 %v2663
        %v2665 = vand.u32 %v514, 4294901760
        %v2666 = vsub.f32 %v514, %v2665
        %2667 = vmatprep.subr.mxu0 %v2666
        %v2668 = vand.u32 %v513, 4294901760
        %v2669 = vsub.f32 %v513, %v2668
        %2670 = vmatpush1.msra.mxu0 %v2669
        %v2671 = vand.u32 %v517, 4294901760
        %v2672 = vsub.f32 %v517, %v2671
        %2673 = vmatprep.subr.mxu0 %v2672
        %v2674 = vand.u32 %v516, 4294901760
        %v2675 = vsub.f32 %v516, %v2674
        %2676 = vmatpush1.msra.mxu0 %v2675
        %v2677 = vand.u32 %v520, 4294901760
        %v2678 = vsub.f32 %v520, %v2677
        %2679 = vmatprep.subr.mxu0 %v2678
        %v2680 = vand.u32 %v519, 4294901760
        %v2681 = vsub.f32 %v519, %v2680
        %2682 = vmatpush1.msra.mxu0 %v2681
        %v2683 = vand.u32 %v523, 4294901760
        %v2684 = vsub.f32 %v523, %v2683
        %2685 = vmatprep.subr.mxu0 %v2684
        %v2686 = vand.u32 %v522, 4294901760
        %v2687 = vsub.f32 %v522, %v2686
        %2688 = vmatpush1.msra.mxu0 %v2687
        %v2689 = vand.u32 %v526, 4294901760
        %v2690 = vsub.f32 %v526, %v2689
        %2691 = vmatprep.subr.mxu0 %v2690
        %v2692 = vand.u32 %v525, 4294901760
        %v2693 = vsub.f32 %v525, %v2692
        %2694 = vmatpush1.msra.mxu0 %v2693
        %v2695 = vand.u32 %v529, 4294901760
        %v2696 = vsub.f32 %v529, %v2695
        %2697 = vmatprep.subr.mxu0 %v2696
        %v2698 = vand.u32 %v528, 4294901760
        %v2699 = vsub.f32 %v528, %v2698
        %2700 = vmatpush1.msra.mxu0 %v2699
        %v2701 = vand.u32 %v532, 4294901760
        %v2702 = vsub.f32 %v532, %v2701
        %2703 = vmatprep.subr.mxu0 %v2702
        %v2704 = vand.u32 %v531, 4294901760
        %v2705 = vsub.f32 %v531, %v2704
        %2706 = vmatpush1.msra.mxu0 %v2705
        %v2707 = vand.u32 %v535, 4294901760
        %v2708 = vsub.f32 %v535, %v2707
        %2709 = vmatprep.subr.mxu0 %v2708
        %v2710 = vand.u32 %v534, 4294901760
        %v2711 = vsub.f32 %v534, %v2710
        %2712 = vmatpush1.msra.mxu0 %v2711
        %v2713 = vand.u32 %v538, 4294901760
        %v2714 = vsub.f32 %v538, %v2713
        %2715 = vmatprep.subr.mxu0 %v2714
        %v2716 = vand.u32 %v537, 4294901760
        %v2717 = vsub.f32 %v537, %v2716
        %2718 = vmatpush1.msra.mxu0 %v2717
        %v2719 = vand.u32 %v541, 4294901760
        %v2720 = vsub.f32 %v541, %v2719
        %2721 = vmatprep.subr.mxu0 %v2720
        %v2722 = vand.u32 %v540, 4294901760
        %v2723 = vsub.f32 %v540, %v2722
        %2724 = vmatpush1.msra.mxu0 %v2723
        %v2725 = vand.u32 %v544, 4294901760
        %v2726 = vsub.f32 %v544, %v2725
        %2727 = vmatprep.subr.mxu0 %v2726
        %v2728 = vand.u32 %v543, 4294901760
        %v2729 = vsub.f32 %v543, %v2728
        %2730 = vmatpush1.msra.mxu0 %v2729
        %v2731 = vand.u32 %v547, 4294901760
        %v2732 = vsub.f32 %v547, %v2731
        %2733 = vmatprep.subr.mxu0 %v2732
        %v2734 = vand.u32 %v546, 4294901760
        %v2735 = vsub.f32 %v546, %v2734
        %2736 = vmatpush1.msra.mxu0 %v2735
        %v2737 = vand.u32 %v550, 4294901760
        %v2738 = vsub.f32 %v550, %v2737
        %2739 = vmatprep.subr.mxu0 %v2738
        %v2740 = vand.u32 %v549, 4294901760
        %v2741 = vsub.f32 %v549, %v2740
        %2742 = vmatpush1.msra.mxu0 %v2741
        %v2743 = vand.u32 %v553, 4294901760
        %v2744 = vsub.f32 %v553, %v2743
        %2745 = vmatprep.subr.mxu0 %v2744
        %v2746 = vand.u32 %v552, 4294901760
        %v2747 = vsub.f32 %v552, %v2746
        %2748 = vmatpush1.msra.mxu0 %v2747
        %v2749 = vand.u32 %v556, 4294901760
        %v2750 = vsub.f32 %v556, %v2749
        %2751 = vmatprep.subr.mxu0 %v2750
        %v2752 = vand.u32 %v555, 4294901760
        %v2753 = vsub.f32 %v555, %v2752
        %2754 = vmatpush1.msra.mxu0 %v2753
        %v2755 = vand.u32 %v559, 4294901760
        %v2756 = vsub.f32 %v559, %v2755
        %2757 = vmatprep.subr.mxu0 %v2756
        %v2758 = vand.u32 %v558, 4294901760
        %v2759 = vsub.f32 %v558, %v2758
        %2760 = vmatpush1.msra.mxu0 %v2759
        %v2761 = vand.u32 %v562, 4294901760
        %v2762 = vsub.f32 %v562, %v2761
        %2763 = vmatprep.subr.mxu0 %v2762
        %v2764 = vand.u32 %v561, 4294901760
        %v2765 = vsub.f32 %v561, %v2764
        %2766 = vmatpush1.msra.mxu0 %v2765
        %v2767 = vand.u32 %v363, 4294901760
        %v2768 = vsub.f32 %v363, %v2767
        %2769 = vmatprep.mubr.f32.mxu0 %v2768
        %v2770 = vand.u32 %v362, 4294901760
        %v2771 = vsub.f32 %v362, %v2770
        %2772 = vmatmul.mubr.f32.gmra.mrb[0].mxu0 %v2771
        %v2773 = vpop.f32.mrb[0].mxu0
        %v2774 = vadd.f32 %v2555, %v2773
        %v2775 = vpop.f32.mrb[0].mxu0
        %v2776 = vadd.f32 %v2557, %v2775
        %v2777 = vand.u32 %v367, 4294901760
        %v2778 = vsub.f32 %v367, %v2777
        %2779 = vmatprep.mubr.f32.mxu0 %v2778
        %v2780 = vand.u32 %v366, 4294901760
        %v2781 = vsub.f32 %v366, %v2780
        %2782 = vmatmul.mubr.f32.gmra.mrb[0].mxu0 %v2781
        %v2783 = vpop.f32.mrb[0].mxu0
        %v2784 = vadd.f32 %v2563, %v2783
        %v2785 = vpop.f32.mrb[0].mxu0
        %v2786 = vadd.f32 %v2565, %v2785
        %v2787 = vand.u32 %v371, 4294901760
        %v2788 = vsub.f32 %v371, %v2787
        %2789 = vmatprep.mubr.f32.mxu0 %v2788
        %v2790 = vand.u32 %v370, 4294901760
        %v2791 = vsub.f32 %v370, %v2790
        %2792 = vmatmul.mubr.f32.gmra.mrb[0].mxu0 %v2791
        %v2793 = vpop.f32.mrb[0].mxu0
        %v2794 = vadd.f32 %v2571, %v2793
        %v2795 = vpop.f32.mrb[0].mxu0
        %v2796 = vadd.f32 %v2573, %v2795
        %2797 = vdwg.mxu0
        %v2798 = vand.u32 %v469, 4294901760
        %2799 = vmatprep.subr.mxu0 %v2798
        %v2800 = vand.u32 %v468, 4294901760
        %2801 = vmatpush1.msra.mxu0 %v2800
        %v2802 = vand.u32 %v472, 4294901760
        %2803 = vmatprep.subr.mxu0 %v2802
        %v2804 = vand.u32 %v471, 4294901760
        %2805 = vmatpush1.msra.mxu0 %v2804
        %v2806 = vand.u32 %v475, 4294901760
        %2807 = vmatprep.subr.mxu0 %v2806
        %v2808 = vand.u32 %v474, 4294901760
        %2809 = vmatpush1.msra.mxu0 %v2808
        %v2810 = vand.u32 %v478, 4294901760
        %2811 = vmatprep.subr.mxu0 %v2810
        %v2812 = vand.u32 %v477, 4294901760
        %2813 = vmatpush1.msra.mxu0 %v2812
        %v2814 = vand.u32 %v481, 4294901760
        %2815 = vmatprep.subr.mxu0 %v2814
        %v2816 = vand.u32 %v480, 4294901760
        %2817 = vmatpush1.msra.mxu0 %v2816
        %v2818 = vand.u32 %v484, 4294901760
        %2819 = vmatprep.subr.mxu0 %v2818
        %v2820 = vand.u32 %v483, 4294901760
        %2821 = vmatpush1.msra.mxu0 %v2820
        %v2822 = vand.u32 %v487, 4294901760
        %2823 = vmatprep.subr.mxu0 %v2822
        %v2824 = vand.u32 %v486, 4294901760
        %2825 = vmatpush1.msra.mxu0 %v2824
        %v2826 = vand.u32 %v490, 4294901760
        %2827 = vmatprep.subr.mxu0 %v2826
        %v2828 = vand.u32 %v489, 4294901760
        %2829 = vmatpush1.msra.mxu0 %v2828
        %v2830 = vand.u32 %v493, 4294901760
        %2831 = vmatprep.subr.mxu0 %v2830
        %v2832 = vand.u32 %v492, 4294901760
        %2833 = vmatpush1.msra.mxu0 %v2832
        %v2834 = vand.u32 %v496, 4294901760
        %2835 = vmatprep.subr.mxu0 %v2834
        %v2836 = vand.u32 %v495, 4294901760
        %2837 = vmatpush1.msra.mxu0 %v2836
        %v2838 = vand.u32 %v499, 4294901760
        %2839 = vmatprep.subr.mxu0 %v2838
        %v2840 = vand.u32 %v498, 4294901760
        %2841 = vmatpush1.msra.mxu0 %v2840
        %v2842 = vand.u32 %v502, 4294901760
        %2843 = vmatprep.subr.mxu0 %v2842
        %v2844 = vand.u32 %v501, 4294901760
        %2845 = vmatpush1.msra.mxu0 %v2844
        %v2846 = vand.u32 %v505, 4294901760
        %2847 = vmatprep.subr.mxu0 %v2846
        %v2848 = vand.u32 %v504, 4294901760
        %2849 = vmatpush1.msra.mxu0 %v2848
        %v2850 = vand.u32 %v508, 4294901760
        %2851 = vmatprep.subr.mxu0 %v2850
        %v2852 = vand.u32 %v507, 4294901760
        %2853 = vmatpush1.msra.mxu0 %v2852
        %v2854 = vand.u32 %v511, 4294901760
        %2855 = vmatprep.subr.mxu0 %v2854
        %v2856 = vand.u32 %v510, 4294901760
        %2857 = vmatpush1.msra.mxu0 %v2856
        %v2858 = vand.u32 %v514, 4294901760
        %2859 = vmatprep.subr.mxu0 %v2858
        %v2860 = vand.u32 %v513, 4294901760
        %2861 = vmatpush1.msra.mxu0 %v2860
        %v2862 = vand.u32 %v517, 4294901760
        %2863 = vmatprep.subr.mxu0 %v2862
        %v2864 = vand.u32 %v516, 4294901760
        %2865 = vmatpush1.msra.mxu0 %v2864
        %v2866 = vand.u32 %v520, 4294901760
        %2867 = vmatprep.subr.mxu0 %v2866
        %v2868 = vand.u32 %v519, 4294901760
        %2869 = vmatpush1.msra.mxu0 %v2868
        %v2870 = vand.u32 %v523, 4294901760
        %2871 = vmatprep.subr.mxu0 %v2870
        %v2872 = vand.u32 %v522, 4294901760
        %2873 = vmatpush1.msra.mxu0 %v2872
        %v2874 = vand.u32 %v526, 4294901760
        %2875 = vmatprep.subr.mxu0 %v2874
        %v2876 = vand.u32 %v525, 4294901760
        %2877 = vmatpush1.msra.mxu0 %v2876
        %v2878 = vand.u32 %v529, 4294901760
        %2879 = vmatprep.subr.mxu0 %v2878
        %v2880 = vand.u32 %v528, 4294901760
        %2881 = vmatpush1.msra.mxu0 %v2880
        %v2882 = vand.u32 %v532, 4294901760
        %2883 = vmatprep.subr.mxu0 %v2882
        %v2884 = vand.u32 %v531, 4294901760
        %2885 = vmatpush1.msra.mxu0 %v2884
        %v2886 = vand.u32 %v535, 4294901760
        %2887 = vmatprep.subr.mxu0 %v2886
        %v2888 = vand.u32 %v534, 4294901760
        %2889 = vmatpush1.msra.mxu0 %v2888
        %v2890 = vand.u32 %v538, 4294901760
        %2891 = vmatprep.subr.mxu0 %v2890
        %v2892 = vand.u32 %v537, 4294901760
        %2893 = vmatpush1.msra.mxu0 %v2892
        %v2894 = vand.u32 %v541, 4294901760
        %2895 = vmatprep.subr.mxu0 %v2894
        %v2896 = vand.u32 %v540, 4294901760
        %2897 = vmatpush1.msra.mxu0 %v2896
        %v2898 = vand.u32 %v544, 4294901760
        %2899 = vmatprep.subr.mxu0 %v2898
        %v2900 = vand.u32 %v543, 4294901760
        %2901 = vmatpush1.msra.mxu0 %v2900
        %v2902 = vand.u32 %v547, 4294901760
        %2903 = vmatprep.subr.mxu0 %v2902
        %v2904 = vand.u32 %v546, 4294901760
        %2905 = vmatpush1.msra.mxu0 %v2904
        %v2906 = vand.u32 %v550, 4294901760
        %2907 = vmatprep.subr.mxu0 %v2906
        %v2908 = vand.u32 %v549, 4294901760
        %2909 = vmatpush1.msra.mxu0 %v2908
        %v2910 = vand.u32 %v553, 4294901760
        %2911 = vmatprep.subr.mxu0 %v2910
        %v2912 = vand.u32 %v552, 4294901760
        %2913 = vmatpush1.msra.mxu0 %v2912
        %v2914 = vand.u32 %v556, 4294901760
        %2915 = vmatprep.subr.mxu0 %v2914
        %v2916 = vand.u32 %v555, 4294901760
        %2917 = vmatpush1.msra.mxu0 %v2916
        %v2918 = vand.u32 %v559, 4294901760
        %2919 = vmatprep.subr.mxu0 %v2918
        %v2920 = vand.u32 %v558, 4294901760
        %2921 = vmatpush1.msra.mxu0 %v2920
        %v2922 = vand.u32 %v562, 4294901760
        %2923 = vmatprep.subr.mxu0 %v2922
        %v2924 = vand.u32 %v561, 4294901760
        %2925 = vmatpush1.msra.mxu0 %v2924
        %v2926 = vand.u32 %v363, 4294901760
        %v2927 = vsub.f32 %v363, %v2926
        %v2928 = vand.u32 %v2927, 4294901760
        %2929 = vmatprep.mubr.f32.mxu0 %v2928
        %v2930 = vand.u32 %v362, 4294901760
        %v2931 = vsub.f32 %v362, %v2930
        %v2932 = vand.u32 %v2931, 4294901760
        %2933 = vmatmul.mubr.f32.gmra.mrb[0].mxu0 %v2932
        %v2934 = vpop.f32.mrb[0].mxu0
        %v2935 = vadd.f32 %v2774, %v2934
        %v2936 = vpop.f32.mrb[0].mxu0
        %v2937 = vadd.f32 %v2776, %v2936
        %v2938 = vand.u32 %v367, 4294901760
        %v2939 = vsub.f32 %v367, %v2938
        %v2940 = vand.u32 %v2939, 4294901760
        %2941 = vmatprep.mubr.f32.mxu0 %v2940
        %v2942 = vand.u32 %v366, 4294901760
        %v2943 = vsub.f32 %v366, %v2942
        %v2944 = vand.u32 %v2943, 4294901760
        %2945 = vmatmul.mubr.f32.gmra.mrb[0].mxu0 %v2944
        %v2946 = vpop.f32.mrb[0].mxu0
        %v2947 = vadd.f32 %v2784, %v2946
        %v2948 = vpop.f32.mrb[0].mxu0
        %v2949 = vadd.f32 %v2786, %v2948
        %v2950 = vand.u32 %v371, 4294901760
        %v2951 = vsub.f32 %v371, %v2950
        %v2952 = vand.u32 %v2951, 4294901760
        %2953 = vmatprep.mubr.f32.mxu0 %v2952
        %v2954 = vand.u32 %v370, 4294901760
        %v2955 = vsub.f32 %v370, %v2954
        %v2956 = vand.u32 %v2955, 4294901760
        %2957 = vmatmul.mubr.f32.gmra.mrb[0].mxu0 %v2956
        %v2958 = vpop.f32.mrb[0].mxu0
        %v2959 = vadd.f32 %v2794, %v2958
        %v2960 = vpop.f32.mrb[0].mxu0
        %v2961 = vadd.f32 %v2796, %v2960
        %2962 = vdwg.mxu0
        %v2963 = vand.u32 %v469, 4294901760
        %v2964 = vsub.f32 %v469, %v2963
        %v2965 = vand.u32 %v2964, 4294901760
        %2966 = vmatprep.subr.mxu0 %v2965
        %v2967 = vand.u32 %v468, 4294901760
        %v2968 = vsub.f32 %v468, %v2967
        %v2969 = vand.u32 %v2968, 4294901760
        %2970 = vmatpush1.msra.mxu0 %v2969
        %v2971 = vand.u32 %v472, 4294901760
        %v2972 = vsub.f32 %v472, %v2971
        %v2973 = vand.u32 %v2972, 4294901760
        %2974 = vmatprep.subr.mxu0 %v2973
        %v2975 = vand.u32 %v471, 4294901760
        %v2976 = vsub.f32 %v471, %v2975
        %v2977 = vand.u32 %v2976, 4294901760
        %2978 = vmatpush1.msra.mxu0 %v2977
        %v2979 = vand.u32 %v475, 4294901760
        %v2980 = vsub.f32 %v475, %v2979
        %v2981 = vand.u32 %v2980, 4294901760
        %2982 = vmatprep.subr.mxu0 %v2981
        %v2983 = vand.u32 %v474, 4294901760
        %v2984 = vsub.f32 %v474, %v2983
        %v2985 = vand.u32 %v2984, 4294901760
        %2986 = vmatpush1.msra.mxu0 %v2985
        %v2987 = vand.u32 %v478, 4294901760
        %v2988 = vsub.f32 %v478, %v2987
        %v2989 = vand.u32 %v2988, 4294901760
        %2990 = vmatprep.subr.mxu0 %v2989
        %v2991 = vand.u32 %v477, 4294901760
        %v2992 = vsub.f32 %v477, %v2991
        %v2993 = vand.u32 %v2992, 4294901760
        %2994 = vmatpush1.msra.mxu0 %v2993
        %v2995 = vand.u32 %v481, 4294901760
        %v2996 = vsub.f32 %v481, %v2995
        %v2997 = vand.u32 %v2996, 4294901760
        %2998 = vmatprep.subr.mxu0 %v2997
        %v2999 = vand.u32 %v480, 4294901760
        %v3000 = vsub.f32 %v480, %v2999
        %v3001 = vand.u32 %v3000, 4294901760
        %3002 = vmatpush1.msra.mxu0 %v3001
        %v3003 = vand.u32 %v484, 4294901760
        %v3004 = vsub.f32 %v484, %v3003
        %v3005 = vand.u32 %v3004, 4294901760
        %3006 = vmatprep.subr.mxu0 %v3005
        %v3007 = vand.u32 %v483, 4294901760
        %v3008 = vsub.f32 %v483, %v3007
        %v3009 = vand.u32 %v3008, 4294901760
        %3010 = vmatpush1.msra.mxu0 %v3009
        %v3011 = vand.u32 %v487, 4294901760
        %v3012 = vsub.f32 %v487, %v3011
        %v3013 = vand.u32 %v3012, 4294901760
        %3014 = vmatprep.subr.mxu0 %v3013
        %v3015 = vand.u32 %v486, 4294901760
        %v3016 = vsub.f32 %v486, %v3015
        %v3017 = vand.u32 %v3016, 4294901760
        %3018 = vmatpush1.msra.mxu0 %v3017
        %v3019 = vand.u32 %v490, 4294901760
        %v3020 = vsub.f32 %v490, %v3019
        %v3021 = vand.u32 %v3020, 4294901760
        %3022 = vmatprep.subr.mxu0 %v3021
        %v3023 = vand.u32 %v489, 4294901760
        %v3024 = vsub.f32 %v489, %v3023
        %v3025 = vand.u32 %v3024, 4294901760
        %3026 = vmatpush1.msra.mxu0 %v3025
        %v3027 = vand.u32 %v493, 4294901760
        %v3028 = vsub.f32 %v493, %v3027
        %v3029 = vand.u32 %v3028, 4294901760
        %3030 = vmatprep.subr.mxu0 %v3029
        %v3031 = vand.u32 %v492, 4294901760
        %v3032 = vsub.f32 %v492, %v3031
        %v3033 = vand.u32 %v3032, 4294901760
        %3034 = vmatpush1.msra.mxu0 %v3033
        %v3035 = vand.u32 %v496, 4294901760
        %v3036 = vsub.f32 %v496, %v3035
        %v3037 = vand.u32 %v3036, 4294901760
        %3038 = vmatprep.subr.mxu0 %v3037
        %v3039 = vand.u32 %v495, 4294901760
        %v3040 = vsub.f32 %v495, %v3039
        %v3041 = vand.u32 %v3040, 4294901760
        %3042 = vmatpush1.msra.mxu0 %v3041
        %v3043 = vand.u32 %v499, 4294901760
        %v3044 = vsub.f32 %v499, %v3043
        %v3045 = vand.u32 %v3044, 4294901760
        %3046 = vmatprep.subr.mxu0 %v3045
        %v3047 = vand.u32 %v498, 4294901760
        %v3048 = vsub.f32 %v498, %v3047
        %v3049 = vand.u32 %v3048, 4294901760
        %3050 = vmatpush1.msra.mxu0 %v3049
        %v3051 = vand.u32 %v502, 4294901760
        %v3052 = vsub.f32 %v502, %v3051
        %v3053 = vand.u32 %v3052, 4294901760
        %3054 = vmatprep.subr.mxu0 %v3053
        %v3055 = vand.u32 %v501, 4294901760
        %v3056 = vsub.f32 %v501, %v3055
        %v3057 = vand.u32 %v3056, 4294901760
        %3058 = vmatpush1.msra.mxu0 %v3057
        %v3059 = vand.u32 %v505, 4294901760
        %v3060 = vsub.f32 %v505, %v3059
        %v3061 = vand.u32 %v3060, 4294901760
        %3062 = vmatprep.subr.mxu0 %v3061
        %v3063 = vand.u32 %v504, 4294901760
        %v3064 = vsub.f32 %v504, %v3063
        %v3065 = vand.u32 %v3064, 4294901760
        %3066 = vmatpush1.msra.mxu0 %v3065
        %v3067 = vand.u32 %v508, 4294901760
        %v3068 = vsub.f32 %v508, %v3067
        %v3069 = vand.u32 %v3068, 4294901760
        %3070 = vmatprep.subr.mxu0 %v3069
        %v3071 = vand.u32 %v507, 4294901760
        %v3072 = vsub.f32 %v507, %v3071
        %v3073 = vand.u32 %v3072, 4294901760
        %3074 = vmatpush1.msra.mxu0 %v3073
        %v3075 = vand.u32 %v511, 4294901760
        %v3076 = vsub.f32 %v511, %v3075
        %v3077 = vand.u32 %v3076, 4294901760
        %3078 = vmatprep.subr.mxu0 %v3077
        %v3079 = vand.u32 %v510, 4294901760
        %v3080 = vsub.f32 %v510, %v3079
        %v3081 = vand.u32 %v3080, 4294901760
        %3082 = vmatpush1.msra.mxu0 %v3081
        %v3083 = vand.u32 %v514, 4294901760
        %v3084 = vsub.f32 %v514, %v3083
        %v3085 = vand.u32 %v3084, 4294901760
        %3086 = vmatprep.subr.mxu0 %v3085
        %v3087 = vand.u32 %v513, 4294901760
        %v3088 = vsub.f32 %v513, %v3087
        %v3089 = vand.u32 %v3088, 4294901760
        %3090 = vmatpush1.msra.mxu0 %v3089
        %v3091 = vand.u32 %v517, 4294901760
        %v3092 = vsub.f32 %v517, %v3091
        %v3093 = vand.u32 %v3092, 4294901760
        %3094 = vmatprep.subr.mxu0 %v3093
        %v3095 = vand.u32 %v516, 4294901760
        %v3096 = vsub.f32 %v516, %v3095
        %v3097 = vand.u32 %v3096, 4294901760
        %3098 = vmatpush1.msra.mxu0 %v3097
        %v3099 = vand.u32 %v520, 4294901760
        %v3100 = vsub.f32 %v520, %v3099
        %v3101 = vand.u32 %v3100, 4294901760
        %3102 = vmatprep.subr.mxu0 %v3101
        %v3103 = vand.u32 %v519, 4294901760
        %v3104 = vsub.f32 %v519, %v3103
        %v3105 = vand.u32 %v3104, 4294901760
        %3106 = vmatpush1.msra.mxu0 %v3105
        %v3107 = vand.u32 %v523, 4294901760
        %v3108 = vsub.f32 %v523, %v3107
        %v3109 = vand.u32 %v3108, 4294901760
        %3110 = vmatprep.subr.mxu0 %v3109
        %v3111 = vand.u32 %v522, 4294901760
        %v3112 = vsub.f32 %v522, %v3111
        %v3113 = vand.u32 %v3112, 4294901760
        %3114 = vmatpush1.msra.mxu0 %v3113
        %v3115 = vand.u32 %v526, 4294901760
        %v3116 = vsub.f32 %v526, %v3115
        %v3117 = vand.u32 %v3116, 4294901760
        %3118 = vmatprep.subr.mxu0 %v3117
        %v3119 = vand.u32 %v525, 4294901760
        %v3120 = vsub.f32 %v525, %v3119
        %v3121 = vand.u32 %v3120, 4294901760
        %3122 = vmatpush1.msra.mxu0 %v3121
        %v3123 = vand.u32 %v529, 4294901760
        %v3124 = vsub.f32 %v529, %v3123
        %v3125 = vand.u32 %v3124, 4294901760
        %3126 = vmatprep.subr.mxu0 %v3125
        %v3127 = vand.u32 %v528, 4294901760
        %v3128 = vsub.f32 %v528, %v3127
        %v3129 = vand.u32 %v3128, 4294901760
        %3130 = vmatpush1.msra.mxu0 %v3129
        %v3131 = vand.u32 %v532, 4294901760
        %v3132 = vsub.f32 %v532, %v3131
        %v3133 = vand.u32 %v3132, 4294901760
        %3134 = vmatprep.subr.mxu0 %v3133
        %v3135 = vand.u32 %v531, 4294901760
        %v3136 = vsub.f32 %v531, %v3135
        %v3137 = vand.u32 %v3136, 4294901760
        %3138 = vmatpush1.msra.mxu0 %v3137
        %v3139 = vand.u32 %v535, 4294901760
        %v3140 = vsub.f32 %v535, %v3139
        %v3141 = vand.u32 %v3140, 4294901760
        %3142 = vmatprep.subr.mxu0 %v3141
        %v3143 = vand.u32 %v534, 4294901760
        %v3144 = vsub.f32 %v534, %v3143
        %v3145 = vand.u32 %v3144, 4294901760
        %3146 = vmatpush1.msra.mxu0 %v3145
        %v3147 = vand.u32 %v538, 4294901760
        %v3148 = vsub.f32 %v538, %v3147
        %v3149 = vand.u32 %v3148, 4294901760
        %3150 = vmatprep.subr.mxu0 %v3149
        %v3151 = vand.u32 %v537, 4294901760
        %v3152 = vsub.f32 %v537, %v3151
        %v3153 = vand.u32 %v3152, 4294901760
        %3154 = vmatpush1.msra.mxu0 %v3153
        %v3155 = vand.u32 %v541, 4294901760
        %v3156 = vsub.f32 %v541, %v3155
        %v3157 = vand.u32 %v3156, 4294901760
        %3158 = vmatprep.subr.mxu0 %v3157
        %v3159 = vand.u32 %v540, 4294901760
        %v3160 = vsub.f32 %v540, %v3159
        %v3161 = vand.u32 %v3160, 4294901760
        %3162 = vmatpush1.msra.mxu0 %v3161
        %v3163 = vand.u32 %v544, 4294901760
        %v3164 = vsub.f32 %v544, %v3163
        %v3165 = vand.u32 %v3164, 4294901760
        %3166 = vmatprep.subr.mxu0 %v3165
        %v3167 = vand.u32 %v543, 4294901760
        %v3168 = vsub.f32 %v543, %v3167
        %v3169 = vand.u32 %v3168, 4294901760
        %3170 = vmatpush1.msra.mxu0 %v3169
        %v3171 = vand.u32 %v547, 4294901760
        %v3172 = vsub.f32 %v547, %v3171
        %v3173 = vand.u32 %v3172, 4294901760
        %3174 = vmatprep.subr.mxu0 %v3173
        %v3175 = vand.u32 %v546, 4294901760
        %v3176 = vsub.f32 %v546, %v3175
        %v3177 = vand.u32 %v3176, 4294901760
        %3178 = vmatpush1.msra.mxu0 %v3177
        %v3179 = vand.u32 %v550, 4294901760
        %v3180 = vsub.f32 %v550, %v3179
        %v3181 = vand.u32 %v3180, 4294901760
        %3182 = vmatprep.subr.mxu0 %v3181
        %v3183 = vand.u32 %v549, 4294901760
        %v3184 = vsub.f32 %v549, %v3183
        %v3185 = vand.u32 %v3184, 4294901760
        %3186 = vmatpush1.msra.mxu0 %v3185
        %v3187 = vand.u32 %v553, 4294901760
        %v3188 = vsub.f32 %v553, %v3187
        %v3189 = vand.u32 %v3188, 4294901760
        %3190 = vmatprep.subr.mxu0 %v3189
        %v3191 = vand.u32 %v552, 4294901760
        %v3192 = vsub.f32 %v552, %v3191
        %v3193 = vand.u32 %v3192, 4294901760
        %3194 = vmatpush1.msra.mxu0 %v3193
        %v3195 = vand.u32 %v556, 4294901760
        %v3196 = vsub.f32 %v556, %v3195
        %v3197 = vand.u32 %v3196, 4294901760
        %3198 = vmatprep.subr.mxu0 %v3197
        %v3199 = vand.u32 %v555, 4294901760
        %v3200 = vsub.f32 %v555, %v3199
        %v3201 = vand.u32 %v3200, 4294901760
        %3202 = vmatpush1.msra.mxu0 %v3201
        %v3203 = vand.u32 %v559, 4294901760
        %v3204 = vsub.f32 %v559, %v3203
        %v3205 = vand.u32 %v3204, 4294901760
        %3206 = vmatprep.subr.mxu0 %v3205
        %v3207 = vand.u32 %v558, 4294901760
        %v3208 = vsub.f32 %v558, %v3207
        %v3209 = vand.u32 %v3208, 4294901760
        %3210 = vmatpush1.msra.mxu0 %v3209
        %v3211 = vand.u32 %v562, 4294901760
        %v3212 = vsub.f32 %v562, %v3211
        %v3213 = vand.u32 %v3212, 4294901760
        %3214 = vmatprep.subr.mxu0 %v3213
        %v3215 = vand.u32 %v561, 4294901760
        %v3216 = vsub.f32 %v561, %v3215
        %v3217 = vand.u32 %v3216, 4294901760
        %3218 = vmatpush1.msra.mxu0 %v3217
        %v3219 = vand.u32 %v363, 4294901760
        %3220 = vmatprep.mubr.f32.mxu0 %v3219
        %v3221 = vand.u32 %v362, 4294901760
        %3222 = vmatmul.mubr.f32.gmra.mrb[0].mxu0 %v3221
        %v3223 = vpop.f32.mrb[0].mxu0
        %v3224 = vadd.f32 %v2935, %v3223
        %v3225 = vpop.f32.mrb[0].mxu0
        %v3226 = vadd.f32 %v2937, %v3225
        %v3227 = vand.u32 %v367, 4294901760
        %3228 = vmatprep.mubr.f32.mxu0 %v3227
        %v3229 = vand.u32 %v366, 4294901760
        %3230 = vmatmul.mubr.f32.gmra.mrb[0].mxu0 %v3229
        %v3231 = vpop.f32.mrb[0].mxu0
        %v3232 = vadd.f32 %v2947, %v3231
        %v3233 = vpop.f32.mrb[0].mxu0
        %v3234 = vadd.f32 %v2949, %v3233
        %v3235 = vand.u32 %v371, 4294901760
        %3236 = vmatprep.mubr.f32.mxu0 %v3235
        %v3237 = vand.u32 %v370, 4294901760
        %3238 = vmatmul.mubr.f32.gmra.mrb[0].mxu0 %v3237
        %v3239 = vpop.f32.mrb[0].mxu0
        %v3240 = vadd.f32 %v2959, %v3239
        %v3241 = vpop.f32.mrb[0].mxu0
        %v3242 = vadd.f32 %v2961, %v3241
        %3243 = vdwg.mxu0
        %v3244 = vand.u32 %v469, 4294901760
        %3245 = vmatprep.subr.mxu0 %v3244
        %v3246 = vand.u32 %v468, 4294901760
        %3247 = vmatpush1.msra.mxu0 %v3246
        %v3248 = vand.u32 %v472, 4294901760
        %3249 = vmatprep.subr.mxu0 %v3248
        %v3250 = vand.u32 %v471, 4294901760
        %3251 = vmatpush1.msra.mxu0 %v3250
        %v3252 = vand.u32 %v475, 4294901760
        %3253 = vmatprep.subr.mxu0 %v3252
        %v3254 = vand.u32 %v474, 4294901760
        %3255 = vmatpush1.msra.mxu0 %v3254
        %v3256 = vand.u32 %v478, 4294901760
        %3257 = vmatprep.subr.mxu0 %v3256
        %v3258 = vand.u32 %v477, 4294901760
        %3259 = vmatpush1.msra.mxu0 %v3258
        %v3260 = vand.u32 %v481, 4294901760
        %3261 = vmatprep.subr.mxu0 %v3260
        %v3262 = vand.u32 %v480, 4294901760
        %3263 = vmatpush1.msra.mxu0 %v3262
        %v3264 = vand.u32 %v484, 4294901760
        %3265 = vmatprep.subr.mxu0 %v3264
        %v3266 = vand.u32 %v483, 4294901760
        %3267 = vmatpush1.msra.mxu0 %v3266
        %v3268 = vand.u32 %v487, 4294901760
        %3269 = vmatprep.subr.mxu0 %v3268
        %v3270 = vand.u32 %v486, 4294901760
        %3271 = vmatpush1.msra.mxu0 %v3270
        %v3272 = vand.u32 %v490, 4294901760
        %3273 = vmatprep.subr.mxu0 %v3272
        %v3274 = vand.u32 %v489, 4294901760
        %3275 = vmatpush1.msra.mxu0 %v3274
        %v3276 = vand.u32 %v493, 4294901760
        %3277 = vmatprep.subr.mxu0 %v3276
        %v3278 = vand.u32 %v492, 4294901760
        %3279 = vmatpush1.msra.mxu0 %v3278
        %v3280 = vand.u32 %v496, 4294901760
        %3281 = vmatprep.subr.mxu0 %v3280
        %v3282 = vand.u32 %v495, 4294901760
        %3283 = vmatpush1.msra.mxu0 %v3282
        %v3284 = vand.u32 %v499, 4294901760
        %3285 = vmatprep.subr.mxu0 %v3284
        %v3286 = vand.u32 %v498, 4294901760
        %3287 = vmatpush1.msra.mxu0 %v3286
        %v3288 = vand.u32 %v502, 4294901760
        %3289 = vmatprep.subr.mxu0 %v3288
        %v3290 = vand.u32 %v501, 4294901760
        %3291 = vmatpush1.msra.mxu0 %v3290
        %v3292 = vand.u32 %v505, 4294901760
        %3293 = vmatprep.subr.mxu0 %v3292
        %v3294 = vand.u32 %v504, 4294901760
        %3295 = vmatpush1.msra.mxu0 %v3294
        %v3296 = vand.u32 %v508, 4294901760
        %3297 = vmatprep.subr.mxu0 %v3296
        %v3298 = vand.u32 %v507, 4294901760
        %3299 = vmatpush1.msra.mxu0 %v3298
        %v3300 = vand.u32 %v511, 4294901760
        %3301 = vmatprep.subr.mxu0 %v3300
        %v3302 = vand.u32 %v510, 4294901760
        %3303 = vmatpush1.msra.mxu0 %v3302
        %v3304 = vand.u32 %v514, 4294901760
        %3305 = vmatprep.subr.mxu0 %v3304
        %v3306 = vand.u32 %v513, 4294901760
        %3307 = vmatpush1.msra.mxu0 %v3306
        %v3308 = vand.u32 %v517, 4294901760
        %3309 = vmatprep.subr.mxu0 %v3308
        %v3310 = vand.u32 %v516, 4294901760
        %3311 = vmatpush1.msra.mxu0 %v3310
        %v3312 = vand.u32 %v520, 4294901760
        %3313 = vmatprep.subr.mxu0 %v3312
        %v3314 = vand.u32 %v519, 4294901760
        %3315 = vmatpush1.msra.mxu0 %v3314
        %v3316 = vand.u32 %v523, 4294901760
        %3317 = vmatprep.subr.mxu0 %v3316
        %v3318 = vand.u32 %v522, 4294901760
        %3319 = vmatpush1.msra.mxu0 %v3318
        %v3320 = vand.u32 %v526, 4294901760
        %3321 = vmatprep.subr.mxu0 %v3320
        %v3322 = vand.u32 %v525, 4294901760
        %3323 = vmatpush1.msra.mxu0 %v3322
        %v3324 = vand.u32 %v529, 4294901760
        %3325 = vmatprep.subr.mxu0 %v3324
        %v3326 = vand.u32 %v528, 4294901760
        %3327 = vmatpush1.msra.mxu0 %v3326
        %v3328 = vand.u32 %v532, 4294901760
        %3329 = vmatprep.subr.mxu0 %v3328
        %v3330 = vand.u32 %v531, 4294901760
        %3331 = vmatpush1.msra.mxu0 %v3330
        %v3332 = vand.u32 %v535, 4294901760
        %3333 = vmatprep.subr.mxu0 %v3332
        %v3334 = vand.u32 %v534, 4294901760
        %3335 = vmatpush1.msra.mxu0 %v3334
        %v3336 = vand.u32 %v538, 4294901760
        %3337 = vmatprep.subr.mxu0 %v3336
        %v3338 = vand.u32 %v537, 4294901760
        %3339 = vmatpush1.msra.mxu0 %v3338
        %v3340 = vand.u32 %v541, 4294901760
        %3341 = vmatprep.subr.mxu0 %v3340
        %v3342 = vand.u32 %v540, 4294901760
        %3343 = vmatpush1.msra.mxu0 %v3342
        %v3344 = vand.u32 %v544, 4294901760
        %3345 = vmatprep.subr.mxu0 %v3344
        %v3346 = vand.u32 %v543, 4294901760
        %3347 = vmatpush1.msra.mxu0 %v3346
        %v3348 = vand.u32 %v547, 4294901760
        %3349 = vmatprep.subr.mxu0 %v3348
        %v3350 = vand.u32 %v546, 4294901760
        %3351 = vmatpush1.msra.mxu0 %v3350
        %v3352 = vand.u32 %v550, 4294901760
        %3353 = vmatprep.subr.mxu0 %v3352
        %v3354 = vand.u32 %v549, 4294901760
        %3355 = vmatpush1.msra.mxu0 %v3354
        %v3356 = vand.u32 %v553, 4294901760
        %3357 = vmatprep.subr.mxu0 %v3356
        %v3358 = vand.u32 %v552, 4294901760
        %3359 = vmatpush1.msra.mxu0 %v3358
        %v3360 = vand.u32 %v556, 4294901760
        %3361 = vmatprep.subr.mxu0 %v3360
        %v3362 = vand.u32 %v555, 4294901760
        %3363 = vmatpush1.msra.mxu0 %v3362
        %v3364 = vand.u32 %v559, 4294901760
        %3365 = vmatprep.subr.mxu0 %v3364
        %v3366 = vand.u32 %v558, 4294901760
        %3367 = vmatpush1.msra.mxu0 %v3366
        %v3368 = vand.u32 %v562, 4294901760
        %3369 = vmatprep.subr.mxu0 %v3368
        %v3370 = vand.u32 %v561, 4294901760
        %3371 = vmatpush1.msra.mxu0 %v3370
        %v3372 = vand.u32 %v363, 4294901760
        %3373 = vmatprep.mubr.f32.mxu0 %v3372
        %v3374 = vand.u32 %v362, 4294901760
        %3375 = vmatmul.mubr.f32.gmra.mrb[0].mxu0 %v3374
        %v3376 = vpop.f32.mrb[0].mxu0
        %v3377 = vadd.f32 %v3224, %v3376
        %v3378 = vpop.f32.mrb[0].mxu0
        %v3379 = vadd.f32 %v3226, %v3378
        %v3380 = vand.u32 %v367, 4294901760
        %3381 = vmatprep.mubr.f32.mxu0 %v3380
        %v3382 = vand.u32 %v366, 4294901760
        %3383 = vmatmul.mubr.f32.gmra.mrb[0].mxu0 %v3382
        %v3384 = vpop.f32.mrb[0].mxu0
        %v3385 = vadd.f32 %v3232, %v3384
        %v3386 = vpop.f32.mrb[0].mxu0
        %v3387 = vadd.f32 %v3234, %v3386
        %v3388 = vand.u32 %v371, 4294901760
        %3389 = vmatprep.mubr.f32.mxu0 %v3388
        %v3390 = vand.u32 %v370, 4294901760
        %3391 = vmatmul.mubr.f32.gmra.mrb[0].mxu0 %v3390
        %v3392 = vpop.f32.mrb[0].mxu0
        %v3393 = vadd.f32 %v3240, %v3392
        %v3394 = vpop.f32.mrb[0].mxu0
        %v3395 = vadd.f32 %v3242, %v3394
        %3396 = vdwg.mxu0
        %3397 = vmatprep.subr.mxu0 0.0
        %v3398 = vand.u32 %v374, 4294901760
        %3399 = vmatpush1.msra.mxu0 %v3398
        %3400 = vmatprep.subr.mxu0 0.0
        %v3401 = vand.u32 %v377, 4294901760
        %3402 = vmatpush1.msra.mxu0 %v3401
        %3403 = vmatprep.subr.mxu0 0.0
        %v3404 = vand.u32 %v380, 4294901760
        %3405 = vmatpush1.msra.mxu0 %v3404
        %3406 = vmatprep.subr.mxu0 0.0
        %v3407 = vand.u32 %v383, 4294901760
        %3408 = vmatpush1.msra.mxu0 %v3407
        %3409 = vmatprep.subr.mxu0 0.0
        %v3410 = vand.u32 %v386, 4294901760
        %3411 = vmatpush1.msra.mxu0 %v3410
        %3412 = vmatprep.subr.mxu0 0.0
        %v3413 = vand.u32 %v389, 4294901760
        %3414 = vmatpush1.msra.mxu0 %v3413
        %3415 = vmatprep.subr.mxu0 0.0
        %v3416 = vand.u32 %v392, 4294901760
        %3417 = vmatpush1.msra.mxu0 %v3416
        %3418 = vmatprep.subr.mxu0 0.0
        %v3419 = vand.u32 %v395, 4294901760
        %3420 = vmatpush1.msra.mxu0 %v3419
        %3421 = vmatprep.subr.mxu0 0.0
        %v3422 = vand.u32 %v398, 4294901760
        %3423 = vmatpush1.msra.mxu0 %v3422
        %3424 = vmatprep.subr.mxu0 0.0
        %v3425 = vand.u32 %v401, 4294901760
        %3426 = vmatpush1.msra.mxu0 %v3425
        %3427 = vmatprep.subr.mxu0 0.0
        %v3428 = vand.u32 %v404, 4294901760
        %3429 = vmatpush1.msra.mxu0 %v3428
        %3430 = vmatprep.subr.mxu0 0.0
        %v3431 = vand.u32 %v407, 4294901760
        %3432 = vmatpush1.msra.mxu0 %v3431
        %3433 = vmatprep.subr.mxu0 0.0
        %v3434 = vand.u32 %v410, 4294901760
        %3435 = vmatpush1.msra.mxu0 %v3434
        %3436 = vmatprep.subr.mxu0 0.0
        %v3437 = vand.u32 %v413, 4294901760
        %3438 = vmatpush1.msra.mxu0 %v3437
        %3439 = vmatprep.subr.mxu0 0.0
        %v3440 = vand.u32 %v416, 4294901760
        %3441 = vmatpush1.msra.mxu0 %v3440
        %3442 = vmatprep.subr.mxu0 0.0
        %v3443 = vand.u32 %v419, 4294901760
        %3444 = vmatpush1.msra.mxu0 %v3443
        %3445 = vmatprep.subr.mxu0 0.0
        %v3446 = vand.u32 %v422, 4294901760
        %3447 = vmatpush1.msra.mxu0 %v3446
        %3448 = vmatprep.subr.mxu0 0.0
        %v3449 = vand.u32 %v425, 4294901760
        %3450 = vmatpush1.msra.mxu0 %v3449
        %3451 = vmatprep.subr.mxu0 0.0
        %v3452 = vand.u32 %v428, 4294901760
        %3453 = vmatpush1.msra.mxu0 %v3452
        %3454 = vmatprep.subr.mxu0 0.0
        %v3455 = vand.u32 %v431, 4294901760
        %3456 = vmatpush1.msra.mxu0 %v3455
        %3457 = vmatprep.subr.mxu0 0.0
        %v3458 = vand.u32 %v434, 4294901760
        %3459 = vmatpush1.msra.mxu0 %v3458
        %3460 = vmatprep.subr.mxu0 0.0
        %v3461 = vand.u32 %v437, 4294901760
        %3462 = vmatpush1.msra.mxu0 %v3461
        %3463 = vmatprep.subr.mxu0 0.0
        %v3464 = vand.u32 %v440, 4294901760
        %3465 = vmatpush1.msra.mxu0 %v3464
        %3466 = vmatprep.subr.mxu0 0.0
        %v3467 = vand.u32 %v443, 4294901760
        %3468 = vmatpush1.msra.mxu0 %v3467
        %3469 = vmatprep.subr.mxu0 0.0
        %v3470 = vand.u32 %v446, 4294901760
        %3471 = vmatpush1.msra.mxu0 %v3470
        %3472 = vmatprep.subr.mxu0 0.0
        %v3473 = vand.u32 %v449, 4294901760
        %3474 = vmatpush1.msra.mxu0 %v3473
        %3475 = vmatprep.subr.mxu0 0.0
        %v3476 = vand.u32 %v452, 4294901760
        %3477 = vmatpush1.msra.mxu0 %v3476
        %3478 = vmatprep.subr.mxu0 0.0
        %v3479 = vand.u32 %v455, 4294901760
        %3480 = vmatpush1.msra.mxu0 %v3479
        %3481 = vmatprep.subr.mxu0 0.0
        %v3482 = vand.u32 %v458, 4294901760
        %3483 = vmatpush1.msra.mxu0 %v3482
        %3484 = vmatprep.subr.mxu0 0.0
        %v3485 = vand.u32 %v461, 4294901760
        %3486 = vmatpush1.msra.mxu0 %v3485
        %3487 = vmatprep.subr.mxu0 0.0
        %v3488 = vand.u32 %v464, 4294901760
        %3489 = vmatpush1.msra.mxu0 %v3488
        %3490 = vmatprep.subr.mxu0 0.0
        %v3491 = vand.u32 %v467, 4294901760
        %3492 = vmatpush1.msra.mxu0 %v3491
        %v3493 = vand.u32 %v361, 4294901760
        %v3494 = vsub.f32 %v361, %v3493
        %v3495 = vand.u32 %v3494, 4294901760
        %v3496 = vsub.f32 %v3494, %v3495
        %v3497 = vand.u32 %v3496, 4294901760
        %3498 = vmatprep.mubr.f32.mxu0 %v3497
        %v3499 = vand.u32 %v360, 4294901760
        %v3500 = vsub.f32 %v360, %v3499
        %v3501 = vand.u32 %v3500, 4294901760
        %v3502 = vsub.f32 %v3500, %v3501
        %v3503 = vand.u32 %v3502, 4294901760
        %3504 = vmatmul.mubr.f32.gmra.mrb[0].mxu0 %v3503
        %v3505 = vpop.f32.mrb[0].mxu0
        %v3506 = vadd.f32 %v577, %v3505
        %v3507 = vpop.f32.mrb[0].mxu0
        %v3508 = vand.u32 %v365, 4294901760
        %v3509 = vsub.f32 %v365, %v3508
        %v3510 = vand.u32 %v3509, 4294901760
        %v3511 = vsub.f32 %v3509, %v3510
        %v3512 = vand.u32 %v3511, 4294901760
        %3513 = vmatprep.mubr.f32.mxu0 %v3512
        %v3514 = vand.u32 %v364, 4294901760
        %v3515 = vsub.f32 %v364, %v3514
        %v3516 = vand.u32 %v3515, 4294901760
        %v3517 = vsub.f32 %v3515, %v3516
        %v3518 = vand.u32 %v3517, 4294901760
        %3519 = vmatmul.mubr.f32.gmra.mrb[0].mxu0 %v3518
        %v3520 = vpop.f32.mrb[0].mxu0
        %v3521 = vadd.f32 %v577, %v3520
        %v3522 = vpop.f32.mrb[0].mxu0
        %v3523 = vand.u32 %v369, 4294901760
        %v3524 = vsub.f32 %v369, %v3523
        %v3525 = vand.u32 %v3524, 4294901760
        %v3526 = vsub.f32 %v3524, %v3525
        %v3527 = vand.u32 %v3526, 4294901760
        %3528 = vmatprep.mubr.f32.mxu0 %v3527
        %v3529 = vand.u32 %v368, 4294901760
        %v3530 = vsub.f32 %v368, %v3529
        %v3531 = vand.u32 %v3530, 4294901760
        %v3532 = vsub.f32 %v3530, %v3531
        %v3533 = vand.u32 %v3532, 4294901760
        %3534 = vmatmul.mubr.f32.gmra.mrb[0].mxu0 %v3533
        %v3535 = vpop.f32.mrb[0].mxu0
        %v3536 = vadd.f32 %v577, %v3535
        %v3537 = vpop.f32.mrb[0].mxu0
        %3538 = vdwg.mxu0
        %3539 = vmatprep.subr.mxu0 0.0
        %v3540 = vand.u32 %v374, 4294901760
        %v3541 = vsub.f32 %v374, %v3540
        %v3542 = vand.u32 %v3541, 4294901760
        %v3543 = vsub.f32 %v3541, %v3542
        %v3544 = vand.u32 %v3543, 4294901760
        %3545 = vmatpush1.msra.mxu0 %v3544
        %3546 = vmatprep.subr.mxu0 0.0
        %v3547 = vand.u32 %v377, 4294901760
        %v3548 = vsub.f32 %v377, %v3547
        %v3549 = vand.u32 %v3548, 4294901760
        %v3550 = vsub.f32 %v3548, %v3549
        %v3551 = vand.u32 %v3550, 4294901760
        %3552 = vmatpush1.msra.mxu0 %v3551
        %3553 = vmatprep.subr.mxu0 0.0
        %v3554 = vand.u32 %v380, 4294901760
        %v3555 = vsub.f32 %v380, %v3554
        %v3556 = vand.u32 %v3555, 4294901760
        %v3557 = vsub.f32 %v3555, %v3556
        %v3558 = vand.u32 %v3557, 4294901760
        %3559 = vmatpush1.msra.mxu0 %v3558
        %3560 = vmatprep.subr.mxu0 0.0
        %v3561 = vand.u32 %v383, 4294901760
        %v3562 = vsub.f32 %v383, %v3561
        %v3563 = vand.u32 %v3562, 4294901760
        %v3564 = vsub.f32 %v3562, %v3563
        %v3565 = vand.u32 %v3564, 4294901760
        %3566 = vmatpush1.msra.mxu0 %v3565
        %3567 = vmatprep.subr.mxu0 0.0
        %v3568 = vand.u32 %v386, 4294901760
        %v3569 = vsub.f32 %v386, %v3568
        %v3570 = vand.u32 %v3569, 4294901760
        %v3571 = vsub.f32 %v3569, %v3570
        %v3572 = vand.u32 %v3571, 4294901760
        %3573 = vmatpush1.msra.mxu0 %v3572
        %3574 = vmatprep.subr.mxu0 0.0
        %v3575 = vand.u32 %v389, 4294901760
        %v3576 = vsub.f32 %v389, %v3575
        %v3577 = vand.u32 %v3576, 4294901760
        %v3578 = vsub.f32 %v3576, %v3577
        %v3579 = vand.u32 %v3578, 4294901760
        %3580 = vmatpush1.msra.mxu0 %v3579
        %3581 = vmatprep.subr.mxu0 0.0
        %v3582 = vand.u32 %v392, 4294901760
        %v3583 = vsub.f32 %v392, %v3582
        %v3584 = vand.u32 %v3583, 4294901760
        %v3585 = vsub.f32 %v3583, %v3584
        %v3586 = vand.u32 %v3585, 4294901760
        %3587 = vmatpush1.msra.mxu0 %v3586
        %3588 = vmatprep.subr.mxu0 0.0
        %v3589 = vand.u32 %v395, 4294901760
        %v3590 = vsub.f32 %v395, %v3589
        %v3591 = vand.u32 %v3590, 4294901760
        %v3592 = vsub.f32 %v3590, %v3591
        %v3593 = vand.u32 %v3592, 4294901760
        %3594 = vmatpush1.msra.mxu0 %v3593
        %3595 = vmatprep.subr.mxu0 0.0
        %v3596 = vand.u32 %v398, 4294901760
        %v3597 = vsub.f32 %v398, %v3596
        %v3598 = vand.u32 %v3597, 4294901760
        %v3599 = vsub.f32 %v3597, %v3598
        %v3600 = vand.u32 %v3599, 4294901760
        %3601 = vmatpush1.msra.mxu0 %v3600
        %3602 = vmatprep.subr.mxu0 0.0
        %v3603 = vand.u32 %v401, 4294901760
        %v3604 = vsub.f32 %v401, %v3603
        %v3605 = vand.u32 %v3604, 4294901760
        %v3606 = vsub.f32 %v3604, %v3605
        %v3607 = vand.u32 %v3606, 4294901760
        %3608 = vmatpush1.msra.mxu0 %v3607
        %3609 = vmatprep.subr.mxu0 0.0
        %v3610 = vand.u32 %v404, 4294901760
        %v3611 = vsub.f32 %v404, %v3610
        %v3612 = vand.u32 %v3611, 4294901760
        %v3613 = vsub.f32 %v3611, %v3612
        %v3614 = vand.u32 %v3613, 4294901760
        %3615 = vmatpush1.msra.mxu0 %v3614
        %3616 = vmatprep.subr.mxu0 0.0
        %v3617 = vand.u32 %v407, 4294901760
        %v3618 = vsub.f32 %v407, %v3617
        %v3619 = vand.u32 %v3618, 4294901760
        %v3620 = vsub.f32 %v3618, %v3619
        %v3621 = vand.u32 %v3620, 4294901760
        %3622 = vmatpush1.msra.mxu0 %v3621
        %3623 = vmatprep.subr.mxu0 0.0
        %v3624 = vand.u32 %v410, 4294901760
        %v3625 = vsub.f32 %v410, %v3624
        %v3626 = vand.u32 %v3625, 4294901760
        %v3627 = vsub.f32 %v3625, %v3626
        %v3628 = vand.u32 %v3627, 4294901760
        %3629 = vmatpush1.msra.mxu0 %v3628
        %3630 = vmatprep.subr.mxu0 0.0
        %v3631 = vand.u32 %v413, 4294901760
        %v3632 = vsub.f32 %v413, %v3631
        %v3633 = vand.u32 %v3632, 4294901760
        %v3634 = vsub.f32 %v3632, %v3633
        %v3635 = vand.u32 %v3634, 4294901760
        %3636 = vmatpush1.msra.mxu0 %v3635
        %3637 = vmatprep.subr.mxu0 0.0
        %v3638 = vand.u32 %v416, 4294901760
        %v3639 = vsub.f32 %v416, %v3638
        %v3640 = vand.u32 %v3639, 4294901760
        %v3641 = vsub.f32 %v3639, %v3640
        %v3642 = vand.u32 %v3641, 4294901760
        %3643 = vmatpush1.msra.mxu0 %v3642
        %3644 = vmatprep.subr.mxu0 0.0
        %v3645 = vand.u32 %v419, 4294901760
        %v3646 = vsub.f32 %v419, %v3645
        %v3647 = vand.u32 %v3646, 4294901760
        %v3648 = vsub.f32 %v3646, %v3647
        %v3649 = vand.u32 %v3648, 4294901760
        %3650 = vmatpush1.msra.mxu0 %v3649
        %3651 = vmatprep.subr.mxu0 0.0
        %v3652 = vand.u32 %v422, 4294901760
        %v3653 = vsub.f32 %v422, %v3652
        %v3654 = vand.u32 %v3653, 4294901760
        %v3655 = vsub.f32 %v3653, %v3654
        %v3656 = vand.u32 %v3655, 4294901760
        %3657 = vmatpush1.msra.mxu0 %v3656
        %3658 = vmatprep.subr.mxu0 0.0
        %v3659 = vand.u32 %v425, 4294901760
        %v3660 = vsub.f32 %v425, %v3659
        %v3661 = vand.u32 %v3660, 4294901760
        %v3662 = vsub.f32 %v3660, %v3661
        %v3663 = vand.u32 %v3662, 4294901760
        %3664 = vmatpush1.msra.mxu0 %v3663
        %3665 = vmatprep.subr.mxu0 0.0
        %v3666 = vand.u32 %v428, 4294901760
        %v3667 = vsub.f32 %v428, %v3666
        %v3668 = vand.u32 %v3667, 4294901760
        %v3669 = vsub.f32 %v3667, %v3668
        %v3670 = vand.u32 %v3669, 4294901760
        %3671 = vmatpush1.msra.mxu0 %v3670
        %3672 = vmatprep.subr.mxu0 0.0
        %v3673 = vand.u32 %v431, 4294901760
        %v3674 = vsub.f32 %v431, %v3673
        %v3675 = vand.u32 %v3674, 4294901760
        %v3676 = vsub.f32 %v3674, %v3675
        %v3677 = vand.u32 %v3676, 4294901760
        %3678 = vmatpush1.msra.mxu0 %v3677
        %3679 = vmatprep.subr.mxu0 0.0
        %v3680 = vand.u32 %v434, 4294901760
        %v3681 = vsub.f32 %v434, %v3680
        %v3682 = vand.u32 %v3681, 4294901760
        %v3683 = vsub.f32 %v3681, %v3682
        %v3684 = vand.u32 %v3683, 4294901760
        %3685 = vmatpush1.msra.mxu0 %v3684
        %3686 = vmatprep.subr.mxu0 0.0
        %v3687 = vand.u32 %v437, 4294901760
        %v3688 = vsub.f32 %v437, %v3687
        %v3689 = vand.u32 %v3688, 4294901760
        %v3690 = vsub.f32 %v3688, %v3689
        %v3691 = vand.u32 %v3690, 4294901760
        %3692 = vmatpush1.msra.mxu0 %v3691
        %3693 = vmatprep.subr.mxu0 0.0
        %v3694 = vand.u32 %v440, 4294901760
        %v3695 = vsub.f32 %v440, %v3694
        %v3696 = vand.u32 %v3695, 4294901760
        %v3697 = vsub.f32 %v3695, %v3696
        %v3698 = vand.u32 %v3697, 4294901760
        %3699 = vmatpush1.msra.mxu0 %v3698
        %3700 = vmatprep.subr.mxu0 0.0
        %v3701 = vand.u32 %v443, 4294901760
        %v3702 = vsub.f32 %v443, %v3701
        %v3703 = vand.u32 %v3702, 4294901760
        %v3704 = vsub.f32 %v3702, %v3703
        %v3705 = vand.u32 %v3704, 4294901760
        %3706 = vmatpush1.msra.mxu0 %v3705
        %3707 = vmatprep.subr.mxu0 0.0
        %v3708 = vand.u32 %v446, 4294901760
        %v3709 = vsub.f32 %v446, %v3708
        %v3710 = vand.u32 %v3709, 4294901760
        %v3711 = vsub.f32 %v3709, %v3710
        %v3712 = vand.u32 %v3711, 4294901760
        %3713 = vmatpush1.msra.mxu0 %v3712
        %3714 = vmatprep.subr.mxu0 0.0
        %v3715 = vand.u32 %v449, 4294901760
        %v3716 = vsub.f32 %v449, %v3715
        %v3717 = vand.u32 %v3716, 4294901760
        %v3718 = vsub.f32 %v3716, %v3717
        %v3719 = vand.u32 %v3718, 4294901760
        %3720 = vmatpush1.msra.mxu0 %v3719
        %3721 = vmatprep.subr.mxu0 0.0
        %v3722 = vand.u32 %v452, 4294901760
        %v3723 = vsub.f32 %v452, %v3722
        %v3724 = vand.u32 %v3723, 4294901760
        %v3725 = vsub.f32 %v3723, %v3724
        %v3726 = vand.u32 %v3725, 4294901760
        %3727 = vmatpush1.msra.mxu0 %v3726
        %3728 = vmatprep.subr.mxu0 0.0
        %v3729 = vand.u32 %v455, 4294901760
        %v3730 = vsub.f32 %v455, %v3729
        %v3731 = vand.u32 %v3730, 4294901760
        %v3732 = vsub.f32 %v3730, %v3731
        %v3733 = vand.u32 %v3732, 4294901760
        %3734 = vmatpush1.msra.mxu0 %v3733
        %3735 = vmatprep.subr.mxu0 0.0
        %v3736 = vand.u32 %v458, 4294901760
        %v3737 = vsub.f32 %v458, %v3736
        %v3738 = vand.u32 %v3737, 4294901760
        %v3739 = vsub.f32 %v3737, %v3738
        %v3740 = vand.u32 %v3739, 4294901760
        %3741 = vmatpush1.msra.mxu0 %v3740
        %3742 = vmatprep.subr.mxu0 0.0
        %v3743 = vand.u32 %v461, 4294901760
        %v3744 = vsub.f32 %v461, %v3743
        %v3745 = vand.u32 %v3744, 4294901760
        %v3746 = vsub.f32 %v3744, %v3745
        %v3747 = vand.u32 %v3746, 4294901760
        %3748 = vmatpush1.msra.mxu0 %v3747
        %3749 = vmatprep.subr.mxu0 0.0
        %v3750 = vand.u32 %v464, 4294901760
        %v3751 = vsub.f32 %v464, %v3750
        %v3752 = vand.u32 %v3751, 4294901760
        %v3753 = vsub.f32 %v3751, %v3752
        %v3754 = vand.u32 %v3753, 4294901760
        %3755 = vmatpush1.msra.mxu0 %v3754
        %3756 = vmatprep.subr.mxu0 0.0
        %v3757 = vand.u32 %v467, 4294901760
        %v3758 = vsub.f32 %v467, %v3757
        %v3759 = vand.u32 %v3758, 4294901760
        %v3760 = vsub.f32 %v3758, %v3759
        %v3761 = vand.u32 %v3760, 4294901760
        %3762 = vmatpush1.msra.mxu0 %v3761
        %v3763 = vand.u32 %v361, 4294901760
        %3764 = vmatprep.mubr.f32.mxu0 %v3763
        %v3765 = vand.u32 %v360, 4294901760
        %3766 = vmatmul.mubr.f32.gmra.mrb[0].mxu0 %v3765
        %v3767 = vpop.f32.mrb[0].mxu0
        %v3768 = vadd.f32 %v3506, %v3767
        %v3769 = vpop.f32.mrb[0].mxu0
        %v3770 = vand.u32 %v365, 4294901760
        %3771 = vmatprep.mubr.f32.mxu0 %v3770
        %v3772 = vand.u32 %v364, 4294901760
        %3773 = vmatmul.mubr.f32.gmra.mrb[0].mxu0 %v3772
        %v3774 = vpop.f32.mrb[0].mxu0
        %v3775 = vadd.f32 %v3521, %v3774
        %v3776 = vpop.f32.mrb[0].mxu0
        %v3777 = vand.u32 %v369, 4294901760
        %3778 = vmatprep.mubr.f32.mxu0 %v3777
        %v3779 = vand.u32 %v368, 4294901760
        %3780 = vmatmul.mubr.f32.gmra.mrb[0].mxu0 %v3779
        %v3781 = vpop.f32.mrb[0].mxu0
        %v3782 = vadd.f32 %v3536, %v3781
        %v3783 = vpop.f32.mrb[0].mxu0
        %3784 = vdwg.mxu0
        %3785 = vmatprep.subr.mxu0 0.0
        %v3786 = vand.u32 %v374, 4294901760
        %v3787 = vsub.f32 %v374, %v3786
        %3788 = vmatpush1.msra.mxu0 %v3787
        %3789 = vmatprep.subr.mxu0 0.0
        %v3790 = vand.u32 %v377, 4294901760
        %v3791 = vsub.f32 %v377, %v3790
        %3792 = vmatpush1.msra.mxu0 %v3791
        %3793 = vmatprep.subr.mxu0 0.0
        %v3794 = vand.u32 %v380, 4294901760
        %v3795 = vsub.f32 %v380, %v3794
        %3796 = vmatpush1.msra.mxu0 %v3795
        %3797 = vmatprep.subr.mxu0 0.0
        %v3798 = vand.u32 %v383, 4294901760
        %v3799 = vsub.f32 %v383, %v3798
        %3800 = vmatpush1.msra.mxu0 %v3799
        %3801 = vmatprep.subr.mxu0 0.0
        %v3802 = vand.u32 %v386, 4294901760
        %v3803 = vsub.f32 %v386, %v3802
        %3804 = vmatpush1.msra.mxu0 %v3803
        %3805 = vmatprep.subr.mxu0 0.0
        %v3806 = vand.u32 %v389, 4294901760
        %v3807 = vsub.f32 %v389, %v3806
        %3808 = vmatpush1.msra.mxu0 %v3807
        %3809 = vmatprep.subr.mxu0 0.0
        %v3810 = vand.u32 %v392, 4294901760
        %v3811 = vsub.f32 %v392, %v3810
        %3812 = vmatpush1.msra.mxu0 %v3811
        %3813 = vmatprep.subr.mxu0 0.0
        %v3814 = vand.u32 %v395, 4294901760
        %v3815 = vsub.f32 %v395, %v3814
        %3816 = vmatpush1.msra.mxu0 %v3815
        %3817 = vmatprep.subr.mxu0 0.0
        %v3818 = vand.u32 %v398, 4294901760
        %v3819 = vsub.f32 %v398, %v3818
        %3820 = vmatpush1.msra.mxu0 %v3819
        %3821 = vmatprep.subr.mxu0 0.0
        %v3822 = vand.u32 %v401, 4294901760
        %v3823 = vsub.f32 %v401, %v3822
        %3824 = vmatpush1.msra.mxu0 %v3823
        %3825 = vmatprep.subr.mxu0 0.0
        %v3826 = vand.u32 %v404, 4294901760
        %v3827 = vsub.f32 %v404, %v3826
        %3828 = vmatpush1.msra.mxu0 %v3827
        %3829 = vmatprep.subr.mxu0 0.0
        %v3830 = vand.u32 %v407, 4294901760
        %v3831 = vsub.f32 %v407, %v3830
        %3832 = vmatpush1.msra.mxu0 %v3831
        %3833 = vmatprep.subr.mxu0 0.0
        %v3834 = vand.u32 %v410, 4294901760
        %v3835 = vsub.f32 %v410, %v3834
        %3836 = vmatpush1.msra.mxu0 %v3835
        %3837 = vmatprep.subr.mxu0 0.0
        %v3838 = vand.u32 %v413, 4294901760
        %v3839 = vsub.f32 %v413, %v3838
        %3840 = vmatpush1.msra.mxu0 %v3839
        %3841 = vmatprep.subr.mxu0 0.0
        %v3842 = vand.u32 %v416, 4294901760
        %v3843 = vsub.f32 %v416, %v3842
        %3844 = vmatpush1.msra.mxu0 %v3843
        %3845 = vmatprep.subr.mxu0 0.0
        %v3846 = vand.u32 %v419, 4294901760
        %v3847 = vsub.f32 %v419, %v3846
        %3848 = vmatpush1.msra.mxu0 %v3847
        %3849 = vmatprep.subr.mxu0 0.0
        %v3850 = vand.u32 %v422, 4294901760
        %v3851 = vsub.f32 %v422, %v3850
        %3852 = vmatpush1.msra.mxu0 %v3851
        %3853 = vmatprep.subr.mxu0 0.0
        %v3854 = vand.u32 %v425, 4294901760
        %v3855 = vsub.f32 %v425, %v3854
        %3856 = vmatpush1.msra.mxu0 %v3855
        %3857 = vmatprep.subr.mxu0 0.0
        %v3858 = vand.u32 %v428, 4294901760
        %v3859 = vsub.f32 %v428, %v3858
        %3860 = vmatpush1.msra.mxu0 %v3859
        %3861 = vmatprep.subr.mxu0 0.0
        %v3862 = vand.u32 %v431, 4294901760
        %v3863 = vsub.f32 %v431, %v3862
        %3864 = vmatpush1.msra.mxu0 %v3863
        %3865 = vmatprep.subr.mxu0 0.0
        %v3866 = vand.u32 %v434, 4294901760
        %v3867 = vsub.f32 %v434, %v3866
        %3868 = vmatpush1.msra.mxu0 %v3867
        %3869 = vmatprep.subr.mxu0 0.0
        %v3870 = vand.u32 %v437, 4294901760
        %v3871 = vsub.f32 %v437, %v3870
        %3872 = vmatpush1.msra.mxu0 %v3871
        %3873 = vmatprep.subr.mxu0 0.0
        %v3874 = vand.u32 %v440, 4294901760
        %v3875 = vsub.f32 %v440, %v3874
        %3876 = vmatpush1.msra.mxu0 %v3875
        %3877 = vmatprep.subr.mxu0 0.0
        %v3878 = vand.u32 %v443, 4294901760
        %v3879 = vsub.f32 %v443, %v3878
        %3880 = vmatpush1.msra.mxu0 %v3879
        %3881 = vmatprep.subr.mxu0 0.0
        %v3882 = vand.u32 %v446, 4294901760
        %v3883 = vsub.f32 %v446, %v3882
        %3884 = vmatpush1.msra.mxu0 %v3883
        %3885 = vmatprep.subr.mxu0 0.0
        %v3886 = vand.u32 %v449, 4294901760
        %v3887 = vsub.f32 %v449, %v3886
        %3888 = vmatpush1.msra.mxu0 %v3887
        %3889 = vmatprep.subr.mxu0 0.0
        %v3890 = vand.u32 %v452, 4294901760
        %v3891 = vsub.f32 %v452, %v3890
        %3892 = vmatpush1.msra.mxu0 %v3891
        %3893 = vmatprep.subr.mxu0 0.0
        %v3894 = vand.u32 %v455, 4294901760
        %v3895 = vsub.f32 %v455, %v3894
        %3896 = vmatpush1.msra.mxu0 %v3895
        %3897 = vmatprep.subr.mxu0 0.0
        %v3898 = vand.u32 %v458, 4294901760
        %v3899 = vsub.f32 %v458, %v3898
        %3900 = vmatpush1.msra.mxu0 %v3899
        %3901 = vmatprep.subr.mxu0 0.0
        %v3902 = vand.u32 %v461, 4294901760
        %v3903 = vsub.f32 %v461, %v3902
        %3904 = vmatpush1.msra.mxu0 %v3903
        %3905 = vmatprep.subr.mxu0 0.0
        %v3906 = vand.u32 %v464, 4294901760
        %v3907 = vsub.f32 %v464, %v3906
        %3908 = vmatpush1.msra.mxu0 %v3907
        %3909 = vmatprep.subr.mxu0 0.0
        %v3910 = vand.u32 %v467, 4294901760
        %v3911 = vsub.f32 %v467, %v3910
        %3912 = vmatpush1.msra.mxu0 %v3911
        %v3913 = vand.u32 %v361, 4294901760
        %v3914 = vsub.f32 %v361, %v3913
        %3915 = vmatprep.mubr.f32.mxu0 %v3914
        %v3916 = vand.u32 %v360, 4294901760
        %v3917 = vsub.f32 %v360, %v3916
        %3918 = vmatmul.mubr.f32.gmra.mrb[0].mxu0 %v3917
        %v3919 = vpop.f32.mrb[0].mxu0
        %v3920 = vadd.f32 %v3768, %v3919
        %v3921 = vpop.f32.mrb[0].mxu0
        %v3922 = vand.u32 %v365, 4294901760
        %v3923 = vsub.f32 %v365, %v3922
        %3924 = vmatprep.mubr.f32.mxu0 %v3923
        %v3925 = vand.u32 %v364, 4294901760
        %v3926 = vsub.f32 %v364, %v3925
        %3927 = vmatmul.mubr.f32.gmra.mrb[0].mxu0 %v3926
        %v3928 = vpop.f32.mrb[0].mxu0
        %v3929 = vadd.f32 %v3775, %v3928
        %v3930 = vpop.f32.mrb[0].mxu0
        %v3931 = vand.u32 %v369, 4294901760
        %v3932 = vsub.f32 %v369, %v3931
        %3933 = vmatprep.mubr.f32.mxu0 %v3932
        %v3934 = vand.u32 %v368, 4294901760
        %v3935 = vsub.f32 %v368, %v3934
        %3936 = vmatmul.mubr.f32.gmra.mrb[0].mxu0 %v3935
        %v3937 = vpop.f32.mrb[0].mxu0
        %v3938 = vadd.f32 %v3782, %v3937
        %v3939 = vpop.f32.mrb[0].mxu0
        %3940 = vdwg.mxu0
        %3941 = vmatprep.subr.mxu0 0.0
        %v3942 = vand.u32 %v374, 4294901760
        %3943 = vmatpush1.msra.mxu0 %v3942
        %3944 = vmatprep.subr.mxu0 0.0
        %v3945 = vand.u32 %v377, 4294901760
        %3946 = vmatpush1.msra.mxu0 %v3945
        %3947 = vmatprep.subr.mxu0 0.0
        %v3948 = vand.u32 %v380, 4294901760
        %3949 = vmatpush1.msra.mxu0 %v3948
        %3950 = vmatprep.subr.mxu0 0.0
        %v3951 = vand.u32 %v383, 4294901760
        %3952 = vmatpush1.msra.mxu0 %v3951
        %3953 = vmatprep.subr.mxu0 0.0
        %v3954 = vand.u32 %v386, 4294901760
        %3955 = vmatpush1.msra.mxu0 %v3954
        %3956 = vmatprep.subr.mxu0 0.0
        %v3957 = vand.u32 %v389, 4294901760
        %3958 = vmatpush1.msra.mxu0 %v3957
        %3959 = vmatprep.subr.mxu0 0.0
        %v3960 = vand.u32 %v392, 4294901760
        %3961 = vmatpush1.msra.mxu0 %v3960
        %3962 = vmatprep.subr.mxu0 0.0
        %v3963 = vand.u32 %v395, 4294901760
        %3964 = vmatpush1.msra.mxu0 %v3963
        %3965 = vmatprep.subr.mxu0 0.0
        %v3966 = vand.u32 %v398, 4294901760
        %3967 = vmatpush1.msra.mxu0 %v3966
        %3968 = vmatprep.subr.mxu0 0.0
        %v3969 = vand.u32 %v401, 4294901760
        %3970 = vmatpush1.msra.mxu0 %v3969
        %3971 = vmatprep.subr.mxu0 0.0
        %v3972 = vand.u32 %v404, 4294901760
        %3973 = vmatpush1.msra.mxu0 %v3972
        %3974 = vmatprep.subr.mxu0 0.0
        %v3975 = vand.u32 %v407, 4294901760
        %3976 = vmatpush1.msra.mxu0 %v3975
        %3977 = vmatprep.subr.mxu0 0.0
        %v3978 = vand.u32 %v410, 4294901760
        %3979 = vmatpush1.msra.mxu0 %v3978
        %3980 = vmatprep.subr.mxu0 0.0
        %v3981 = vand.u32 %v413, 4294901760
        %3982 = vmatpush1.msra.mxu0 %v3981
        %3983 = vmatprep.subr.mxu0 0.0
        %v3984 = vand.u32 %v416, 4294901760
        %3985 = vmatpush1.msra.mxu0 %v3984
        %3986 = vmatprep.subr.mxu0 0.0
        %v3987 = vand.u32 %v419, 4294901760
        %3988 = vmatpush1.msra.mxu0 %v3987
        %3989 = vmatprep.subr.mxu0 0.0
        %v3990 = vand.u32 %v422, 4294901760
        %3991 = vmatpush1.msra.mxu0 %v3990
        %3992 = vmatprep.subr.mxu0 0.0
        %v3993 = vand.u32 %v425, 4294901760
        %3994 = vmatpush1.msra.mxu0 %v3993
        %3995 = vmatprep.subr.mxu0 0.0
        %v3996 = vand.u32 %v428, 4294901760
        %3997 = vmatpush1.msra.mxu0 %v3996
        %3998 = vmatprep.subr.mxu0 0.0
        %v3999 = vand.u32 %v431, 4294901760
        %4000 = vmatpush1.msra.mxu0 %v3999
        %4001 = vmatprep.subr.mxu0 0.0
        %v4002 = vand.u32 %v434, 4294901760
        %4003 = vmatpush1.msra.mxu0 %v4002
        %4004 = vmatprep.subr.mxu0 0.0
        %v4005 = vand.u32 %v437, 4294901760
        %4006 = vmatpush1.msra.mxu0 %v4005
        %4007 = vmatprep.subr.mxu0 0.0
        %v4008 = vand.u32 %v440, 4294901760
        %4009 = vmatpush1.msra.mxu0 %v4008
        %4010 = vmatprep.subr.mxu0 0.0
        %v4011 = vand.u32 %v443, 4294901760
        %4012 = vmatpush1.msra.mxu0 %v4011
        %4013 = vmatprep.subr.mxu0 0.0
        %v4014 = vand.u32 %v446, 4294901760
        %4015 = vmatpush1.msra.mxu0 %v4014
        %4016 = vmatprep.subr.mxu0 0.0
        %v4017 = vand.u32 %v449, 4294901760
        %4018 = vmatpush1.msra.mxu0 %v4017
        %4019 = vmatprep.subr.mxu0 0.0
        %v4020 = vand.u32 %v452, 4294901760
        %4021 = vmatpush1.msra.mxu0 %v4020
        %4022 = vmatprep.subr.mxu0 0.0
        %v4023 = vand.u32 %v455, 4294901760
        %4024 = vmatpush1.msra.mxu0 %v4023
        %4025 = vmatprep.subr.mxu0 0.0
        %v4026 = vand.u32 %v458, 4294901760
        %4027 = vmatpush1.msra.mxu0 %v4026
        %4028 = vmatprep.subr.mxu0 0.0
        %v4029 = vand.u32 %v461, 4294901760
        %4030 = vmatpush1.msra.mxu0 %v4029
        %4031 = vmatprep.subr.mxu0 0.0
        %v4032 = vand.u32 %v464, 4294901760
        %4033 = vmatpush1.msra.mxu0 %v4032
        %4034 = vmatprep.subr.mxu0 0.0
        %v4035 = vand.u32 %v467, 4294901760
        %4036 = vmatpush1.msra.mxu0 %v4035
        %v4037 = vand.u32 %v361, 4294901760
        %v4038 = vsub.f32 %v361, %v4037
        %v4039 = vand.u32 %v4038, 4294901760
        %4040 = vmatprep.mubr.f32.mxu0 %v4039
        %v4041 = vand.u32 %v360, 4294901760
        %v4042 = vsub.f32 %v360, %v4041
        %v4043 = vand.u32 %v4042, 4294901760
        %4044 = vmatmul.mubr.f32.gmra.mrb[0].mxu0 %v4043
        %v4045 = vpop.f32.mrb[0].mxu0
        %v4046 = vadd.f32 %v3920, %v4045
        %v4047 = vpop.f32.mrb[0].mxu0
        %v4048 = vand.u32 %v365, 4294901760
        %v4049 = vsub.f32 %v365, %v4048
        %v4050 = vand.u32 %v4049, 4294901760
        %4051 = vmatprep.mubr.f32.mxu0 %v4050
        %v4052 = vand.u32 %v364, 4294901760
        %v4053 = vsub.f32 %v364, %v4052
        %v4054 = vand.u32 %v4053, 4294901760
        %4055 = vmatmul.mubr.f32.gmra.mrb[0].mxu0 %v4054
        %v4056 = vpop.f32.mrb[0].mxu0
        %v4057 = vadd.f32 %v3929, %v4056
        %v4058 = vpop.f32.mrb[0].mxu0
        %v4059 = vand.u32 %v369, 4294901760
        %v4060 = vsub.f32 %v369, %v4059
        %v4061 = vand.u32 %v4060, 4294901760
        %4062 = vmatprep.mubr.f32.mxu0 %v4061
        %v4063 = vand.u32 %v368, 4294901760
        %v4064 = vsub.f32 %v368, %v4063
        %v4065 = vand.u32 %v4064, 4294901760
        %4066 = vmatmul.mubr.f32.gmra.mrb[0].mxu0 %v4065
        %v4067 = vpop.f32.mrb[0].mxu0
        %v4068 = vadd.f32 %v3938, %v4067
        %v4069 = vpop.f32.mrb[0].mxu0
        %4070 = vdwg.mxu0
        %4071 = vmatprep.subr.mxu0 0.0
        %v4072 = vand.u32 %v374, 4294901760
        %v4073 = vsub.f32 %v374, %v4072
        %v4074 = vand.u32 %v4073, 4294901760
        %4075 = vmatpush1.msra.mxu0 %v4074
        %4076 = vmatprep.subr.mxu0 0.0
        %v4077 = vand.u32 %v377, 4294901760
        %v4078 = vsub.f32 %v377, %v4077
        %v4079 = vand.u32 %v4078, 4294901760
        %4080 = vmatpush1.msra.mxu0 %v4079
        %4081 = vmatprep.subr.mxu0 0.0
        %v4082 = vand.u32 %v380, 4294901760
        %v4083 = vsub.f32 %v380, %v4082
        %v4084 = vand.u32 %v4083, 4294901760
        %4085 = vmatpush1.msra.mxu0 %v4084
        %4086 = vmatprep.subr.mxu0 0.0
        %v4087 = vand.u32 %v383, 4294901760
        %v4088 = vsub.f32 %v383, %v4087
        %v4089 = vand.u32 %v4088, 4294901760
        %4090 = vmatpush1.msra.mxu0 %v4089
        %4091 = vmatprep.subr.mxu0 0.0
        %v4092 = vand.u32 %v386, 4294901760
        %v4093 = vsub.f32 %v386, %v4092
        %v4094 = vand.u32 %v4093, 4294901760
        %4095 = vmatpush1.msra.mxu0 %v4094
        %4096 = vmatprep.subr.mxu0 0.0
        %v4097 = vand.u32 %v389, 4294901760
        %v4098 = vsub.f32 %v389, %v4097
        %v4099 = vand.u32 %v4098, 4294901760
        %4100 = vmatpush1.msra.mxu0 %v4099
        %4101 = vmatprep.subr.mxu0 0.0
        %v4102 = vand.u32 %v392, 4294901760
        %v4103 = vsub.f32 %v392, %v4102
        %v4104 = vand.u32 %v4103, 4294901760
        %4105 = vmatpush1.msra.mxu0 %v4104
        %4106 = vmatprep.subr.mxu0 0.0
        %v4107 = vand.u32 %v395, 4294901760
        %v4108 = vsub.f32 %v395, %v4107
        %v4109 = vand.u32 %v4108, 4294901760
        %4110 = vmatpush1.msra.mxu0 %v4109
        %4111 = vmatprep.subr.mxu0 0.0
        %v4112 = vand.u32 %v398, 4294901760
        %v4113 = vsub.f32 %v398, %v4112
        %v4114 = vand.u32 %v4113, 4294901760
        %4115 = vmatpush1.msra.mxu0 %v4114
        %4116 = vmatprep.subr.mxu0 0.0
        %v4117 = vand.u32 %v401, 4294901760
        %v4118 = vsub.f32 %v401, %v4117
        %v4119 = vand.u32 %v4118, 4294901760
        %4120 = vmatpush1.msra.mxu0 %v4119
        %4121 = vmatprep.subr.mxu0 0.0
        %v4122 = vand.u32 %v404, 4294901760
        %v4123 = vsub.f32 %v404, %v4122
        %v4124 = vand.u32 %v4123, 4294901760
        %4125 = vmatpush1.msra.mxu0 %v4124
        %4126 = vmatprep.subr.mxu0 0.0
        %v4127 = vand.u32 %v407, 4294901760
        %v4128 = vsub.f32 %v407, %v4127
        %v4129 = vand.u32 %v4128, 4294901760
        %4130 = vmatpush1.msra.mxu0 %v4129
        %4131 = vmatprep.subr.mxu0 0.0
        %v4132 = vand.u32 %v410, 4294901760
        %v4133 = vsub.f32 %v410, %v4132
        %v4134 = vand.u32 %v4133, 4294901760
        %4135 = vmatpush1.msra.mxu0 %v4134
        %4136 = vmatprep.subr.mxu0 0.0
        %v4137 = vand.u32 %v413, 4294901760
        %v4138 = vsub.f32 %v413, %v4137
        %v4139 = vand.u32 %v4138, 4294901760
        %4140 = vmatpush1.msra.mxu0 %v4139
        %4141 = vmatprep.subr.mxu0 0.0
        %v4142 = vand.u32 %v416, 4294901760
        %v4143 = vsub.f32 %v416, %v4142
        %v4144 = vand.u32 %v4143, 4294901760
        %4145 = vmatpush1.msra.mxu0 %v4144
        %4146 = vmatprep.subr.mxu0 0.0
        %v4147 = vand.u32 %v419, 4294901760
        %v4148 = vsub.f32 %v419, %v4147
        %v4149 = vand.u32 %v4148, 4294901760
        %4150 = vmatpush1.msra.mxu0 %v4149
        %4151 = vmatprep.subr.mxu0 0.0
        %v4152 = vand.u32 %v422, 4294901760
        %v4153 = vsub.f32 %v422, %v4152
        %v4154 = vand.u32 %v4153, 4294901760
        %4155 = vmatpush1.msra.mxu0 %v4154
        %4156 = vmatprep.subr.mxu0 0.0
        %v4157 = vand.u32 %v425, 4294901760
        %v4158 = vsub.f32 %v425, %v4157
        %v4159 = vand.u32 %v4158, 4294901760
        %4160 = vmatpush1.msra.mxu0 %v4159
        %4161 = vmatprep.subr.mxu0 0.0
        %v4162 = vand.u32 %v428, 4294901760
        %v4163 = vsub.f32 %v428, %v4162
        %v4164 = vand.u32 %v4163, 4294901760
        %4165 = vmatpush1.msra.mxu0 %v4164
        %4166 = vmatprep.subr.mxu0 0.0
        %v4167 = vand.u32 %v431, 4294901760
        %v4168 = vsub.f32 %v431, %v4167
        %v4169 = vand.u32 %v4168, 4294901760
        %4170 = vmatpush1.msra.mxu0 %v4169
        %4171 = vmatprep.subr.mxu0 0.0
        %v4172 = vand.u32 %v434, 4294901760
        %v4173 = vsub.f32 %v434, %v4172
        %v4174 = vand.u32 %v4173, 4294901760
        %4175 = vmatpush1.msra.mxu0 %v4174
        %4176 = vmatprep.subr.mxu0 0.0
        %v4177 = vand.u32 %v437, 4294901760
        %v4178 = vsub.f32 %v437, %v4177
        %v4179 = vand.u32 %v4178, 4294901760
        %4180 = vmatpush1.msra.mxu0 %v4179
        %4181 = vmatprep.subr.mxu0 0.0
        %v4182 = vand.u32 %v440, 4294901760
        %v4183 = vsub.f32 %v440, %v4182
        %v4184 = vand.u32 %v4183, 4294901760
        %4185 = vmatpush1.msra.mxu0 %v4184
        %4186 = vmatprep.subr.mxu0 0.0
        %v4187 = vand.u32 %v443, 4294901760
        %v4188 = vsub.f32 %v443, %v4187
        %v4189 = vand.u32 %v4188, 4294901760
        %4190 = vmatpush1.msra.mxu0 %v4189
        %4191 = vmatprep.subr.mxu0 0.0
        %v4192 = vand.u32 %v446, 4294901760
        %v4193 = vsub.f32 %v446, %v4192
        %v4194 = vand.u32 %v4193, 4294901760
        %4195 = vmatpush1.msra.mxu0 %v4194
        %4196 = vmatprep.subr.mxu0 0.0
        %v4197 = vand.u32 %v449, 4294901760
        %v4198 = vsub.f32 %v449, %v4197
        %v4199 = vand.u32 %v4198, 4294901760
        %4200 = vmatpush1.msra.mxu0 %v4199
        %4201 = vmatprep.subr.mxu0 0.0
        %v4202 = vand.u32 %v452, 4294901760
        %v4203 = vsub.f32 %v452, %v4202
        %v4204 = vand.u32 %v4203, 4294901760
        %4205 = vmatpush1.msra.mxu0 %v4204
        %4206 = vmatprep.subr.mxu0 0.0
        %v4207 = vand.u32 %v455, 4294901760
        %v4208 = vsub.f32 %v455, %v4207
        %v4209 = vand.u32 %v4208, 4294901760
        %4210 = vmatpush1.msra.mxu0 %v4209
        %4211 = vmatprep.subr.mxu0 0.0
        %v4212 = vand.u32 %v458, 4294901760
        %v4213 = vsub.f32 %v458, %v4212
        %v4214 = vand.u32 %v4213, 4294901760
        %4215 = vmatpush1.msra.mxu0 %v4214
        %4216 = vmatprep.subr.mxu0 0.0
        %v4217 = vand.u32 %v461, 4294901760
        %v4218 = vsub.f32 %v461, %v4217
        %v4219 = vand.u32 %v4218, 4294901760
        %4220 = vmatpush1.msra.mxu0 %v4219
        %4221 = vmatprep.subr.mxu0 0.0
        %v4222 = vand.u32 %v464, 4294901760
        %v4223 = vsub.f32 %v464, %v4222
        %v4224 = vand.u32 %v4223, 4294901760
        %4225 = vmatpush1.msra.mxu0 %v4224
        %4226 = vmatprep.subr.mxu0 0.0
        %v4227 = vand.u32 %v467, 4294901760
        %v4228 = vsub.f32 %v467, %v4227
        %v4229 = vand.u32 %v4228, 4294901760
        %4230 = vmatpush1.msra.mxu0 %v4229
        %v4231 = vand.u32 %v361, 4294901760
        %4232 = vmatprep.mubr.f32.mxu0 %v4231
        %v4233 = vand.u32 %v360, 4294901760
        %4234 = vmatmul.mubr.f32.gmra.mrb[0].mxu0 %v4233
        %v4235 = vpop.f32.mrb[0].mxu0
        %v4236 = vadd.f32 %v4046, %v4235
        %v4237 = vpop.f32.mrb[0].mxu0
        %v4238 = vand.u32 %v365, 4294901760
        %4239 = vmatprep.mubr.f32.mxu0 %v4238
        %v4240 = vand.u32 %v364, 4294901760
        %4241 = vmatmul.mubr.f32.gmra.mrb[0].mxu0 %v4240
        %v4242 = vpop.f32.mrb[0].mxu0
        %v4243 = vadd.f32 %v4057, %v4242
        %v4244 = vpop.f32.mrb[0].mxu0
        %v4245 = vand.u32 %v369, 4294901760
        %4246 = vmatprep.mubr.f32.mxu0 %v4245
        %v4247 = vand.u32 %v368, 4294901760
        %4248 = vmatmul.mubr.f32.gmra.mrb[0].mxu0 %v4247
        %v4249 = vpop.f32.mrb[0].mxu0
        %v4250 = vadd.f32 %v4068, %v4249
        %v4251 = vpop.f32.mrb[0].mxu0
        %4252 = vdwg.mxu0
        %4253 = vmatprep.subr.mxu0 0.0
        %v4254 = vand.u32 %v374, 4294901760
        %4255 = vmatpush1.msra.mxu0 %v4254
        %4256 = vmatprep.subr.mxu0 0.0
        %v4257 = vand.u32 %v377, 4294901760
        %4258 = vmatpush1.msra.mxu0 %v4257
        %4259 = vmatprep.subr.mxu0 0.0
        %v4260 = vand.u32 %v380, 4294901760
        %4261 = vmatpush1.msra.mxu0 %v4260
        %4262 = vmatprep.subr.mxu0 0.0
        %v4263 = vand.u32 %v383, 4294901760
        %4264 = vmatpush1.msra.mxu0 %v4263
        %4265 = vmatprep.subr.mxu0 0.0
        %v4266 = vand.u32 %v386, 4294901760
        %4267 = vmatpush1.msra.mxu0 %v4266
        %4268 = vmatprep.subr.mxu0 0.0
        %v4269 = vand.u32 %v389, 4294901760
        %4270 = vmatpush1.msra.mxu0 %v4269
        %4271 = vmatprep.subr.mxu0 0.0
        %v4272 = vand.u32 %v392, 4294901760
        %4273 = vmatpush1.msra.mxu0 %v4272
        %4274 = vmatprep.subr.mxu0 0.0
        %v4275 = vand.u32 %v395, 4294901760
        %4276 = vmatpush1.msra.mxu0 %v4275
        %4277 = vmatprep.subr.mxu0 0.0
        %v4278 = vand.u32 %v398, 4294901760
        %4279 = vmatpush1.msra.mxu0 %v4278
        %4280 = vmatprep.subr.mxu0 0.0
        %v4281 = vand.u32 %v401, 4294901760
        %4282 = vmatpush1.msra.mxu0 %v4281
        %4283 = vmatprep.subr.mxu0 0.0
        %v4284 = vand.u32 %v404, 4294901760
        %4285 = vmatpush1.msra.mxu0 %v4284
        %4286 = vmatprep.subr.mxu0 0.0
        %v4287 = vand.u32 %v407, 4294901760
        %4288 = vmatpush1.msra.mxu0 %v4287
        %4289 = vmatprep.subr.mxu0 0.0
        %v4290 = vand.u32 %v410, 4294901760
        %4291 = vmatpush1.msra.mxu0 %v4290
        %4292 = vmatprep.subr.mxu0 0.0
        %v4293 = vand.u32 %v413, 4294901760
        %4294 = vmatpush1.msra.mxu0 %v4293
        %4295 = vmatprep.subr.mxu0 0.0
        %v4296 = vand.u32 %v416, 4294901760
        %4297 = vmatpush1.msra.mxu0 %v4296
        %4298 = vmatprep.subr.mxu0 0.0
        %v4299 = vand.u32 %v419, 4294901760
        %4300 = vmatpush1.msra.mxu0 %v4299
        %4301 = vmatprep.subr.mxu0 0.0
        %v4302 = vand.u32 %v422, 4294901760
        %4303 = vmatpush1.msra.mxu0 %v4302
        %4304 = vmatprep.subr.mxu0 0.0
        %v4305 = vand.u32 %v425, 4294901760
        %4306 = vmatpush1.msra.mxu0 %v4305
        %4307 = vmatprep.subr.mxu0 0.0
        %v4308 = vand.u32 %v428, 4294901760
        %4309 = vmatpush1.msra.mxu0 %v4308
        %4310 = vmatprep.subr.mxu0 0.0
        %v4311 = vand.u32 %v431, 4294901760
        %4312 = vmatpush1.msra.mxu0 %v4311
        %4313 = vmatprep.subr.mxu0 0.0
        %v4314 = vand.u32 %v434, 4294901760
        %4315 = vmatpush1.msra.mxu0 %v4314
        %4316 = vmatprep.subr.mxu0 0.0
        %v4317 = vand.u32 %v437, 4294901760
        %4318 = vmatpush1.msra.mxu0 %v4317
        %4319 = vmatprep.subr.mxu0 0.0
        %v4320 = vand.u32 %v440, 4294901760
        %4321 = vmatpush1.msra.mxu0 %v4320
        %4322 = vmatprep.subr.mxu0 0.0
        %v4323 = vand.u32 %v443, 4294901760
        %4324 = vmatpush1.msra.mxu0 %v4323
        %4325 = vmatprep.subr.mxu0 0.0
        %v4326 = vand.u32 %v446, 4294901760
        %4327 = vmatpush1.msra.mxu0 %v4326
        %4328 = vmatprep.subr.mxu0 0.0
        %v4329 = vand.u32 %v449, 4294901760
        %4330 = vmatpush1.msra.mxu0 %v4329
        %4331 = vmatprep.subr.mxu0 0.0
        %v4332 = vand.u32 %v452, 4294901760
        %4333 = vmatpush1.msra.mxu0 %v4332
        %4334 = vmatprep.subr.mxu0 0.0
        %v4335 = vand.u32 %v455, 4294901760
        %4336 = vmatpush1.msra.mxu0 %v4335
        %4337 = vmatprep.subr.mxu0 0.0
        %v4338 = vand.u32 %v458, 4294901760
        %4339 = vmatpush1.msra.mxu0 %v4338
        %4340 = vmatprep.subr.mxu0 0.0
        %v4341 = vand.u32 %v461, 4294901760
        %4342 = vmatpush1.msra.mxu0 %v4341
        %4343 = vmatprep.subr.mxu0 0.0
        %v4344 = vand.u32 %v464, 4294901760
        %4345 = vmatpush1.msra.mxu0 %v4344
        %4346 = vmatprep.subr.mxu0 0.0
        %v4347 = vand.u32 %v467, 4294901760
        %4348 = vmatpush1.msra.mxu0 %v4347
        %v4349 = vand.u32 %v361, 4294901760
        %4350 = vmatprep.mubr.f32.mxu0 %v4349
        %v4351 = vand.u32 %v360, 4294901760
        %4352 = vmatmul.mubr.f32.gmra.mrb[0].mxu0 %v4351
        %v4353 = vpop.f32.mrb[0].mxu0
        %v4354 = vadd.f32 %v4236, %v4353
        %v4355 = vpop.f32.mrb[0].mxu0
        %v4356 = vand.u32 %v365, 4294901760
        %4357 = vmatprep.mubr.f32.mxu0 %v4356
        %v4358 = vand.u32 %v364, 4294901760
        %4359 = vmatmul.mubr.f32.gmra.mrb[0].mxu0 %v4358
        %v4360 = vpop.f32.mrb[0].mxu0
        %v4361 = vadd.f32 %v4243, %v4360
        %v4362 = vpop.f32.mrb[0].mxu0
        %v4363 = vand.u32 %v369, 4294901760
        %4364 = vmatprep.mubr.f32.mxu0 %v4363
        %v4365 = vand.u32 %v368, 4294901760
        %4366 = vmatmul.mubr.f32.gmra.mrb[0].mxu0 %v4365
        %v4367 = vpop.f32.mrb[0].mxu0
        %v4368 = vadd.f32 %v4250, %v4367
        %v4369 = vpop.f32.mrb[0].mxu0
        %4370 = vdwg.mxu0
        %4371 = vmatprep.subr.mxu0 0.0
        %v4372 = vand.u32 %v470, 4294901760
        %4373 = vmatpush1.msra.mxu0 %v4372
        %4374 = vmatprep.subr.mxu0 0.0
        %v4375 = vand.u32 %v473, 4294901760
        %4376 = vmatpush1.msra.mxu0 %v4375
        %4377 = vmatprep.subr.mxu0 0.0
        %v4378 = vand.u32 %v476, 4294901760
        %4379 = vmatpush1.msra.mxu0 %v4378
        %4380 = vmatprep.subr.mxu0 0.0
        %v4381 = vand.u32 %v479, 4294901760
        %4382 = vmatpush1.msra.mxu0 %v4381
        %4383 = vmatprep.subr.mxu0 0.0
        %v4384 = vand.u32 %v482, 4294901760
        %4385 = vmatpush1.msra.mxu0 %v4384
        %4386 = vmatprep.subr.mxu0 0.0
        %v4387 = vand.u32 %v485, 4294901760
        %4388 = vmatpush1.msra.mxu0 %v4387
        %4389 = vmatprep.subr.mxu0 0.0
        %v4390 = vand.u32 %v488, 4294901760
        %4391 = vmatpush1.msra.mxu0 %v4390
        %4392 = vmatprep.subr.mxu0 0.0
        %v4393 = vand.u32 %v491, 4294901760
        %4394 = vmatpush1.msra.mxu0 %v4393
        %4395 = vmatprep.subr.mxu0 0.0
        %v4396 = vand.u32 %v494, 4294901760
        %4397 = vmatpush1.msra.mxu0 %v4396
        %4398 = vmatprep.subr.mxu0 0.0
        %v4399 = vand.u32 %v497, 4294901760
        %4400 = vmatpush1.msra.mxu0 %v4399
        %4401 = vmatprep.subr.mxu0 0.0
        %v4402 = vand.u32 %v500, 4294901760
        %4403 = vmatpush1.msra.mxu0 %v4402
        %4404 = vmatprep.subr.mxu0 0.0
        %v4405 = vand.u32 %v503, 4294901760
        %4406 = vmatpush1.msra.mxu0 %v4405
        %4407 = vmatprep.subr.mxu0 0.0
        %v4408 = vand.u32 %v506, 4294901760
        %4409 = vmatpush1.msra.mxu0 %v4408
        %4410 = vmatprep.subr.mxu0 0.0
        %v4411 = vand.u32 %v509, 4294901760
        %4412 = vmatpush1.msra.mxu0 %v4411
        %4413 = vmatprep.subr.mxu0 0.0
        %v4414 = vand.u32 %v512, 4294901760
        %4415 = vmatpush1.msra.mxu0 %v4414
        %4416 = vmatprep.subr.mxu0 0.0
        %v4417 = vand.u32 %v515, 4294901760
        %4418 = vmatpush1.msra.mxu0 %v4417
        %4419 = vmatprep.subr.mxu0 0.0
        %v4420 = vand.u32 %v518, 4294901760
        %4421 = vmatpush1.msra.mxu0 %v4420
        %4422 = vmatprep.subr.mxu0 0.0
        %v4423 = vand.u32 %v521, 4294901760
        %4424 = vmatpush1.msra.mxu0 %v4423
        %4425 = vmatprep.subr.mxu0 0.0
        %v4426 = vand.u32 %v524, 4294901760
        %4427 = vmatpush1.msra.mxu0 %v4426
        %4428 = vmatprep.subr.mxu0 0.0
        %v4429 = vand.u32 %v527, 4294901760
        %4430 = vmatpush1.msra.mxu0 %v4429
        %4431 = vmatprep.subr.mxu0 0.0
        %v4432 = vand.u32 %v530, 4294901760
        %4433 = vmatpush1.msra.mxu0 %v4432
        %4434 = vmatprep.subr.mxu0 0.0
        %v4435 = vand.u32 %v533, 4294901760
        %4436 = vmatpush1.msra.mxu0 %v4435
        %4437 = vmatprep.subr.mxu0 0.0
        %v4438 = vand.u32 %v536, 4294901760
        %4439 = vmatpush1.msra.mxu0 %v4438
        %4440 = vmatprep.subr.mxu0 0.0
        %v4441 = vand.u32 %v539, 4294901760
        %4442 = vmatpush1.msra.mxu0 %v4441
        %4443 = vmatprep.subr.mxu0 0.0
        %v4444 = vand.u32 %v542, 4294901760
        %4445 = vmatpush1.msra.mxu0 %v4444
        %4446 = vmatprep.subr.mxu0 0.0
        %v4447 = vand.u32 %v545, 4294901760
        %4448 = vmatpush1.msra.mxu0 %v4447
        %4449 = vmatprep.subr.mxu0 0.0
        %v4450 = vand.u32 %v548, 4294901760
        %4451 = vmatpush1.msra.mxu0 %v4450
        %4452 = vmatprep.subr.mxu0 0.0
        %v4453 = vand.u32 %v551, 4294901760
        %4454 = vmatpush1.msra.mxu0 %v4453
        %4455 = vmatprep.subr.mxu0 0.0
        %v4456 = vand.u32 %v554, 4294901760
        %4457 = vmatpush1.msra.mxu0 %v4456
        %4458 = vmatprep.subr.mxu0 0.0
        %v4459 = vand.u32 %v557, 4294901760
        %4460 = vmatpush1.msra.mxu0 %v4459
        %4461 = vmatprep.subr.mxu0 0.0
        %v4462 = vand.u32 %v560, 4294901760
        %4463 = vmatpush1.msra.mxu0 %v4462
        %4464 = vmatprep.subr.mxu0 0.0
        %v4465 = vand.u32 %v563, 4294901760
        %4466 = vmatpush1.msra.mxu0 %v4465
        %v4467 = vand.u32 %v363, 4294901760
        %v4468 = vsub.f32 %v363, %v4467
        %v4469 = vand.u32 %v4468, 4294901760
        %v4470 = vsub.f32 %v4468, %v4469
        %v4471 = vand.u32 %v4470, 4294901760
        %4472 = vmatprep.mubr.f32.mxu0 %v4471
        %v4473 = vand.u32 %v362, 4294901760
        %v4474 = vsub.f32 %v362, %v4473
        %v4475 = vand.u32 %v4474, 4294901760
        %v4476 = vsub.f32 %v4474, %v4475
        %v4477 = vand.u32 %v4476, 4294901760
        %4478 = vmatmul.mubr.f32.gmra.mrb[0].mxu0 %v4477
        %v4479 = vpop.f32.mrb[0].mxu0
        %v4480 = vadd.f32 %v4354, %v4479
        %v4481 = vpop.f32.mrb[0].mxu0
        %v4482 = vand.u32 %v367, 4294901760
        %v4483 = vsub.f32 %v367, %v4482
        %v4484 = vand.u32 %v4483, 4294901760
        %v4485 = vsub.f32 %v4483, %v4484
        %v4486 = vand.u32 %v4485, 4294901760
        %4487 = vmatprep.mubr.f32.mxu0 %v4486
        %v4488 = vand.u32 %v366, 4294901760
        %v4489 = vsub.f32 %v366, %v4488
        %v4490 = vand.u32 %v4489, 4294901760
        %v4491 = vsub.f32 %v4489, %v4490
        %v4492 = vand.u32 %v4491, 4294901760
        %4493 = vmatmul.mubr.f32.gmra.mrb[0].mxu0 %v4492
        %v4494 = vpop.f32.mrb[0].mxu0
        %v4495 = vadd.f32 %v4361, %v4494
        %v4496 = vpop.f32.mrb[0].mxu0
        %v4497 = vand.u32 %v371, 4294901760
        %v4498 = vsub.f32 %v371, %v4497
        %v4499 = vand.u32 %v4498, 4294901760
        %v4500 = vsub.f32 %v4498, %v4499
        %v4501 = vand.u32 %v4500, 4294901760
        %4502 = vmatprep.mubr.f32.mxu0 %v4501
        %v4503 = vand.u32 %v370, 4294901760
        %v4504 = vsub.f32 %v370, %v4503
        %v4505 = vand.u32 %v4504, 4294901760
        %v4506 = vsub.f32 %v4504, %v4505
        %v4507 = vand.u32 %v4506, 4294901760
        %4508 = vmatmul.mubr.f32.gmra.mrb[0].mxu0 %v4507
        %v4509 = vpop.f32.mrb[0].mxu0
        %v4510 = vadd.f32 %v4368, %v4509
        %v4511 = vpop.f32.mrb[0].mxu0
        %4512 = vdwg.mxu0
        %4513 = vmatprep.subr.mxu0 0.0
        %v4514 = vand.u32 %v470, 4294901760
        %v4515 = vsub.f32 %v470, %v4514
        %v4516 = vand.u32 %v4515, 4294901760
        %v4517 = vsub.f32 %v4515, %v4516
        %v4518 = vand.u32 %v4517, 4294901760
        %4519 = vmatpush1.msra.mxu0 %v4518
        %4520 = vmatprep.subr.mxu0 0.0
        %v4521 = vand.u32 %v473, 4294901760
        %v4522 = vsub.f32 %v473, %v4521
        %v4523 = vand.u32 %v4522, 4294901760
        %v4524 = vsub.f32 %v4522, %v4523
        %v4525 = vand.u32 %v4524, 4294901760
        %4526 = vmatpush1.msra.mxu0 %v4525
        %4527 = vmatprep.subr.mxu0 0.0
        %v4528 = vand.u32 %v476, 4294901760
        %v4529 = vsub.f32 %v476, %v4528
        %v4530 = vand.u32 %v4529, 4294901760
        %v4531 = vsub.f32 %v4529, %v4530
        %v4532 = vand.u32 %v4531, 4294901760
        %4533 = vmatpush1.msra.mxu0 %v4532
        %4534 = vmatprep.subr.mxu0 0.0
        %v4535 = vand.u32 %v479, 4294901760
        %v4536 = vsub.f32 %v479, %v4535
        %v4537 = vand.u32 %v4536, 4294901760
        %v4538 = vsub.f32 %v4536, %v4537
        %v4539 = vand.u32 %v4538, 4294901760
        %4540 = vmatpush1.msra.mxu0 %v4539
        %4541 = vmatprep.subr.mxu0 0.0
        %v4542 = vand.u32 %v482, 4294901760
        %v4543 = vsub.f32 %v482, %v4542
        %v4544 = vand.u32 %v4543, 4294901760
        %v4545 = vsub.f32 %v4543, %v4544
        %v4546 = vand.u32 %v4545, 4294901760
        %4547 = vmatpush1.msra.mxu0 %v4546
        %4548 = vmatprep.subr.mxu0 0.0
        %v4549 = vand.u32 %v485, 4294901760
        %v4550 = vsub.f32 %v485, %v4549
        %v4551 = vand.u32 %v4550, 4294901760
        %v4552 = vsub.f32 %v4550, %v4551
        %v4553 = vand.u32 %v4552, 4294901760
        %4554 = vmatpush1.msra.mxu0 %v4553
        %4555 = vmatprep.subr.mxu0 0.0
        %v4556 = vand.u32 %v488, 4294901760
        %v4557 = vsub.f32 %v488, %v4556
        %v4558 = vand.u32 %v4557, 4294901760
        %v4559 = vsub.f32 %v4557, %v4558
        %v4560 = vand.u32 %v4559, 4294901760
        %4561 = vmatpush1.msra.mxu0 %v4560
        %4562 = vmatprep.subr.mxu0 0.0
        %v4563 = vand.u32 %v491, 4294901760
        %v4564 = vsub.f32 %v491, %v4563
        %v4565 = vand.u32 %v4564, 4294901760
        %v4566 = vsub.f32 %v4564, %v4565
        %v4567 = vand.u32 %v4566, 4294901760
        %4568 = vmatpush1.msra.mxu0 %v4567
        %4569 = vmatprep.subr.mxu0 0.0
        %v4570 = vand.u32 %v494, 4294901760
        %v4571 = vsub.f32 %v494, %v4570
        %v4572 = vand.u32 %v4571, 4294901760
        %v4573 = vsub.f32 %v4571, %v4572
        %v4574 = vand.u32 %v4573, 4294901760
        %4575 = vmatpush1.msra.mxu0 %v4574
        %4576 = vmatprep.subr.mxu0 0.0
        %v4577 = vand.u32 %v497, 4294901760
        %v4578 = vsub.f32 %v497, %v4577
        %v4579 = vand.u32 %v4578, 4294901760
        %v4580 = vsub.f32 %v4578, %v4579
        %v4581 = vand.u32 %v4580, 4294901760
        %4582 = vmatpush1.msra.mxu0 %v4581
        %4583 = vmatprep.subr.mxu0 0.0
        %v4584 = vand.u32 %v500, 4294901760
        %v4585 = vsub.f32 %v500, %v4584
        %v4586 = vand.u32 %v4585, 4294901760
        %v4587 = vsub.f32 %v4585, %v4586
        %v4588 = vand.u32 %v4587, 4294901760
        %4589 = vmatpush1.msra.mxu0 %v4588
        %4590 = vmatprep.subr.mxu0 0.0
        %v4591 = vand.u32 %v503, 4294901760
        %v4592 = vsub.f32 %v503, %v4591
        %v4593 = vand.u32 %v4592, 4294901760
        %v4594 = vsub.f32 %v4592, %v4593
        %v4595 = vand.u32 %v4594, 4294901760
        %4596 = vmatpush1.msra.mxu0 %v4595
        %4597 = vmatprep.subr.mxu0 0.0
        %v4598 = vand.u32 %v506, 4294901760
        %v4599 = vsub.f32 %v506, %v4598
        %v4600 = vand.u32 %v4599, 4294901760
        %v4601 = vsub.f32 %v4599, %v4600
        %v4602 = vand.u32 %v4601, 4294901760
        %4603 = vmatpush1.msra.mxu0 %v4602
        %4604 = vmatprep.subr.mxu0 0.0
        %v4605 = vand.u32 %v509, 4294901760
        %v4606 = vsub.f32 %v509, %v4605
        %v4607 = vand.u32 %v4606, 4294901760
        %v4608 = vsub.f32 %v4606, %v4607
        %v4609 = vand.u32 %v4608, 4294901760
        %4610 = vmatpush1.msra.mxu0 %v4609
        %4611 = vmatprep.subr.mxu0 0.0
        %v4612 = vand.u32 %v512, 4294901760
        %v4613 = vsub.f32 %v512, %v4612
        %v4614 = vand.u32 %v4613, 4294901760
        %v4615 = vsub.f32 %v4613, %v4614
        %v4616 = vand.u32 %v4615, 4294901760
        %4617 = vmatpush1.msra.mxu0 %v4616
        %4618 = vmatprep.subr.mxu0 0.0
        %v4619 = vand.u32 %v515, 4294901760
        %v4620 = vsub.f32 %v515, %v4619
        %v4621 = vand.u32 %v4620, 4294901760
        %v4622 = vsub.f32 %v4620, %v4621
        %v4623 = vand.u32 %v4622, 4294901760
        %4624 = vmatpush1.msra.mxu0 %v4623
        %4625 = vmatprep.subr.mxu0 0.0
        %v4626 = vand.u32 %v518, 4294901760
        %v4627 = vsub.f32 %v518, %v4626
        %v4628 = vand.u32 %v4627, 4294901760
        %v4629 = vsub.f32 %v4627, %v4628
        %v4630 = vand.u32 %v4629, 4294901760
        %4631 = vmatpush1.msra.mxu0 %v4630
        %4632 = vmatprep.subr.mxu0 0.0
        %v4633 = vand.u32 %v521, 4294901760
        %v4634 = vsub.f32 %v521, %v4633
        %v4635 = vand.u32 %v4634, 4294901760
        %v4636 = vsub.f32 %v4634, %v4635
        %v4637 = vand.u32 %v4636, 4294901760
        %4638 = vmatpush1.msra.mxu0 %v4637
        %4639 = vmatprep.subr.mxu0 0.0
        %v4640 = vand.u32 %v524, 4294901760
        %v4641 = vsub.f32 %v524, %v4640
        %v4642 = vand.u32 %v4641, 4294901760
        %v4643 = vsub.f32 %v4641, %v4642
        %v4644 = vand.u32 %v4643, 4294901760
        %4645 = vmatpush1.msra.mxu0 %v4644
        %4646 = vmatprep.subr.mxu0 0.0
        %v4647 = vand.u32 %v527, 4294901760
        %v4648 = vsub.f32 %v527, %v4647
        %v4649 = vand.u32 %v4648, 4294901760
        %v4650 = vsub.f32 %v4648, %v4649
        %v4651 = vand.u32 %v4650, 4294901760
        %4652 = vmatpush1.msra.mxu0 %v4651
        %4653 = vmatprep.subr.mxu0 0.0
        %v4654 = vand.u32 %v530, 4294901760
        %v4655 = vsub.f32 %v530, %v4654
        %v4656 = vand.u32 %v4655, 4294901760
        %v4657 = vsub.f32 %v4655, %v4656
        %v4658 = vand.u32 %v4657, 4294901760
        %4659 = vmatpush1.msra.mxu0 %v4658
        %4660 = vmatprep.subr.mxu0 0.0
        %v4661 = vand.u32 %v533, 4294901760
        %v4662 = vsub.f32 %v533, %v4661
        %v4663 = vand.u32 %v4662, 4294901760
        %v4664 = vsub.f32 %v4662, %v4663
        %v4665 = vand.u32 %v4664, 4294901760
        %4666 = vmatpush1.msra.mxu0 %v4665
        %4667 = vmatprep.subr.mxu0 0.0
        %v4668 = vand.u32 %v536, 4294901760
        %v4669 = vsub.f32 %v536, %v4668
        %v4670 = vand.u32 %v4669, 4294901760
        %v4671 = vsub.f32 %v4669, %v4670
        %v4672 = vand.u32 %v4671, 4294901760
        %4673 = vmatpush1.msra.mxu0 %v4672
        %4674 = vmatprep.subr.mxu0 0.0
        %v4675 = vand.u32 %v539, 4294901760
        %v4676 = vsub.f32 %v539, %v4675
        %v4677 = vand.u32 %v4676, 4294901760
        %v4678 = vsub.f32 %v4676, %v4677
        %v4679 = vand.u32 %v4678, 4294901760
        %4680 = vmatpush1.msra.mxu0 %v4679
        %4681 = vmatprep.subr.mxu0 0.0
        %v4682 = vand.u32 %v542, 4294901760
        %v4683 = vsub.f32 %v542, %v4682
        %v4684 = vand.u32 %v4683, 4294901760
        %v4685 = vsub.f32 %v4683, %v4684
        %v4686 = vand.u32 %v4685, 4294901760
        %4687 = vmatpush1.msra.mxu0 %v4686
        %4688 = vmatprep.subr.mxu0 0.0
        %v4689 = vand.u32 %v545, 4294901760
        %v4690 = vsub.f32 %v545, %v4689
        %v4691 = vand.u32 %v4690, 4294901760
        %v4692 = vsub.f32 %v4690, %v4691
        %v4693 = vand.u32 %v4692, 4294901760
        %4694 = vmatpush1.msra.mxu0 %v4693
        %4695 = vmatprep.subr.mxu0 0.0
        %v4696 = vand.u32 %v548, 4294901760
        %v4697 = vsub.f32 %v548, %v4696
        %v4698 = vand.u32 %v4697, 4294901760
        %v4699 = vsub.f32 %v4697, %v4698
        %v4700 = vand.u32 %v4699, 4294901760
        %4701 = vmatpush1.msra.mxu0 %v4700
        %4702 = vmatprep.subr.mxu0 0.0
        %v4703 = vand.u32 %v551, 4294901760
        %v4704 = vsub.f32 %v551, %v4703
        %v4705 = vand.u32 %v4704, 4294901760
        %v4706 = vsub.f32 %v4704, %v4705
        %v4707 = vand.u32 %v4706, 4294901760
        %4708 = vmatpush1.msra.mxu0 %v4707
        %4709 = vmatprep.subr.mxu0 0.0
        %v4710 = vand.u32 %v554, 4294901760
        %v4711 = vsub.f32 %v554, %v4710
        %v4712 = vand.u32 %v4711, 4294901760
        %v4713 = vsub.f32 %v4711, %v4712
        %v4714 = vand.u32 %v4713, 4294901760
        %4715 = vmatpush1.msra.mxu0 %v4714
        %4716 = vmatprep.subr.mxu0 0.0
        %v4717 = vand.u32 %v557, 4294901760
        %v4718 = vsub.f32 %v557, %v4717
        %v4719 = vand.u32 %v4718, 4294901760
        %v4720 = vsub.f32 %v4718, %v4719
        %v4721 = vand.u32 %v4720, 4294901760
        %4722 = vmatpush1.msra.mxu0 %v4721
        %4723 = vmatprep.subr.mxu0 0.0
        %v4724 = vand.u32 %v560, 4294901760
        %v4725 = vsub.f32 %v560, %v4724
        %v4726 = vand.u32 %v4725, 4294901760
        %v4727 = vsub.f32 %v4725, %v4726
        %v4728 = vand.u32 %v4727, 4294901760
        %4729 = vmatpush1.msra.mxu0 %v4728
        %4730 = vmatprep.subr.mxu0 0.0
        %v4731 = vand.u32 %v563, 4294901760
        %v4732 = vsub.f32 %v563, %v4731
        %v4733 = vand.u32 %v4732, 4294901760
        %v4734 = vsub.f32 %v4732, %v4733
        %v4735 = vand.u32 %v4734, 4294901760
        %4736 = vmatpush1.msra.mxu0 %v4735
        %v4737 = vand.u32 %v363, 4294901760
        %4738 = vmatprep.mubr.f32.mxu0 %v4737
        %v4739 = vand.u32 %v362, 4294901760
        %4740 = vmatmul.mubr.f32.gmra.mrb[0].mxu0 %v4739
        %v4741 = vpop.f32.mrb[0].mxu0
        %v4742 = vadd.f32 %v4480, %v4741
        %v4743 = vpop.f32.mrb[0].mxu0
        %v4744 = vand.u32 %v367, 4294901760
        %4745 = vmatprep.mubr.f32.mxu0 %v4744
        %v4746 = vand.u32 %v366, 4294901760
        %4747 = vmatmul.mubr.f32.gmra.mrb[0].mxu0 %v4746
        %v4748 = vpop.f32.mrb[0].mxu0
        %v4749 = vadd.f32 %v4495, %v4748
        %v4750 = vpop.f32.mrb[0].mxu0
        %v4751 = vand.u32 %v371, 4294901760
        %4752 = vmatprep.mubr.f32.mxu0 %v4751
        %v4753 = vand.u32 %v370, 4294901760
        %4754 = vmatmul.mubr.f32.gmra.mrb[0].mxu0 %v4753
        %v4755 = vpop.f32.mrb[0].mxu0
        %v4756 = vadd.f32 %v4510, %v4755
        %v4757 = vpop.f32.mrb[0].mxu0
        %4758 = vdwg.mxu0
        %4759 = vmatprep.subr.mxu0 0.0
        %v4760 = vand.u32 %v470, 4294901760
        %v4761 = vsub.f32 %v470, %v4760
        %4762 = vmatpush1.msra.mxu0 %v4761
        %4763 = vmatprep.subr.mxu0 0.0
        %v4764 = vand.u32 %v473, 4294901760
        %v4765 = vsub.f32 %v473, %v4764
        %4766 = vmatpush1.msra.mxu0 %v4765
        %4767 = vmatprep.subr.mxu0 0.0
        %v4768 = vand.u32 %v476, 4294901760
        %v4769 = vsub.f32 %v476, %v4768
        %4770 = vmatpush1.msra.mxu0 %v4769
        %4771 = vmatprep.subr.mxu0 0.0
        %v4772 = vand.u32 %v479, 4294901760
        %v4773 = vsub.f32 %v479, %v4772
        %4774 = vmatpush1.msra.mxu0 %v4773
        %4775 = vmatprep.subr.mxu0 0.0
        %v4776 = vand.u32 %v482, 4294901760
        %v4777 = vsub.f32 %v482, %v4776
        %4778 = vmatpush1.msra.mxu0 %v4777
        %4779 = vmatprep.subr.mxu0 0.0
        %v4780 = vand.u32 %v485, 4294901760
        %v4781 = vsub.f32 %v485, %v4780
        %4782 = vmatpush1.msra.mxu0 %v4781
        %4783 = vmatprep.subr.mxu0 0.0
        %v4784 = vand.u32 %v488, 4294901760
        %v4785 = vsub.f32 %v488, %v4784
        %4786 = vmatpush1.msra.mxu0 %v4785
        %4787 = vmatprep.subr.mxu0 0.0
        %v4788 = vand.u32 %v491, 4294901760
        %v4789 = vsub.f32 %v491, %v4788
        %4790 = vmatpush1.msra.mxu0 %v4789
        %4791 = vmatprep.subr.mxu0 0.0
        %v4792 = vand.u32 %v494, 4294901760
        %v4793 = vsub.f32 %v494, %v4792
        %4794 = vmatpush1.msra.mxu0 %v4793
        %4795 = vmatprep.subr.mxu0 0.0
        %v4796 = vand.u32 %v497, 4294901760
        %v4797 = vsub.f32 %v497, %v4796
        %4798 = vmatpush1.msra.mxu0 %v4797
        %4799 = vmatprep.subr.mxu0 0.0
        %v4800 = vand.u32 %v500, 4294901760
        %v4801 = vsub.f32 %v500, %v4800
        %4802 = vmatpush1.msra.mxu0 %v4801
        %4803 = vmatprep.subr.mxu0 0.0
        %v4804 = vand.u32 %v503, 4294901760
        %v4805 = vsub.f32 %v503, %v4804
        %4806 = vmatpush1.msra.mxu0 %v4805
        %4807 = vmatprep.subr.mxu0 0.0
        %v4808 = vand.u32 %v506, 4294901760
        %v4809 = vsub.f32 %v506, %v4808
        %4810 = vmatpush1.msra.mxu0 %v4809
        %4811 = vmatprep.subr.mxu0 0.0
        %v4812 = vand.u32 %v509, 4294901760
        %v4813 = vsub.f32 %v509, %v4812
        %4814 = vmatpush1.msra.mxu0 %v4813
        %4815 = vmatprep.subr.mxu0 0.0
        %v4816 = vand.u32 %v512, 4294901760
        %v4817 = vsub.f32 %v512, %v4816
        %4818 = vmatpush1.msra.mxu0 %v4817
        %4819 = vmatprep.subr.mxu0 0.0
        %v4820 = vand.u32 %v515, 4294901760
        %v4821 = vsub.f32 %v515, %v4820
        %4822 = vmatpush1.msra.mxu0 %v4821
        %4823 = vmatprep.subr.mxu0 0.0
        %v4824 = vand.u32 %v518, 4294901760
        %v4825 = vsub.f32 %v518, %v4824
        %4826 = vmatpush1.msra.mxu0 %v4825
        %4827 = vmatprep.subr.mxu0 0.0
        %v4828 = vand.u32 %v521, 4294901760
        %v4829 = vsub.f32 %v521, %v4828
        %4830 = vmatpush1.msra.mxu0 %v4829
        %4831 = vmatprep.subr.mxu0 0.0
        %v4832 = vand.u32 %v524, 4294901760
        %v4833 = vsub.f32 %v524, %v4832
        %4834 = vmatpush1.msra.mxu0 %v4833
        %4835 = vmatprep.subr.mxu0 0.0
        %v4836 = vand.u32 %v527, 4294901760
        %v4837 = vsub.f32 %v527, %v4836
        %4838 = vmatpush1.msra.mxu0 %v4837
        %4839 = vmatprep.subr.mxu0 0.0
        %v4840 = vand.u32 %v530, 4294901760
        %v4841 = vsub.f32 %v530, %v4840
        %4842 = vmatpush1.msra.mxu0 %v4841
        %4843 = vmatprep.subr.mxu0 0.0
        %v4844 = vand.u32 %v533, 4294901760
        %v4845 = vsub.f32 %v533, %v4844
        %4846 = vmatpush1.msra.mxu0 %v4845
        %4847 = vmatprep.subr.mxu0 0.0
        %v4848 = vand.u32 %v536, 4294901760
        %v4849 = vsub.f32 %v536, %v4848
        %4850 = vmatpush1.msra.mxu0 %v4849
        %4851 = vmatprep.subr.mxu0 0.0
        %v4852 = vand.u32 %v539, 4294901760
        %v4853 = vsub.f32 %v539, %v4852
        %4854 = vmatpush1.msra.mxu0 %v4853
        %4855 = vmatprep.subr.mxu0 0.0
        %v4856 = vand.u32 %v542, 4294901760
        %v4857 = vsub.f32 %v542, %v4856
        %4858 = vmatpush1.msra.mxu0 %v4857
        %4859 = vmatprep.subr.mxu0 0.0
        %v4860 = vand.u32 %v545, 4294901760
        %v4861 = vsub.f32 %v545, %v4860
        %4862 = vmatpush1.msra.mxu0 %v4861
        %4863 = vmatprep.subr.mxu0 0.0
        %v4864 = vand.u32 %v548, 4294901760
        %v4865 = vsub.f32 %v548, %v4864
        %4866 = vmatpush1.msra.mxu0 %v4865
        %4867 = vmatprep.subr.mxu0 0.0
        %v4868 = vand.u32 %v551, 4294901760
        %v4869 = vsub.f32 %v551, %v4868
        %4870 = vmatpush1.msra.mxu0 %v4869
        %4871 = vmatprep.subr.mxu0 0.0
        %v4872 = vand.u32 %v554, 4294901760
        %v4873 = vsub.f32 %v554, %v4872
        %4874 = vmatpush1.msra.mxu0 %v4873
        %4875 = vmatprep.subr.mxu0 0.0
        %v4876 = vand.u32 %v557, 4294901760
        %v4877 = vsub.f32 %v557, %v4876
        %4878 = vmatpush1.msra.mxu0 %v4877
        %4879 = vmatprep.subr.mxu0 0.0
        %v4880 = vand.u32 %v560, 4294901760
        %v4881 = vsub.f32 %v560, %v4880
        %4882 = vmatpush1.msra.mxu0 %v4881
        %4883 = vmatprep.subr.mxu0 0.0
        %v4884 = vand.u32 %v563, 4294901760
        %v4885 = vsub.f32 %v563, %v4884
        %4886 = vmatpush1.msra.mxu0 %v4885
        %v4887 = vand.u32 %v363, 4294901760
        %v4888 = vsub.f32 %v363, %v4887
        %4889 = vmatprep.mubr.f32.mxu0 %v4888
        %v4890 = vand.u32 %v362, 4294901760
        %v4891 = vsub.f32 %v362, %v4890
        %4892 = vmatmul.mubr.f32.gmra.mrb[0].mxu0 %v4891
        %v4893 = vpop.f32.mrb[0].mxu0
        %v4894 = vadd.f32 %v4742, %v4893
        %v4895 = vpop.f32.mrb[0].mxu0
        %v4896 = vand.u32 %v367, 4294901760
        %v4897 = vsub.f32 %v367, %v4896
        %4898 = vmatprep.mubr.f32.mxu0 %v4897
        %v4899 = vand.u32 %v366, 4294901760
        %v4900 = vsub.f32 %v366, %v4899
        %4901 = vmatmul.mubr.f32.gmra.mrb[0].mxu0 %v4900
        %v4902 = vpop.f32.mrb[0].mxu0
        %v4903 = vadd.f32 %v4749, %v4902
        %v4904 = vpop.f32.mrb[0].mxu0
        %v4905 = vand.u32 %v371, 4294901760
        %v4906 = vsub.f32 %v371, %v4905
        %4907 = vmatprep.mubr.f32.mxu0 %v4906
        %v4908 = vand.u32 %v370, 4294901760
        %v4909 = vsub.f32 %v370, %v4908
        %4910 = vmatmul.mubr.f32.gmra.mrb[0].mxu0 %v4909
        %v4911 = vpop.f32.mrb[0].mxu0
        %v4912 = vadd.f32 %v4756, %v4911
        %v4913 = vpop.f32.mrb[0].mxu0
        %4914 = vdwg.mxu0
        %4915 = vmatprep.subr.mxu0 0.0
        %v4916 = vand.u32 %v470, 4294901760
        %4917 = vmatpush1.msra.mxu0 %v4916
        %4918 = vmatprep.subr.mxu0 0.0
        %v4919 = vand.u32 %v473, 4294901760
        %4920 = vmatpush1.msra.mxu0 %v4919
        %4921 = vmatprep.subr.mxu0 0.0
        %v4922 = vand.u32 %v476, 4294901760
        %4923 = vmatpush1.msra.mxu0 %v4922
        %4924 = vmatprep.subr.mxu0 0.0
        %v4925 = vand.u32 %v479, 4294901760
        %4926 = vmatpush1.msra.mxu0 %v4925
        %4927 = vmatprep.subr.mxu0 0.0
        %v4928 = vand.u32 %v482, 4294901760
        %4929 = vmatpush1.msra.mxu0 %v4928
        %4930 = vmatprep.subr.mxu0 0.0
        %v4931 = vand.u32 %v485, 4294901760
        %4932 = vmatpush1.msra.mxu0 %v4931
        %4933 = vmatprep.subr.mxu0 0.0
        %v4934 = vand.u32 %v488, 4294901760
        %4935 = vmatpush1.msra.mxu0 %v4934
        %4936 = vmatprep.subr.mxu0 0.0
        %v4937 = vand.u32 %v491, 4294901760
        %4938 = vmatpush1.msra.mxu0 %v4937
        %4939 = vmatprep.subr.mxu0 0.0
        %v4940 = vand.u32 %v494, 4294901760
        %4941 = vmatpush1.msra.mxu0 %v4940
        %4942 = vmatprep.subr.mxu0 0.0
        %v4943 = vand.u32 %v497, 4294901760
        %4944 = vmatpush1.msra.mxu0 %v4943
        %4945 = vmatprep.subr.mxu0 0.0
        %v4946 = vand.u32 %v500, 4294901760
        %4947 = vmatpush1.msra.mxu0 %v4946
        %4948 = vmatprep.subr.mxu0 0.0
        %v4949 = vand.u32 %v503, 4294901760
        %4950 = vmatpush1.msra.mxu0 %v4949
        %4951 = vmatprep.subr.mxu0 0.0
        %v4952 = vand.u32 %v506, 4294901760
        %4953 = vmatpush1.msra.mxu0 %v4952
        %4954 = vmatprep.subr.mxu0 0.0
        %v4955 = vand.u32 %v509, 4294901760
        %4956 = vmatpush1.msra.mxu0 %v4955
        %4957 = vmatprep.subr.mxu0 0.0
        %v4958 = vand.u32 %v512, 4294901760
        %4959 = vmatpush1.msra.mxu0 %v4958
        %4960 = vmatprep.subr.mxu0 0.0
        %v4961 = vand.u32 %v515, 4294901760
        %4962 = vmatpush1.msra.mxu0 %v4961
        %4963 = vmatprep.subr.mxu0 0.0
        %v4964 = vand.u32 %v518, 4294901760
        %4965 = vmatpush1.msra.mxu0 %v4964
        %4966 = vmatprep.subr.mxu0 0.0
        %v4967 = vand.u32 %v521, 4294901760
        %4968 = vmatpush1.msra.mxu0 %v4967
        %4969 = vmatprep.subr.mxu0 0.0
        %v4970 = vand.u32 %v524, 4294901760
        %4971 = vmatpush1.msra.mxu0 %v4970
        %4972 = vmatprep.subr.mxu0 0.0
        %v4973 = vand.u32 %v527, 4294901760
        %4974 = vmatpush1.msra.mxu0 %v4973
        %4975 = vmatprep.subr.mxu0 0.0
        %v4976 = vand.u32 %v530, 4294901760
        %4977 = vmatpush1.msra.mxu0 %v4976
        %4978 = vmatprep.subr.mxu0 0.0
        %v4979 = vand.u32 %v533, 4294901760
        %4980 = vmatpush1.msra.mxu0 %v4979
        %4981 = vmatprep.subr.mxu0 0.0
        %v4982 = vand.u32 %v536, 4294901760
        %4983 = vmatpush1.msra.mxu0 %v4982
        %4984 = vmatprep.subr.mxu0 0.0
        %v4985 = vand.u32 %v539, 4294901760
        %4986 = vmatpush1.msra.mxu0 %v4985
        %4987 = vmatprep.subr.mxu0 0.0
        %v4988 = vand.u32 %v542, 4294901760
        %4989 = vmatpush1.msra.mxu0 %v4988
        %4990 = vmatprep.subr.mxu0 0.0
        %v4991 = vand.u32 %v545, 4294901760
        %4992 = vmatpush1.msra.mxu0 %v4991
        %4993 = vmatprep.subr.mxu0 0.0
        %v4994 = vand.u32 %v548, 4294901760
        %4995 = vmatpush1.msra.mxu0 %v4994
        %4996 = vmatprep.subr.mxu0 0.0
        %v4997 = vand.u32 %v551, 4294901760
        %4998 = vmatpush1.msra.mxu0 %v4997
        %4999 = vmatprep.subr.mxu0 0.0
        %v5000 = vand.u32 %v554, 4294901760
        %5001 = vmatpush1.msra.mxu0 %v5000
        %5002 = vmatprep.subr.mxu0 0.0
        %v5003 = vand.u32 %v557, 4294901760
        %5004 = vmatpush1.msra.mxu0 %v5003
        %5005 = vmatprep.subr.mxu0 0.0
        %v5006 = vand.u32 %v560, 4294901760
        %5007 = vmatpush1.msra.mxu0 %v5006
        %5008 = vmatprep.subr.mxu0 0.0
        %v5009 = vand.u32 %v563, 4294901760
        %5010 = vmatpush1.msra.mxu0 %v5009
        %v5011 = vand.u32 %v363, 4294901760
        %v5012 = vsub.f32 %v363, %v5011
        %v5013 = vand.u32 %v5012, 4294901760
        %5014 = vmatprep.mubr.f32.mxu0 %v5013
        %v5015 = vand.u32 %v362, 4294901760
        %v5016 = vsub.f32 %v362, %v5015
        %v5017 = vand.u32 %v5016, 4294901760
        %5018 = vmatmul.mubr.f32.gmra.mrb[0].mxu0 %v5017
        %v5019 = vpop.f32.mrb[0].mxu0
        %v5020 = vadd.f32 %v4894, %v5019
        %v5021 = vpop.f32.mrb[0].mxu0
        %v5022 = vand.u32 %v367, 4294901760
        %v5023 = vsub.f32 %v367, %v5022
        %v5024 = vand.u32 %v5023, 4294901760
        %5025 = vmatprep.mubr.f32.mxu0 %v5024
        %v5026 = vand.u32 %v366, 4294901760
        %v5027 = vsub.f32 %v366, %v5026
        %v5028 = vand.u32 %v5027, 4294901760
        %5029 = vmatmul.mubr.f32.gmra.mrb[0].mxu0 %v5028
        %v5030 = vpop.f32.mrb[0].mxu0
        %v5031 = vadd.f32 %v4903, %v5030
        %v5032 = vpop.f32.mrb[0].mxu0
        %v5033 = vand.u32 %v371, 4294901760
        %v5034 = vsub.f32 %v371, %v5033
        %v5035 = vand.u32 %v5034, 4294901760
        %5036 = vmatprep.mubr.f32.mxu0 %v5035
        %v5037 = vand.u32 %v370, 4294901760
        %v5038 = vsub.f32 %v370, %v5037
        %v5039 = vand.u32 %v5038, 4294901760
        %5040 = vmatmul.mubr.f32.gmra.mrb[0].mxu0 %v5039
        %v5041 = vpop.f32.mrb[0].mxu0
        %v5042 = vadd.f32 %v4912, %v5041
        %v5043 = vpop.f32.mrb[0].mxu0
        %5044 = vdwg.mxu0
        %5045 = vmatprep.subr.mxu0 0.0
        %v5046 = vand.u32 %v470, 4294901760
        %v5047 = vsub.f32 %v470, %v5046
        %v5048 = vand.u32 %v5047, 4294901760
        %5049 = vmatpush1.msra.mxu0 %v5048
        %5050 = vmatprep.subr.mxu0 0.0
        %v5051 = vand.u32 %v473, 4294901760
        %v5052 = vsub.f32 %v473, %v5051
        %v5053 = vand.u32 %v5052, 4294901760
        %5054 = vmatpush1.msra.mxu0 %v5053
        %5055 = vmatprep.subr.mxu0 0.0
        %v5056 = vand.u32 %v476, 4294901760
        %v5057 = vsub.f32 %v476, %v5056
        %v5058 = vand.u32 %v5057, 4294901760
        %5059 = vmatpush1.msra.mxu0 %v5058
        %5060 = vmatprep.subr.mxu0 0.0
        %v5061 = vand.u32 %v479, 4294901760
        %v5062 = vsub.f32 %v479, %v5061
        %v5063 = vand.u32 %v5062, 4294901760
        %5064 = vmatpush1.msra.mxu0 %v5063
        %5065 = vmatprep.subr.mxu0 0.0
        %v5066 = vand.u32 %v482, 4294901760
        %v5067 = vsub.f32 %v482, %v5066
        %v5068 = vand.u32 %v5067, 4294901760
        %5069 = vmatpush1.msra.mxu0 %v5068
        %5070 = vmatprep.subr.mxu0 0.0
        %v5071 = vand.u32 %v485, 4294901760
        %v5072 = vsub.f32 %v485, %v5071
        %v5073 = vand.u32 %v5072, 4294901760
        %5074 = vmatpush1.msra.mxu0 %v5073
        %5075 = vmatprep.subr.mxu0 0.0
        %v5076 = vand.u32 %v488, 4294901760
        %v5077 = vsub.f32 %v488, %v5076
        %v5078 = vand.u32 %v5077, 4294901760
        %5079 = vmatpush1.msra.mxu0 %v5078
        %5080 = vmatprep.subr.mxu0 0.0
        %v5081 = vand.u32 %v491, 4294901760
        %v5082 = vsub.f32 %v491, %v5081
        %v5083 = vand.u32 %v5082, 4294901760
        %5084 = vmatpush1.msra.mxu0 %v5083
        %5085 = vmatprep.subr.mxu0 0.0
        %v5086 = vand.u32 %v494, 4294901760
        %v5087 = vsub.f32 %v494, %v5086
        %v5088 = vand.u32 %v5087, 4294901760
        %5089 = vmatpush1.msra.mxu0 %v5088
        %5090 = vmatprep.subr.mxu0 0.0
        %v5091 = vand.u32 %v497, 4294901760
        %v5092 = vsub.f32 %v497, %v5091
        %v5093 = vand.u32 %v5092, 4294901760
        %5094 = vmatpush1.msra.mxu0 %v5093
        %5095 = vmatprep.subr.mxu0 0.0
        %v5096 = vand.u32 %v500, 4294901760
        %v5097 = vsub.f32 %v500, %v5096
        %v5098 = vand.u32 %v5097, 4294901760
        %5099 = vmatpush1.msra.mxu0 %v5098
        %5100 = vmatprep.subr.mxu0 0.0
        %v5101 = vand.u32 %v503, 4294901760
        %v5102 = vsub.f32 %v503, %v5101
        %v5103 = vand.u32 %v5102, 4294901760
        %5104 = vmatpush1.msra.mxu0 %v5103
        %5105 = vmatprep.subr.mxu0 0.0
        %v5106 = vand.u32 %v506, 4294901760
        %v5107 = vsub.f32 %v506, %v5106
        %v5108 = vand.u32 %v5107, 4294901760
        %5109 = vmatpush1.msra.mxu0 %v5108
        %5110 = vmatprep.subr.mxu0 0.0
        %v5111 = vand.u32 %v509, 4294901760
        %v5112 = vsub.f32 %v509, %v5111
        %v5113 = vand.u32 %v5112, 4294901760
        %5114 = vmatpush1.msra.mxu0 %v5113
        %5115 = vmatprep.subr.mxu0 0.0
        %v5116 = vand.u32 %v512, 4294901760
        %v5117 = vsub.f32 %v512, %v5116
        %v5118 = vand.u32 %v5117, 4294901760
        %5119 = vmatpush1.msra.mxu0 %v5118
        %5120 = vmatprep.subr.mxu0 0.0
        %v5121 = vand.u32 %v515, 4294901760
        %v5122 = vsub.f32 %v515, %v5121
        %v5123 = vand.u32 %v5122, 4294901760
        %5124 = vmatpush1.msra.mxu0 %v5123
        %5125 = vmatprep.subr.mxu0 0.0
        %v5126 = vand.u32 %v518, 4294901760
        %v5127 = vsub.f32 %v518, %v5126
        %v5128 = vand.u32 %v5127, 4294901760
        %5129 = vmatpush1.msra.mxu0 %v5128
        %5130 = vmatprep.subr.mxu0 0.0
        %v5131 = vand.u32 %v521, 4294901760
        %v5132 = vsub.f32 %v521, %v5131
        %v5133 = vand.u32 %v5132, 4294901760
        %5134 = vmatpush1.msra.mxu0 %v5133
        %5135 = vmatprep.subr.mxu0 0.0
        %v5136 = vand.u32 %v524, 4294901760
        %v5137 = vsub.f32 %v524, %v5136
        %v5138 = vand.u32 %v5137, 4294901760
        %5139 = vmatpush1.msra.mxu0 %v5138
        %5140 = vmatprep.subr.mxu0 0.0
        %v5141 = vand.u32 %v527, 4294901760
        %v5142 = vsub.f32 %v527, %v5141
        %v5143 = vand.u32 %v5142, 4294901760
        %5144 = vmatpush1.msra.mxu0 %v5143
        %5145 = vmatprep.subr.mxu0 0.0
        %v5146 = vand.u32 %v530, 4294901760
        %v5147 = vsub.f32 %v530, %v5146
        %v5148 = vand.u32 %v5147, 4294901760
        %5149 = vmatpush1.msra.mxu0 %v5148
        %5150 = vmatprep.subr.mxu0 0.0
        %v5151 = vand.u32 %v533, 4294901760
        %v5152 = vsub.f32 %v533, %v5151
        %v5153 = vand.u32 %v5152, 4294901760
        %5154 = vmatpush1.msra.mxu0 %v5153
        %5155 = vmatprep.subr.mxu0 0.0
        %v5156 = vand.u32 %v536, 4294901760
        %v5157 = vsub.f32 %v536, %v5156
        %v5158 = vand.u32 %v5157, 4294901760
        %5159 = vmatpush1.msra.mxu0 %v5158
        %5160 = vmatprep.subr.mxu0 0.0
        %v5161 = vand.u32 %v539, 4294901760
        %v5162 = vsub.f32 %v539, %v5161
        %v5163 = vand.u32 %v5162, 4294901760
        %5164 = vmatpush1.msra.mxu0 %v5163
        %5165 = vmatprep.subr.mxu0 0.0
        %v5166 = vand.u32 %v542, 4294901760
        %v5167 = vsub.f32 %v542, %v5166
        %v5168 = vand.u32 %v5167, 4294901760
        %5169 = vmatpush1.msra.mxu0 %v5168
        %5170 = vmatprep.subr.mxu0 0.0
        %v5171 = vand.u32 %v545, 4294901760
        %v5172 = vsub.f32 %v545, %v5171
        %v5173 = vand.u32 %v5172, 4294901760
        %5174 = vmatpush1.msra.mxu0 %v5173
        %5175 = vmatprep.subr.mxu0 0.0
        %v5176 = vand.u32 %v548, 4294901760
        %v5177 = vsub.f32 %v548, %v5176
        %v5178 = vand.u32 %v5177, 4294901760
        %5179 = vmatpush1.msra.mxu0 %v5178
        %5180 = vmatprep.subr.mxu0 0.0
        %v5181 = vand.u32 %v551, 4294901760
        %v5182 = vsub.f32 %v551, %v5181
        %v5183 = vand.u32 %v5182, 4294901760
        %5184 = vmatpush1.msra.mxu0 %v5183
        %5185 = vmatprep.subr.mxu0 0.0
        %v5186 = vand.u32 %v554, 4294901760
        %v5187 = vsub.f32 %v554, %v5186
        %v5188 = vand.u32 %v5187, 4294901760
        %5189 = vmatpush1.msra.mxu0 %v5188
        %5190 = vmatprep.subr.mxu0 0.0
        %v5191 = vand.u32 %v557, 4294901760
        %v5192 = vsub.f32 %v557, %v5191
        %v5193 = vand.u32 %v5192, 4294901760
        %5194 = vmatpush1.msra.mxu0 %v5193
        %5195 = vmatprep.subr.mxu0 0.0
        %v5196 = vand.u32 %v560, 4294901760
        %v5197 = vsub.f32 %v560, %v5196
        %v5198 = vand.u32 %v5197, 4294901760
        %5199 = vmatpush1.msra.mxu0 %v5198
        %5200 = vmatprep.subr.mxu0 0.0
        %v5201 = vand.u32 %v563, 4294901760
        %v5202 = vsub.f32 %v563, %v5201
        %v5203 = vand.u32 %v5202, 4294901760
        %5204 = vmatpush1.msra.mxu0 %v5203
        %v5205 = vand.u32 %v363, 4294901760
        %5206 = vmatprep.mubr.f32.mxu0 %v5205
        %v5207 = vand.u32 %v362, 4294901760
        %5208 = vmatmul.mubr.f32.gmra.mrb[0].mxu0 %v5207
        %v5209 = vpop.f32.mrb[0].mxu0
        %v5210 = vadd.f32 %v5020, %v5209
        %v5211 = vpop.f32.mrb[0].mxu0
        %v5212 = vand.u32 %v367, 4294901760
        %5213 = vmatprep.mubr.f32.mxu0 %v5212
        %v5214 = vand.u32 %v366, 4294901760
        %5215 = vmatmul.mubr.f32.gmra.mrb[0].mxu0 %v5214
        %v5216 = vpop.f32.mrb[0].mxu0
        %v5217 = vadd.f32 %v5031, %v5216
        %v5218 = vpop.f32.mrb[0].mxu0
        %v5219 = vand.u32 %v371, 4294901760
        %5220 = vmatprep.mubr.f32.mxu0 %v5219
        %v5221 = vand.u32 %v370, 4294901760
        %5222 = vmatmul.mubr.f32.gmra.mrb[0].mxu0 %v5221
        %v5223 = vpop.f32.mrb[0].mxu0
        %v5224 = vadd.f32 %v5042, %v5223
        %v5225 = vpop.f32.mrb[0].mxu0
        %5226 = vdwg.mxu0
        %5227 = vmatprep.subr.mxu0 0.0
        %v5228 = vand.u32 %v470, 4294901760
        %5229 = vmatpush1.msra.mxu0 %v5228
        %5230 = vmatprep.subr.mxu0 0.0
        %v5231 = vand.u32 %v473, 4294901760
        %5232 = vmatpush1.msra.mxu0 %v5231
        %5233 = vmatprep.subr.mxu0 0.0
        %v5234 = vand.u32 %v476, 4294901760
        %5235 = vmatpush1.msra.mxu0 %v5234
        %5236 = vmatprep.subr.mxu0 0.0
        %v5237 = vand.u32 %v479, 4294901760
        %5238 = vmatpush1.msra.mxu0 %v5237
        %5239 = vmatprep.subr.mxu0 0.0
        %v5240 = vand.u32 %v482, 4294901760
        %5241 = vmatpush1.msra.mxu0 %v5240
        %5242 = vmatprep.subr.mxu0 0.0
        %v5243 = vand.u32 %v485, 4294901760
        %5244 = vmatpush1.msra.mxu0 %v5243
        %5245 = vmatprep.subr.mxu0 0.0
        %v5246 = vand.u32 %v488, 4294901760
        %5247 = vmatpush1.msra.mxu0 %v5246
        %5248 = vmatprep.subr.mxu0 0.0
        %v5249 = vand.u32 %v491, 4294901760
        %5250 = vmatpush1.msra.mxu0 %v5249
        %5251 = vmatprep.subr.mxu0 0.0
        %v5252 = vand.u32 %v494, 4294901760
        %5253 = vmatpush1.msra.mxu0 %v5252
        %5254 = vmatprep.subr.mxu0 0.0
        %v5255 = vand.u32 %v497, 4294901760
        %5256 = vmatpush1.msra.mxu0 %v5255
        %5257 = vmatprep.subr.mxu0 0.0
        %v5258 = vand.u32 %v500, 4294901760
        %5259 = vmatpush1.msra.mxu0 %v5258
        %5260 = vmatprep.subr.mxu0 0.0
        %v5261 = vand.u32 %v503, 4294901760
        %5262 = vmatpush1.msra.mxu0 %v5261
        %5263 = vmatprep.subr.mxu0 0.0
        %v5264 = vand.u32 %v506, 4294901760
        %5265 = vmatpush1.msra.mxu0 %v5264
        %5266 = vmatprep.subr.mxu0 0.0
        %v5267 = vand.u32 %v509, 4294901760
        %5268 = vmatpush1.msra.mxu0 %v5267
        %5269 = vmatprep.subr.mxu0 0.0
        %v5270 = vand.u32 %v512, 4294901760
        %5271 = vmatpush1.msra.mxu0 %v5270
        %5272 = vmatprep.subr.mxu0 0.0
        %v5273 = vand.u32 %v515, 4294901760
        %5274 = vmatpush1.msra.mxu0 %v5273
        %5275 = vmatprep.subr.mxu0 0.0
        %v5276 = vand.u32 %v518, 4294901760
        %5277 = vmatpush1.msra.mxu0 %v5276
        %5278 = vmatprep.subr.mxu0 0.0
        %v5279 = vand.u32 %v521, 4294901760
        %5280 = vmatpush1.msra.mxu0 %v5279
        %5281 = vmatprep.subr.mxu0 0.0
        %v5282 = vand.u32 %v524, 4294901760
        %5283 = vmatpush1.msra.mxu0 %v5282
        %5284 = vmatprep.subr.mxu0 0.0
        %v5285 = vand.u32 %v527, 4294901760
        %5286 = vmatpush1.msra.mxu0 %v5285
        %5287 = vmatprep.subr.mxu0 0.0
        %v5288 = vand.u32 %v530, 4294901760
        %5289 = vmatpush1.msra.mxu0 %v5288
        %5290 = vmatprep.subr.mxu0 0.0
        %v5291 = vand.u32 %v533, 4294901760
        %5292 = vmatpush1.msra.mxu0 %v5291
        %5293 = vmatprep.subr.mxu0 0.0
        %v5294 = vand.u32 %v536, 4294901760
        %5295 = vmatpush1.msra.mxu0 %v5294
        %5296 = vmatprep.subr.mxu0 0.0
        %v5297 = vand.u32 %v539, 4294901760
        %5298 = vmatpush1.msra.mxu0 %v5297
        %5299 = vmatprep.subr.mxu0 0.0
        %v5300 = vand.u32 %v542, 4294901760
        %5301 = vmatpush1.msra.mxu0 %v5300
        %5302 = vmatprep.subr.mxu0 0.0
        %v5303 = vand.u32 %v545, 4294901760
        %5304 = vmatpush1.msra.mxu0 %v5303
        %5305 = vmatprep.subr.mxu0 0.0
        %v5306 = vand.u32 %v548, 4294901760
        %5307 = vmatpush1.msra.mxu0 %v5306
        %5308 = vmatprep.subr.mxu0 0.0
        %v5309 = vand.u32 %v551, 4294901760
        %5310 = vmatpush1.msra.mxu0 %v5309
        %5311 = vmatprep.subr.mxu0 0.0
        %v5312 = vand.u32 %v554, 4294901760
        %5313 = vmatpush1.msra.mxu0 %v5312
        %5314 = vmatprep.subr.mxu0 0.0
        %v5315 = vand.u32 %v557, 4294901760
        %5316 = vmatpush1.msra.mxu0 %v5315
        %5317 = vmatprep.subr.mxu0 0.0
        %v5318 = vand.u32 %v560, 4294901760
        %5319 = vmatpush1.msra.mxu0 %v5318
        %5320 = vmatprep.subr.mxu0 0.0
        %v5321 = vand.u32 %v563, 4294901760
        %5322 = vmatpush1.msra.mxu0 %v5321
        %v5323 = vand.u32 %v363, 4294901760
        %5324 = vmatprep.mubr.f32.mxu0 %v5323
        %v5325 = vand.u32 %v362, 4294901760
        %5326 = vmatmul.mubr.f32.gmra.mrb[0].mxu0 %v5325
        %v5327 = vpop.f32.mrb[0].mxu0
        %v5328 = vadd.f32 %v5210, %v5327
        %v5329 = vpop.f32.mrb[0].mxu0
        %v5330 = vand.u32 %v367, 4294901760
        %5331 = vmatprep.mubr.f32.mxu0 %v5330
        %v5332 = vand.u32 %v366, 4294901760
        %5333 = vmatmul.mubr.f32.gmra.mrb[0].mxu0 %v5332
        %v5334 = vpop.f32.mrb[0].mxu0
        %v5335 = vadd.f32 %v5217, %v5334
        %v5336 = vpop.f32.mrb[0].mxu0
        %v5337 = vand.u32 %v371, 4294901760
        %5338 = vmatprep.mubr.f32.mxu0 %v5337
        %v5339 = vand.u32 %v370, 4294901760
        %5340 = vmatmul.mubr.f32.gmra.mrb[0].mxu0 %v5339
        %v5341 = vpop.f32.mrb[0].mxu0
        %v5342 = vadd.f32 %v5224, %v5341
        %v5343 = vpop.f32.mrb[0].mxu0
        %5344 = vdwg.mxu0
        %v5345 = vld [vmem:[%s299] sm:$0xff]
        %v5346 = vld [vmem:[%s299 + $0x8] sm:$0xff]
        %v5347 = vld [vmem:[%s299 + $0x10] sm:$0xff]
        %v5348 = vld [vmem:[%s299 + $0x18] sm:$0xff]
        %v5349 = vld [vmem:[%s299 + $0x20] sm:$0xff]
        %v5350 = vld [vmem:[%s299 + $0x28] sm:$0xff]
        %v5351 = vld [vmem:[%s299 + $0x30] sm:$0xf]
        %v5352 = vld [vmem:[%s299 + $0x38] sm:$0xf]
        %v5353 = vld [vmem:[%s299 + $0x40] sm:$0xf]
        %v5354 = vadd.f32 %v3377, %v5345
        %v5355 = vadd.f32 %v3379, %v5346
        %v5356 = vadd.f32 %v5328, %v5347
        %v5357 = vadd.f32 %v3385, %v5348
        %v5358 = vadd.f32 %v3387, %v5349
        %v5359 = vadd.f32 %v5335, %v5350
        %v5360 = vadd.f32 %v3393, %v5351
        %v5361 = vadd.f32 %v3395, %v5352
        %v5362 = vadd.f32 %v5342, %v5353
        %5363 = vst [vmem:[%s342] sm:$0xff] %v5354
        %5364 = vst [vmem:[%s342 + $0x8] sm:$0xff] %v5355
        %5365 = vst [vmem:[%s342 + $0x10] sm:$0xff] %v5356
        %5366 = vst [vmem:[%s342 + $0x18] sm:$0xff] %v5357
        %5367 = vst [vmem:[%s342 + $0x20] sm:$0xff] %v5358
        %5368 = vst [vmem:[%s342 + $0x28] sm:$0xff] %v5359
        %5369 = vst [vmem:[%s342 + $0x30] sm:$0xf] %v5360
        %5370 = vst [vmem:[%s342 + $0x38] sm:$0xf] %v5361
        %5371 = vst [vmem:[%s342 + $0x40] sm:$0xf] %v5362
        %s5372 = sand.u32 %s160, 1
        %s5373 = sand.u32 %s160, 1
        %s5374 = smul.addr %s5373, 72
        %s5375 = scalar_lea.vmem [#allocation7], %s5374
        // Predicated region
        $region49: #{tpu_custom_call.1} parent=35 // pred_check
          %p5376 = pneg %p170
        $region50: #{tpu_custom_call.1} parent=35 // pred_check_branch
          %5378 = sbr.rel (%p5376) target = $region52
        $region51: #{tpu_custom_call.1} parent=35 // pred_region
          %s5379 = smul.u32 3, %s28
          %s5380 = smul.u32 3, %s26
          %s5381 = smul.addr %s5379, 6
          %s5382 = sadd.s32 %s5380, %s5381
          %s5383 = smul.addr %s27, 18
          %s5384 = sadd.s32 %s5382, %s5383
          %s5385 = smul.addr %s5384, 8
          %s5386 = scalar_lea.vmem %s4, %s5385
          // Predicated region
          $region53: #{tpu_custom_call.1} parent=51 // pred_check
            _
          $region54: #{tpu_custom_call.1} parent=51 // pred_check_branch
            %5388 = sbr.rel (0) target = $region56
          $region55: #{tpu_custom_call.1} parent=51 // pred_region
            // Predicated region
            $region57: #{tpu_custom_call.1} parent=55 // pred_check
              _
            $region58: #{tpu_custom_call.1} parent=55 // pred_check_branch
              %5390 = sbr.rel (0) target = $region60
            $region59: #{tpu_custom_call.1} parent=55 // pred_region
              loop: start=0, step=1, limit=1
              $region61: #{tpu_custom_call.1} parent=59 // loop_pre_header
                _
              $region62: #{tpu_custom_call.1} parent=59 // loop_header
                %s5392 = sphi 0, %s5396
                %p5393 = scmp.ge.s32.totalorder %s5392, 1
                %s5397 = sphi %s5375, %s5375
                %s5398 = sphi %s5386, %s5386
              $region63: #{tpu_custom_call.1} parent=59 // loop_header_branch
                %5395 = sbr.rel (%p5393) target = $region67
              $region64: #{tpu_custom_call.1} parent=59 // loop_body
                %v5399 = vld [vmem:[%s5397] sm:$0xff]
                %5400 = vst [vmem:[%s5398] sm:$0xff] %v5399
                %v5401 = vld [vmem:[%s5397 + $0x8] sm:$0xff]
                %5402 = vst [vmem:[%s5398 + $0x8] sm:$0xff] %v5401
                %v5403 = vld [vmem:[%s5397 + $0x10] sm:$0xff]
                %5404 = vst [vmem:[%s5398 + $0x10] sm:$0xff] %v5403
                %v5405 = vld [vmem:[%s5397 + $0x18] sm:$0xff]
                %5406 = vst [vmem:[%s5398 + $0x30] sm:$0xff] %v5405
                %v5407 = vld [vmem:[%s5397 + $0x20] sm:$0xff]
                %5408 = vst [vmem:[%s5398 + $0x38] sm:$0xff] %v5407
                %v5409 = vld [vmem:[%s5397 + $0x28] sm:$0xff]
                %5410 = vst [vmem:[%s5398 + $0x40] sm:$0xff] %v5409
                %v5411 = vld [vmem:[%s5397 + $0x30] sm:$0xff]
                %5412 = vst [vmem:[%s5398 + $0x60] sm:$0xff] %v5411
                %v5413 = vld [vmem:[%s5397 + $0x38] sm:$0xff]
                %5414 = vst [vmem:[%s5398 + $0x68] sm:$0xff] %v5413
                %v5415 = vld [vmem:[%s5397 + $0x40] sm:$0xff]
                %5416 = vst [vmem:[%s5398 + $0x70] sm:$0xff] %v5415
              $region65: #{tpu_custom_call.1} parent=59 // loop_footer
                %s5396 = sadd.s32 1, %s5392
              $region66: #{tpu_custom_call.1} parent=59 // loop_footer_branch
                %5391 = sbr.rel target = $region62
              $region67: #{tpu_custom_call.1} parent=59 // loop_exit
                _
            $region60: #{tpu_custom_call.1} parent=55 // pred_fallthru
              _
            // Predicated region
            $region68: #{tpu_custom_call.1} parent=55 // pred_check
              _
            $region69: #{tpu_custom_call.1} parent=55 // pred_check_branch
              %5418 = sbr.rel target = $region71
            $region70: #{tpu_custom_call.1} parent=55 // pred_region
              _
            $region71: #{tpu_custom_call.1} parent=55 // pred_fallthru
              _
          $region56: #{tpu_custom_call.1} parent=51 // pred_fallthru
            _
          %5419 = vnop
        $region52: #{tpu_custom_call.1} parent=35 // pred_fallthru
          _
      $region36: #{tpu_custom_call.1} parent=5 // pred_fallthru
        _
      %p5420 = scmp.le.s32.totalorder 2, %s16
      // Predicated region
      $region72: #{tpu_custom_call.1} parent=5 // pred_check
        %p5421 = pneg %p5420
      $region73: #{tpu_custom_call.1} parent=5 // pred_check_branch
        %5423 = sbr.rel (%p5421) target = $region75
      $region74: #{tpu_custom_call.1} parent=5 // pred_region
        %s5424 = ssub.s32 %s16, 2
        // Predicated region
        $region76: #{tpu_custom_call.1} parent=74 // pred_check
          %p5425 = pneg %p176
        $region77: #{tpu_custom_call.1} parent=74 // pred_check_branch
          %5427 = sbr.rel (%p5425) target = $region79
        $region78: #{tpu_custom_call.1} parent=74 // pred_region
          %s5428 = sand.u32 %s161, 1
          %s5429 = sand.u32 %s161, 1
          %s5430 = smul.addr %s5429, 72
          %s5431 = scalar_lea.vmem [#allocation7], %s5430
        $region79: #{tpu_custom_call.1} parent=74 // pred_fallthru
          _
      $region75: #{tpu_custom_call.1} parent=5 // pred_fallthru
        _
    $region6: #{tpu_custom_call.1} parent=1 // loop_footer
      %s20 = sadd.s32 1, %s16
    $region7: #{tpu_custom_call.1} parent=1 // loop_footer_branch
      %15 = sbr.rel target = $region3
    $region8: #{tpu_custom_call.1} parent=1 // loop_exit
      _
    %5432 = vsyncpa [#allocation3], 1
    %s5433 = scalar_lea.sflag [#allocation3], 1
    %5434 = vsyncpa %s5433, 1
    %5435 = vsyncpa [#allocation5], 1
    %s5436 = scalar_lea.sflag [#allocation5], 1
    %5437 = vsyncpa %s5436, 1

</llo_original>
